<compile_context>
chip_gen: v7x
topology: tpu7x:2x2x1
jax: 0.10.0
libtpu: 0.0.40
codegen_flags: <defaults>
</compile_context>

<pallas_src>
import jax
import jax.numpy as jnp
from jax.experimental import pallas as pl
from jax.experimental.pallas import tpu as pltpu

_HIDDEN = 16            # hidden width of both Linear(…,16) layers
_SUB = 8                # sublane strip: batch rows per tile
_BIG = _HIDDEN * _SUB   # 128 = channel-expanded sublane count


def autoencoder_kernel(x_ref, w1_ref, b1_ref, w23_ref, b23_ref, w4_ref, b4_ref,
                       o_ref):
    """One (8, W) lane-dense batch tile; all three Linear layers on the MXU.

    x_ref  : (8, W)    f32  — 8*W batch elements (batch on sublanes AND lanes).
    w1_ref : (128, 8)  f32  — kron(w1_col, eye(8)): row c*8+r holds w1[c] at col r.
    b1_ref : (128, 1)  f32  — b1 repeated 8x along sublanes.
    w23_ref: (128,128) f32  — kron((w2@w3).T, eye(8)): fused Linear(16,8)@Linear(8,16).
    b23_ref: (128, 1)  f32  — (b2@w3 + b3) repeated 8x.
    w4_ref : (8, 128)  f32  — kron(w4_row, eye(8)).
    b4_ref : (1,)      f32  — final scalar bias (SMEM).
    o_ref  : (8, W)    f32.
    """
    x = x_ref[...]                                           # (8, W)
    hi = jax.lax.Precision.HIGHEST

    # Encoder Linear(1,16) + ReLU: lift batch rows onto channel sublanes (MXU).
    pre1 = jnp.dot(w1_ref[...], x,
                   preferred_element_type=jnp.float32, precision=hi)   # (128, W)
    h1 = jnp.maximum(pre1 + b1_ref[...], 0.0)

    # Fused Linear(16,8) @ Linear(8,16) (no activation between) + decoder ReLU.
    pre2 = jnp.dot(w23_ref[...], h1,
                   preferred_element_type=jnp.float32, precision=hi)   # (128, W)
    h2 = jnp.maximum(pre2 + b23_ref[...], 0.0)

    # Decoder Linear(16,1): collapse the 16 channel groups back to one row each.
    out = jnp.dot(w4_ref[...], h2,
                  preferred_element_type=jnp.float32, precision=hi)    # (8, W)
    o_ref[...] = (out + b4_ref[0]).astype(o_ref.dtype)


def _round_up(v, m):
    return (v + m - 1) // m * m


def _choose_lane_width(n, max_lanes=2048, target_tiles=4):
    """Pick W (lanes per tile row) so each grid step covers 8*W elements.

    Aims for >= `target_tiles` grid steps (keeps both v7x TensorCores busy and
    the DMA pipeline flowing) while keeping per-step work large enough to
    amortize the ~0.35 us grid-step overhead.
    """
    per_tile = max(1, -(-n // target_tiles))            # ceil(n / target_tiles)
    lanes = _round_up(max(1, -(-per_tile // _SUB)), 128)
    return max(128, min(int(max_lanes), lanes))


def autoencoder_forward(x, params, *, max_lanes=2048, target_tiles=4):
    """x: (N, 1) float32; params: (in,out)-layout weights / (1,out) biases."""
    n = x.shape[0]
    f32 = jnp.float32

    # ---- Fold / expand weights (tiny, done once per call in plain XLA) ----
    w1 = params["w1"].reshape(_HIDDEN).astype(f32)
    b1 = params["b1"].reshape(_HIDDEN).astype(f32)
    w23 = params["w2"].astype(f32) @ params["w3"].astype(f32)               # (16,16)
    b23 = (params["b2"].astype(f32) @ params["w3"].astype(f32)).reshape(_HIDDEN) \
        + params["b3"].reshape(_HIDDEN).astype(f32)
    w4 = params["w4"].reshape(_HIDDEN).astype(f32)
    b4 = params["b4"].reshape(1).astype(f32)

    eye8 = jnp.eye(_SUB, dtype=f32)
    w1_big = jnp.kron(w1[:, None], eye8)           # (128, 8)
    b1_big = jnp.repeat(b1, _SUB)[:, None]         # (128, 1)
    w23_big = jnp.kron(w23.T, eye8)                # (128, 128)
    b23_big = jnp.repeat(b23, _SUB)[:, None]       # (128, 1)
    w4_big = jnp.kron(w4[None, :], eye8)           # (8, 128)

    # ---- Lane-dense batch layout: (N, 1) -> (num_tiles*8, W) ----
    lanes = _choose_lane_width(n, max_lanes=max_lanes, target_tiles=target_tiles)
    tile_elems = _SUB * lanes
    num_tiles = pl.cdiv(n, tile_elems)
    n_pad = num_tiles * tile_elems
    x_flat = jnp.pad(x.reshape(-1).astype(f32), (0, n_pad - n))
    x2d = x_flat.reshape(num_tiles * _SUB, lanes)

    tile_spec = pl.BlockSpec((_SUB, lanes), lambda i: (i, 0))
    vmem_spec = pl.BlockSpec(memory_space=pltpu.MemorySpace.VMEM)  # whole array, resident
    smem_spec = pl.BlockSpec(memory_space=pltpu.MemorySpace.SMEM)

    out2d = pl.pallas_call(
        autoencoder_kernel,
        grid=(num_tiles,),
        in_specs=[tile_spec,
                  vmem_spec, vmem_spec, vmem_spec, vmem_spec, vmem_spec,
                  smem_spec],
        out_specs=tile_spec,
        out_shape=jax.ShapeDtypeStruct((num_tiles * _SUB, lanes), f32),
        compiler_params=pltpu.CompilerParams(
            dimension_semantics=("parallel",),   # batch tiles: megacore/2-TC shardable
        ),
    )(x2d, w1_big, b1_big, w23_big, b23_big, w4_big, b4)

    return out2d.reshape(-1)[:n].reshape(n, 1)


def init_params(key):
    """PyTorch-shaped init; weights stored transposed to (in, out)."""
    def linear(key, fan_in, fan_out):
        kw, kb = jax.random.split(key)
        bound = 1.0 / jnp.sqrt(jnp.float32(fan_in))
        w = jax.random.uniform(kw, (fan_in, fan_out), jnp.float32, -bound, bound)
        b = jax.random.uniform(kb, (1, fan_out), jnp.float32, -bound, bound)
        return w, b

    k1, k2, k3, k4 = jax.random.split(key, 4)
    w1, b1 = linear(k1, 1, 16)
    w2, b2 = linear(k2, 16, 8)
    w3, b3 = linear(k3, 8, 16)
    w4, b4 = linear(k4, 16, 1)
    return {"w1": w1, "b1": b1, "w2": w2, "b2": b2,
            "w3": w3, "b3": b3, "w4": w4, "b4": b4}


def reference_forward(x, params):
    """Pure-JAX reference of the original (unfused) forward pass."""
    h1 = jnp.maximum(x @ params["w1"] + params["b1"], 0.0)
    z = h1 @ params["w2"] + params["b2"]
    h2 = jnp.maximum(z @ params["w3"] + params["b3"], 0.0)
    return h2 @ params["w4"] + params["b4"]


if __name__ == "__main__":
    key = jax.random.PRNGKey(0)
    kx, kp = jax.random.split(key)
    params = init_params(kp)

    # Small, grid-exercising batch: 4096 scalar samples -> 4 tiles of (8, 128).
    batch = 4096
    x = jax.random.normal(kx, (batch, 1), dtype=jnp.float32)
    out = jax.block_until_ready(autoencoder_forward(x, params))
    ref = reference_forward(x, params)
    assert out.shape == (batch, 1)
    assert jnp.allclose(out, ref, atol=2e-5, rtol=2e-4), \
        float(jnp.max(jnp.abs(out - ref)))

    # Non-aligned batch exercises the zero-padding tail path.
    x_small = jax.random.normal(jax.random.PRNGKey(1), (1000, 1), dtype=jnp.float32)
    out_small = jax.block_until_ready(autoencoder_forward(x_small, params))
    assert out_small.shape == (1000, 1)
    assert jnp.allclose(out_small, reference_forward(x_small, params),
                        atol=2e-5, rtol=2e-4)

    print("KERNEL_OK")
</pallas_src>

<mosaic_0001>
module attributes {stable_mosaic.version = 11 : i64} {
  func.func @autoencoder_kernel(%arg0: i32, %arg1: memref<8x128xf32, #tpu.memory_space<vmem>>, %arg2: memref<128x8xf32, #tpu.memory_space<vmem>>, %arg3: memref<128x1xf32, #tpu.memory_space<vmem>>, %arg4: memref<128x128xf32, #tpu.memory_space<vmem>>, %arg5: memref<128x1xf32, #tpu.memory_space<vmem>>, %arg6: memref<8x128xf32, #tpu.memory_space<vmem>>, %arg7: memref<1xf32, #tpu.memory_space<smem>>, %arg8: memref<8x128xf32, #tpu.memory_space<vmem>>) attributes {dimension_semantics = [#tpu.dimension_semantics<parallel>], iteration_bounds = array<i64: 4>, scalar_prefetch = 0 : i64, scratch_operands = 0 : i64, tpu.core_type = #tpu.core_type<tc>, window_params = [{transform_indices = @transform_0, window_bounds = array<i64: 8, 128>}, {pipeline_mode = #tpu.pipeline_mode<synchronous>, transform_indices = @transform_1, window_bounds = array<i64: 128, 8>}, {pipeline_mode = #tpu.pipeline_mode<synchronous>, transform_indices = @transform_2, window_bounds = array<i64: 128, 1>}, {pipeline_mode = #tpu.pipeline_mode<synchronous>, transform_indices = @transform_3, window_bounds = array<i64: 128, 128>}, {pipeline_mode = #tpu.pipeline_mode<synchronous>, transform_indices = @transform_4, window_bounds = array<i64: 128, 1>}, {pipeline_mode = #tpu.pipeline_mode<synchronous>, transform_indices = @transform_5, window_bounds = array<i64: 8, 128>}, {transform_indices = @transform_6, window_bounds = array<i64: 1>}, {transform_indices = @transform_7, window_bounds = array<i64: 8, 128>}]} {
    %c0 = arith.constant 0 : index
    %c0_0 = arith.constant 0 : index
    %0 = vector.load %arg1[%c0, %c0_0] : memref<8x128xf32, #tpu.memory_space<vmem>>, vector<8x128xf32>
    %c0_1 = arith.constant 0 : index
    %c0_2 = arith.constant 0 : index
    %1 = vector.load %arg2[%c0_1, %c0_2] : memref<128x8xf32, #tpu.memory_space<vmem>>, vector<128x8xf32>
    %cst = arith.constant dense<0.000000e+00> : vector<128x128xf32>
    %2 = tpu.matmul %1, %0, %cst {dimension_numbers = #tpu.dot_dimension_numbers<[1], [0], [0], [1], [0, 0, 1, 1], [], []>, precision = #tpu.contract_precision<fp32>} : vector<128x8xf32>, vector<8x128xf32>, vector<128x128xf32> -> vector<128x128xf32>
    %c0_3 = arith.constant 0 : index
    %c0_4 = arith.constant 0 : index
    %3 = vector.load %arg3[%c0_3, %c0_4] : memref<128x1xf32, #tpu.memory_space<vmem>>, vector<128x1xf32>
    %4 = vector.broadcast %3 : vector<128x1xf32> to vector<128x128xf32>
    %5 = arith.addf %2, %4 : vector<128x128xf32>
    %cst_5 = arith.constant 0.000000e+00 : f32
    %6 = vector.broadcast %cst_5 : f32 to vector<128x128xf32>
    %7 = arith.maximumf %5, %6 : vector<128x128xf32>
    %c0_6 = arith.constant 0 : index
    %c0_7 = arith.constant 0 : index
    %8 = vector.load %arg4[%c0_6, %c0_7] : memref<128x128xf32, #tpu.memory_space<vmem>>, vector<128x128xf32>
    %cst_8 = arith.constant dense<0.000000e+00> : vector<128x128xf32>
    %9 = tpu.matmul %8, %7, %cst_8 {dimension_numbers = #tpu.dot_dimension_numbers<[1], [0], [0], [1], [0, 0, 1, 1], [], []>, precision = #tpu.contract_precision<fp32>} : vector<128x128xf32>, vector<128x128xf32>, vector<128x128xf32> -> vector<128x128xf32>
    %c0_9 = arith.constant 0 : index
    %c0_10 = arith.constant 0 : index
    %10 = vector.load %arg5[%c0_9, %c0_10] : memref<128x1xf32, #tpu.memory_space<vmem>>, vector<128x1xf32>
    %11 = vector.broadcast %10 : vector<128x1xf32> to vector<128x128xf32>
    %12 = arith.addf %9, %11 : vector<128x128xf32>
    %cst_11 = arith.constant 0.000000e+00 : f32
    %13 = vector.broadcast %cst_11 : f32 to vector<128x128xf32>
    %14 = arith.maximumf %12, %13 : vector<128x128xf32>
    %c0_12 = arith.constant 0 : index
    %c0_13 = arith.constant 0 : index
    %15 = vector.load %arg6[%c0_12, %c0_13] : memref<8x128xf32, #tpu.memory_space<vmem>>, vector<8x128xf32>
    %cst_14 = arith.constant dense<0.000000e+00> : vector<8x128xf32>
    %16 = tpu.matmul %15, %14, %cst_14 {dimension_numbers = #tpu.dot_dimension_numbers<[1], [0], [0], [1], [0, 0, 1, 1], [], []>, precision = #tpu.contract_precision<fp32>} : vector<8x128xf32>, vector<128x128xf32>, vector<8x128xf32> -> vector<8x128xf32>
    %c0_15 = arith.constant 0 : index
    %17 = memref.load %arg7[%c0_15] : memref<1xf32, #tpu.memory_space<smem>>
    %18 = vector.broadcast %17 : f32 to vector<8x128xf32>
    %19 = arith.addf %16, %18 : vector<8x128xf32>
    %c0_16 = arith.constant 0 : index
    %c0_17 = arith.constant 0 : index
    %20 = vector.load %arg8[%c0_16, %c0_17] : memref<8x128xf32, #tpu.memory_space<vmem>>, vector<8x128xf32>
    tpu.vector_store %arg8[%c0_16, %c0_17], %19 {strides = array<i32>} : memref<8x128xf32, #tpu.memory_space<vmem>>, vector<8x128xf32>,
    return
  }
  func.func @transform_0(%arg0: i32) -> (i32, i32) {
    %c0_i32 = arith.constant 0 : i32
    %c0_i32_0 = arith.constant 0 : i32
    return %arg0, %c0_i32 : i32, i32
  }
  func.func @transform_1(%arg0: i32) -> (i32, i32) {
    %c0_i32 = arith.constant 0 : i32
    %c0_i32_0 = arith.constant 0 : i32
    %c0_i32_1 = arith.constant 0 : i32
    return %c0_i32, %c0_i32_0 : i32, i32
  }
  func.func @transform_2(%arg0: i32) -> (i32, i32) {
    %c0_i32 = arith.constant 0 : i32
    %c0_i32_0 = arith.constant 0 : i32
    %c0_i32_1 = arith.constant 0 : i32
    return %c0_i32, %c0_i32_0 : i32, i32
  }
  func.func @transform_3(%arg0: i32) -> (i32, i32) {
    %c0_i32 = arith.constant 0 : i32
    %c0_i32_0 = arith.constant 0 : i32
    %c0_i32_1 = arith.constant 0 : i32
    return %c0_i32, %c0_i32_0 : i32, i32
  }
  func.func @transform_4(%arg0: i32) -> (i32, i32) {
    %c0_i32 = arith.constant 0 : i32
    %c0_i32_0 = arith.constant 0 : i32
    %c0_i32_1 = arith.constant 0 : i32
    return %c0_i32, %c0_i32_0 : i32, i32
  }
  func.func @transform_5(%arg0: i32) -> (i32, i32) {
    %c0_i32 = arith.constant 0 : i32
    %c0_i32_0 = arith.constant 0 : i32
    %c0_i32_1 = arith.constant 0 : i32
    return %c0_i32, %c0_i32_0 : i32, i32
  }
  func.func @transform_6(%arg0: i32) -> i32 {
    %c0_i32 = arith.constant 0 : i32
    %c0_i32_0 = arith.constant 0 : i32
    return %c0_i32 : i32
  }
  func.func @transform_7(%arg0: i32) -> (i32, i32) {
    %c0_i32 = arith.constant 0 : i32
    %c0_i32_0 = arith.constant 0 : i32
    return %arg0, %c0_i32 : i32, i32
  }
}

</mosaic_0001>

<llo_original>
// kernel: tpu_custom_call.1
$region0: #{tpu_custom_call.1}
  #allocation0 [shape = 'u32[]', space=smem, size = 0x4, offset = 0x4, fixed_abs, tag = 'smem constant byte address 0x4 - core index']
  #allocation1 [shape = 'u32[144,128]{1,0:T(1,128)}', space=vmem, size = 0x12000, scoped, tag = 'internal scratch']
  #allocation2 [shape = 'f32[1]{0:T(128)S(6)}', space=smem, size = 0x200, scoped, tag = 'scoped memory for tpu_custom_call.1']
  %s0 = inlined_call_operand.vmem [shape: f32[32,128], index: 0, kind: input, shape index: {}]
  %s1 = inlined_call_operand.vmem [shape: f32[128,8], index: 1, kind: input, shape index: {}]
  %s2 = inlined_call_operand.vmem [shape: f32[128,1], index: 2, kind: input, shape index: {}]
  %s3 = inlined_call_operand.vmem [shape: f32[128,128], index: 3, kind: input, shape index: {}]
  %s4 = inlined_call_operand.vmem [shape: f32[128,1], index: 4, kind: input, shape index: {}]
  %s5 = inlined_call_operand.vmem [shape: f32[8,128], index: 5, kind: input, shape index: {}]
  %s6 = inlined_call_operand.<no memory space> [shape: f32[1], index: 6, kind: input, shape index: {}]
  %s7 = inlined_call_operand.hbm [shape: f32[32,128], index: 7, kind: output, shape index: {}]
  %s8 = sld [smem:[#allocation0]]
  $region61: #{tpu_custom_call.1} parent=0
    _
  %s10 = ssub.s32 1, %s8
  %s11 = scalar_select 0, %s10, %s8
  %12 = sst [smem:[#allocation2]] %s6
  $region1: #{tpu_custom_call.1} parent=0
    #allocation3 [shape = 'u8[8192]{0}', space=vmem, size = 0x2000, scoped, tag = 'output window, operand 0']
    #allocation4 [shape = 's32[2]{0}', space=sflag, size = 0x8, scoped, tag = 'scoped memory for tpu_custom_call.1']
    %13 = vsyncpa [#allocation4], 0
    %s14 = scalar_lea.sflag [#allocation4], 1
    %15 = vsyncpa %s14, 0
    loop: start=0, step=1, limit=6
    $region2: #{tpu_custom_call.1} parent=1 // loop_pre_header
      _
    $region3: #{tpu_custom_call.1} parent=1 // loop_header
      %s17 = sphi 0, %s21
      %p18 = scmp.ge.s32.totalorder %s17, 6
      %s27 = sphi 0, %s29
      %s30 = sphi 0, %s27
      %s31 = sphi 0, %s30
      %s47 = sphi 0, %s31
      %s51 = sphi 0, %s51
      %s53 = sphi 0, %s51
      %s54 = sphi 0, %s53
      %s68 = sphi 0, %s54
      %s72 = sphi 0, %s72
      %s74 = sphi 0, %s72
      %s75 = sphi 0, %s74
      %s89 = sphi 0, %s75
      %s93 = sphi 0, %s93
      %s95 = sphi 0, %s93
      %s96 = sphi 0, %s95
      %s110 = sphi 0, %s96
      %s114 = sphi 0, %s114
      %s116 = sphi 0, %s114
      %s117 = sphi 0, %s116
      %s131 = sphi 0, %s117
      %s135 = sphi 0, %s135
      %s137 = sphi 0, %s135
      %s138 = sphi 0, %s137
      %s152 = sphi 0, %s138
      %s156 = sphi 0, %s156
      %s158 = sphi 0, %s156
      %s159 = sphi 0, %s158
      %s173 = sphi 0, %s159
      %s179 = sphi 0, %s181
      %s182 = sphi 0, %s179
      %s183 = sphi 0, %s182
      %s199 = sphi 0, %s183
    $region4: #{tpu_custom_call.1} parent=1 // loop_header_branch
      %20 = sbr.rel (%p18) target = $region8
    $region5: #{tpu_custom_call.1} parent=1 // loop_body
      %s22 = ssub.s32 %s17, 1
      %s23 = ssub.s32 %s17, 2
      %s24 = sadd.s32 %s17, 1
      %s25 = ssub.s32 %s17, %s24
      %p26 = scmp.eq.s32.totalorder %s25, 0
      %s28 = sadd.s32 %s27, 1
      %s29 = scalar_select %p26, %s27, %s28
      %p32 = pneg %p26
      %p33 = scmp.eq.s32.totalorder %s17, 3
      %p34 = por %p32, %p33
      %p35 = scmp.ne.s32.totalorder %s27, %s30
      %p36 = scmp.eq.s32.totalorder %s17, 0
      %p37 = por %p35, %p36
      %p38 = scmp.ne.s32.totalorder %s27, %s30
      %p39 = scmp.eq.s32.totalorder %s22, 3
      %p40 = por %p38, %p39
      %p41 = scmp.ne.s32.totalorder %s30, %s31
      %p42 = scmp.eq.s32.totalorder %s22, 0
      %p43 = por %p41, %p42
      %p44 = scmp.ne.s32.totalorder %s30, %s31
      %p45 = scmp.eq.s32.totalorder %s23, 3
      %p46 = por %p44, %p45
      %p48 = scmp.ne.s32.totalorder %s31, %s47
      %p49 = scmp.eq.s32.totalorder %s23, 0
      %p50 = por %p48, %p49
      %s52 = sadd.s32 %s51, 1
      %p55 = scmp.eq.s32.totalorder %s17, 3
      %p56 = scmp.ne.s32.totalorder %s51, %s53
      %p57 = scmp.eq.s32.totalorder %s17, 0
      %p58 = por %p56, %p57
      %p59 = scmp.ne.s32.totalorder %s51, %s53
      %p60 = scmp.eq.s32.totalorder %s22, 3
      %p61 = por %p59, %p60
      %p62 = scmp.ne.s32.totalorder %s53, %s54
      %p63 = scmp.eq.s32.totalorder %s22, 0
      %p64 = por %p62, %p63
      %p65 = scmp.ne.s32.totalorder %s53, %s54
      %p66 = scmp.eq.s32.totalorder %s23, 3
      %p67 = por %p65, %p66
      %p69 = scmp.ne.s32.totalorder %s54, %s68
      %p70 = scmp.eq.s32.totalorder %s23, 0
      %p71 = por %p69, %p70
      %s73 = sadd.s32 %s72, 1
      %p76 = scmp.eq.s32.totalorder %s17, 3
      %p77 = scmp.ne.s32.totalorder %s72, %s74
      %p78 = scmp.eq.s32.totalorder %s17, 0
      %p79 = por %p77, %p78
      %p80 = scmp.ne.s32.totalorder %s72, %s74
      %p81 = scmp.eq.s32.totalorder %s22, 3
      %p82 = por %p80, %p81
      %p83 = scmp.ne.s32.totalorder %s74, %s75
      %p84 = scmp.eq.s32.totalorder %s22, 0
      %p85 = por %p83, %p84
      %p86 = scmp.ne.s32.totalorder %s74, %s75
      %p87 = scmp.eq.s32.totalorder %s23, 3
      %p88 = por %p86, %p87
      %p90 = scmp.ne.s32.totalorder %s75, %s89
      %p91 = scmp.eq.s32.totalorder %s23, 0
      %p92 = por %p90, %p91
      %s94 = sadd.s32 %s93, 1
      %p97 = scmp.eq.s32.totalorder %s17, 3
      %p98 = scmp.ne.s32.totalorder %s93, %s95
      %p99 = scmp.eq.s32.totalorder %s17, 0
      %p100 = por %p98, %p99
      %p101 = scmp.ne.s32.totalorder %s93, %s95
      %p102 = scmp.eq.s32.totalorder %s22, 3
      %p103 = por %p101, %p102
      %p104 = scmp.ne.s32.totalorder %s95, %s96
      %p105 = scmp.eq.s32.totalorder %s22, 0
      %p106 = por %p104, %p105
      %p107 = scmp.ne.s32.totalorder %s95, %s96
      %p108 = scmp.eq.s32.totalorder %s23, 3
      %p109 = por %p107, %p108
      %p111 = scmp.ne.s32.totalorder %s96, %s110
      %p112 = scmp.eq.s32.totalorder %s23, 0
      %p113 = por %p111, %p112
      %s115 = sadd.s32 %s114, 1
      %p118 = scmp.eq.s32.totalorder %s17, 3
      %p119 = scmp.ne.s32.totalorder %s114, %s116
      %p120 = scmp.eq.s32.totalorder %s17, 0
      %p121 = por %p119, %p120
      %p122 = scmp.ne.s32.totalorder %s114, %s116
      %p123 = scmp.eq.s32.totalorder %s22, 3
      %p124 = por %p122, %p123
      %p125 = scmp.ne.s32.totalorder %s116, %s117
      %p126 = scmp.eq.s32.totalorder %s22, 0
      %p127 = por %p125, %p126
      %p128 = scmp.ne.s32.totalorder %s116, %s117
      %p129 = scmp.eq.s32.totalorder %s23, 3
      %p130 = por %p128, %p129
      %p132 = scmp.ne.s32.totalorder %s117, %s131
      %p133 = scmp.eq.s32.totalorder %s23, 0
      %p134 = por %p132, %p133
      %s136 = sadd.s32 %s135, 1
      %p139 = scmp.eq.s32.totalorder %s17, 3
      %p140 = scmp.ne.s32.totalorder %s135, %s137
      %p141 = scmp.eq.s32.totalorder %s17, 0
      %p142 = por %p140, %p141
      %p143 = scmp.ne.s32.totalorder %s135, %s137
      %p144 = scmp.eq.s32.totalorder %s22, 3
      %p145 = por %p143, %p144
      %p146 = scmp.ne.s32.totalorder %s137, %s138
      %p147 = scmp.eq.s32.totalorder %s22, 0
      %p148 = por %p146, %p147
      %p149 = scmp.ne.s32.totalorder %s137, %s138
      %p150 = scmp.eq.s32.totalorder %s23, 3
      %p151 = por %p149, %p150
      %p153 = scmp.ne.s32.totalorder %s138, %s152
      %p154 = scmp.eq.s32.totalorder %s23, 0
      %p155 = por %p153, %p154
      %s157 = sadd.s32 %s156, 1
      %p160 = scmp.eq.s32.totalorder %s17, 3
      %p161 = scmp.ne.s32.totalorder %s156, %s158
      %p162 = scmp.eq.s32.totalorder %s17, 0
      %p163 = por %p161, %p162
      %p164 = scmp.ne.s32.totalorder %s156, %s158
      %p165 = scmp.eq.s32.totalorder %s22, 3
      %p166 = por %p164, %p165
      %p167 = scmp.ne.s32.totalorder %s158, %s159
      %p168 = scmp.eq.s32.totalorder %s22, 0
      %p169 = por %p167, %p168
      %p170 = scmp.ne.s32.totalorder %s158, %s159
      %p171 = scmp.eq.s32.totalorder %s23, 3
      %p172 = por %p170, %p171
      %p174 = scmp.ne.s32.totalorder %s159, %s173
      %p175 = scmp.eq.s32.totalorder %s23, 0
      %p176 = por %p174, %p175
      %s177 = ssub.s32 %s17, %s24
      %p178 = scmp.eq.s32.totalorder %s177, 0
      %s180 = sadd.s32 %s179, 1
      %s181 = scalar_select %p178, %s179, %s180
      %p184 = pneg %p178
      %p185 = scmp.eq.s32.totalorder %s17, 3
      %p186 = por %p184, %p185
      %p187 = scmp.ne.s32.totalorder %s179, %s182
      %p188 = scmp.eq.s32.totalorder %s17, 0
      %p189 = por %p187, %p188
      %p190 = scmp.ne.s32.totalorder %s179, %s182
      %p191 = scmp.eq.s32.totalorder %s22, 3
      %p192 = por %p190, %p191
      %p193 = scmp.ne.s32.totalorder %s182, %s183
      %p194 = scmp.eq.s32.totalorder %s22, 0
      %p195 = por %p193, %p194
      %p196 = scmp.ne.s32.totalorder %s182, %s183
      %p197 = scmp.eq.s32.totalorder %s23, 3
      %p198 = por %p196, %p197
      %p200 = scmp.ne.s32.totalorder %s183, %s199
      %p201 = scmp.eq.s32.totalorder %s23, 0
      %p202 = por %p200, %p201
      %p203 = scmp.le.s32.totalorder 1, %s17
      %p204 = scmp.lt.s32.totalorder %s17, 5
      %p205 = pnand %p203, %p204
      %p206 = pneg %p205
      // Predicated region
      $region9: #{tpu_custom_call.1} parent=5 // pred_check
        _
      $region10: #{tpu_custom_call.1} parent=5 // pred_check_branch
        %208 = sbr.rel (%p205) target = $region12
      $region11: #{tpu_custom_call.1} parent=5 // pred_region
        %s209 = ssub.s32 %s17, 1
        // Predicated region
        $region13: #{tpu_custom_call.1} parent=11 // pred_check
          %p210 = pneg %p64
        $region14: #{tpu_custom_call.1} parent=11 // pred_check_branch
          %212 = sbr.rel (%p210) target = $region16
        $region15: #{tpu_custom_call.1} parent=11 // pred_region
          _
        $region16: #{tpu_custom_call.1} parent=11 // pred_fallthru
          _
        // Predicated region
        $region17: #{tpu_custom_call.1} parent=11 // pred_check
          %p213 = pneg %p85
        $region18: #{tpu_custom_call.1} parent=11 // pred_check_branch
          %215 = sbr.rel (%p213) target = $region20
        $region19: #{tpu_custom_call.1} parent=11 // pred_region
          _
        $region20: #{tpu_custom_call.1} parent=11 // pred_fallthru
          _
        // Predicated region
        $region21: #{tpu_custom_call.1} parent=11 // pred_check
          %p216 = pneg %p106
        $region22: #{tpu_custom_call.1} parent=11 // pred_check_branch
          %218 = sbr.rel (%p216) target = $region24
        $region23: #{tpu_custom_call.1} parent=11 // pred_region
          _
        $region24: #{tpu_custom_call.1} parent=11 // pred_fallthru
          _
        // Predicated region
        $region25: #{tpu_custom_call.1} parent=11 // pred_check
          %p219 = pneg %p127
        $region26: #{tpu_custom_call.1} parent=11 // pred_check_branch
          %221 = sbr.rel (%p219) target = $region28
        $region27: #{tpu_custom_call.1} parent=11 // pred_region
          _
        $region28: #{tpu_custom_call.1} parent=11 // pred_fallthru
          _
        // Predicated region
        $region29: #{tpu_custom_call.1} parent=11 // pred_check
          %p222 = pneg %p148
        $region30: #{tpu_custom_call.1} parent=11 // pred_check_branch
          %224 = sbr.rel (%p222) target = $region32
        $region31: #{tpu_custom_call.1} parent=11 // pred_region
          _
        $region32: #{tpu_custom_call.1} parent=11 // pred_fallthru
          _
        // Predicated region
        $region33: #{tpu_custom_call.1} parent=11 // pred_check
          %p225 = pneg %p169
        $region34: #{tpu_custom_call.1} parent=11 // pred_check_branch
          %227 = sbr.rel (%p225) target = $region36
        $region35: #{tpu_custom_call.1} parent=11 // pred_region
          _
        $region36: #{tpu_custom_call.1} parent=11 // pred_fallthru
          _
      $region12: #{tpu_custom_call.1} parent=5 // pred_fallthru
        _
      %p228 = scmp.lt.s32.totalorder %s17, 4
      // Predicated region
      $region37: #{tpu_custom_call.1} parent=5 // pred_check
        %p229 = pneg %p228
      $region38: #{tpu_custom_call.1} parent=5 // pred_check_branch
        %231 = sbr.rel (%p229) target = $region40
      $region39: #{tpu_custom_call.1} parent=5 // pred_region
        // Predicated region
        $region41: #{tpu_custom_call.1} parent=39 // pred_check
          %p232 = pneg %p37
        $region42: #{tpu_custom_call.1} parent=39 // pred_check_branch
          %234 = sbr.rel (%p232) target = $region44
        $region43: #{tpu_custom_call.1} parent=39 // pred_region
          %p235 = scmp.lt.s32.totalorder %s17, 3
          %s236 = scalar_select %p235, %s17, 3
          %s237 = smul.addr %s236, 8
          %s238 = scalar_lea.vmem %s0, %s237
        $region44: #{tpu_custom_call.1} parent=39 // pred_fallthru
          _
      $region40: #{tpu_custom_call.1} parent=5 // pred_fallthru
        _
      %p239 = scmp.le.s32.totalorder 1, %s17
      %p240 = scmp.lt.s32.totalorder %s17, 5
      %p241 = pnand %p239, %p240
      %p242 = pneg %p241
      // Predicated region
      $region45: #{tpu_custom_call.1} parent=5 // pred_check
        _
      $region46: #{tpu_custom_call.1} parent=5 // pred_check_branch
        %244 = sbr.rel (%p241) target = $region48
      $region47: #{tpu_custom_call.1} parent=5 // pred_region
        %s245 = ssub.s32 %s17, 1
        %p246 = scmp.lt.s32.totalorder %s22, 3
        %s247 = scalar_select %p246, %s22, 3
        %s248 = smul.addr %s247, 8
        %s249 = scalar_lea.vmem %s0, %s248
        %p250 = pneg %p43
        %p251 = pneg %p40
        %p252 = pneg %p64
        %p253 = pneg %p61
        %p254 = pneg %p85
        %p255 = pneg %p82
        %p256 = pneg %p106
        %p257 = pneg %p103
        %p258 = pneg %p127
        %p259 = pneg %p124
        %p260 = pneg %p148
        %p261 = pneg %p145
        %p262 = pneg %p169
        %p263 = pneg %p166
        %p264 = pneg %p195
        %p265 = pneg %p192
        %s266 = sand.u32 %s182, 1
        %s267 = scalar_lea.sflag [#allocation4], %s266
        %s268 = sand.u32 %s182, 1
        %s269 = smul.addr %s268, 8
        %s270 = scalar_lea.vmem [#allocation3], %s269
        %p271 = scmp.lt.s32.totalorder %s22, 3
        %s272 = scalar_select %p271, %s22, 3
        %s273 = smul.addr %s272, 8
        %s274 = scalar_lea.vmem %s0, %s273
        %v275 = vld [vmem:[%s274] sm:$0xff]
        %v276 = vld [vmem:[%s1] sm:$0xff]
        %v277 = vld [vmem:[%s1 + $0x8] sm:$0xff]
        %v278 = vld [vmem:[%s1 + $0x10] sm:$0xff]
        %v279 = vld [vmem:[%s1 + $0x18] sm:$0xff]
        %v280 = vld [vmem:[%s1 + $0x20] sm:$0xff]
        %v281 = vld [vmem:[%s1 + $0x28] sm:$0xff]
        %v282 = vld [vmem:[%s1 + $0x30] sm:$0xff]
        %v283 = vld [vmem:[%s1 + $0x38] sm:$0xff]
        %v284 = vld [vmem:[%s1 + $0x40] sm:$0xff]
        %v285 = vld [vmem:[%s1 + $0x48] sm:$0xff]
        %v286 = vld [vmem:[%s1 + $0x50] sm:$0xff]
        %v287 = vld [vmem:[%s1 + $0x58] sm:$0xff]
        %v288 = vld [vmem:[%s1 + $0x60] sm:$0xff]
        %v289 = vld [vmem:[%s1 + $0x68] sm:$0xff]
        %v290 = vld [vmem:[%s1 + $0x70] sm:$0xff]
        %v291 = vld [vmem:[%s1 + $0x78] sm:$0xff]
        %v292 = vld [vmem:[%s2] sm:$0xff]
        %v293 = vld [vmem:[%s2 + $0x8] sm:$0xff]
        %v294 = vld [vmem:[%s2 + $0x10] sm:$0xff]
        %v295 = vld [vmem:[%s2 + $0x18] sm:$0xff]
        %v296 = vld [vmem:[%s2 + $0x20] sm:$0xff]
        %v297 = vld [vmem:[%s2 + $0x28] sm:$0xff]
        %v298 = vld [vmem:[%s2 + $0x30] sm:$0xff]
        %v299 = vld [vmem:[%s2 + $0x38] sm:$0xff]
        %v300 = vld [vmem:[%s2 + $0x40] sm:$0xff]
        %v301 = vld [vmem:[%s2 + $0x48] sm:$0xff]
        %v302 = vld [vmem:[%s2 + $0x50] sm:$0xff]
        %v303 = vld [vmem:[%s2 + $0x58] sm:$0xff]
        %v304 = vld [vmem:[%s2 + $0x60] sm:$0xff]
        %v305 = vld [vmem:[%s2 + $0x68] sm:$0xff]
        %v306 = vld [vmem:[%s2 + $0x70] sm:$0xff]
        %v307 = vld [vmem:[%s2 + $0x78] sm:$0xff]
        %309 = vset.pattern.permute.xlu0 0
        %310 = vperm.xlu0 %309, %v292
        %v311 = vpop.permute.xlu0 %310
        %314 = vset.pattern.permute.xlu0 0
        %315 = vperm.xlu0 %314, %v293
        %v316 = vpop.permute.xlu0 %315
        %319 = vset.pattern.permute.xlu0 0
        %320 = vperm.xlu0 %319, %v294
        %v321 = vpop.permute.xlu0 %320
        %324 = vset.pattern.permute.xlu0 0
        %325 = vperm.xlu0 %324, %v295
        %v326 = vpop.permute.xlu0 %325
        %329 = vset.pattern.permute.xlu0 0
        %330 = vperm.xlu0 %329, %v296
        %v331 = vpop.permute.xlu0 %330
        %334 = vset.pattern.permute.xlu0 0
        %335 = vperm.xlu0 %334, %v297
        %v336 = vpop.permute.xlu0 %335
        %339 = vset.pattern.permute.xlu0 0
        %340 = vperm.xlu0 %339, %v298
        %v341 = vpop.permute.xlu0 %340
        %344 = vset.pattern.permute.xlu0 0
        %345 = vperm.xlu0 %344, %v299
        %v346 = vpop.permute.xlu0 %345
        %349 = vset.pattern.permute.xlu0 0
        %350 = vperm.xlu0 %349, %v300
        %v351 = vpop.permute.xlu0 %350
        %354 = vset.pattern.permute.xlu0 0
        %355 = vperm.xlu0 %354, %v301
        %v356 = vpop.permute.xlu0 %355
        %359 = vset.pattern.permute.xlu0 0
        %360 = vperm.xlu0 %359, %v302
        %v361 = vpop.permute.xlu0 %360
        %364 = vset.pattern.permute.xlu0 0
        %365 = vperm.xlu0 %364, %v303
        %v366 = vpop.permute.xlu0 %365
        %369 = vset.pattern.permute.xlu0 0
        %370 = vperm.xlu0 %369, %v304
        %v371 = vpop.permute.xlu0 %370
        %374 = vset.pattern.permute.xlu0 0
        %375 = vperm.xlu0 %374, %v305
        %v376 = vpop.permute.xlu0 %375
        %379 = vset.pattern.permute.xlu0 0
        %380 = vperm.xlu0 %379, %v306
        %v381 = vpop.permute.xlu0 %380
        %384 = vset.pattern.permute.xlu0 0
        %385 = vperm.xlu0 %384, %v307
        %v386 = vpop.permute.xlu0 %385
        %vm388 = vcmask 64512
        %v390 = vsel %vm388, %v276, 0
        %v393 = vsel %vm388, %v277, 0
        %v396 = vsel %vm388, %v278, 0
        %v399 = vsel %vm388, %v279, 0
        %v402 = vsel %vm388, %v280, 0
        %v405 = vsel %vm388, %v281, 0
        %v408 = vsel %vm388, %v282, 0
        %v411 = vsel %vm388, %v283, 0
        %v414 = vsel %vm388, %v284, 0
        %v417 = vsel %vm388, %v285, 0
        %v420 = vsel %vm388, %v286, 0
        %v423 = vsel %vm388, %v287, 0
        %v426 = vsel %vm388, %v288, 0
        %v429 = vsel %vm388, %v289, 0
        %v432 = vsel %vm388, %v290, 0
        %v435 = vsel %vm388, %v291, 0
        %437 = vmatprep.subr.mxu0 0.0
        %v438 = vand.u32 %v275, 4294901760
        %439 = vmatpush1.msra.mxu0 %v438
        %440 = vmatprep.subr.mxu0 0.0
        %441 = vmatpush1.msra.mxu0 0.0
        %442 = vmatprep.subr.mxu0 0.0
        %443 = vmatpush1.msra.mxu0 0.0
        %444 = vmatprep.subr.mxu0 0.0
        %445 = vmatpush1.msra.mxu0 0.0
        %446 = vmatprep.subr.mxu0 0.0
        %447 = vmatpush1.msra.mxu0 0.0
        %448 = vmatprep.subr.mxu0 0.0
        %449 = vmatpush1.msra.mxu0 0.0
        %450 = vmatprep.subr.mxu0 0.0
        %451 = vmatpush1.msra.mxu0 0.0
        %452 = vmatprep.subr.mxu0 0.0
        %453 = vmatpush1.msra.mxu0 0.0
        %454 = vmatprep.subr.mxu0 0.0
        %455 = vmatpush1.msra.mxu0 0.0
        %456 = vmatprep.subr.mxu0 0.0
        %457 = vmatpush1.msra.mxu0 0.0
        %458 = vmatprep.subr.mxu0 0.0
        %459 = vmatpush1.msra.mxu0 0.0
        %460 = vmatprep.subr.mxu0 0.0
        %461 = vmatpush1.msra.mxu0 0.0
        %462 = vmatprep.subr.mxu0 0.0
        %463 = vmatpush1.msra.mxu0 0.0
        %464 = vmatprep.subr.mxu0 0.0
        %465 = vmatpush1.msra.mxu0 0.0
        %466 = vmatprep.subr.mxu0 0.0
        %467 = vmatpush1.msra.mxu0 0.0
        %468 = vmatprep.subr.mxu0 0.0
        %469 = vmatpush1.msra.mxu0 0.0
        %470 = vmatprep.subr.mxu0 0.0
        %471 = vmatpush1.msra.mxu0 0.0
        %472 = vmatprep.subr.mxu0 0.0
        %473 = vmatpush1.msra.mxu0 0.0
        %474 = vmatprep.subr.mxu0 0.0
        %475 = vmatpush1.msra.mxu0 0.0
        %476 = vmatprep.subr.mxu0 0.0
        %477 = vmatpush1.msra.mxu0 0.0
        %478 = vmatprep.subr.mxu0 0.0
        %479 = vmatpush1.msra.mxu0 0.0
        %480 = vmatprep.subr.mxu0 0.0
        %481 = vmatpush1.msra.mxu0 0.0
        %482 = vmatprep.subr.mxu0 0.0
        %483 = vmatpush1.msra.mxu0 0.0
        %484 = vmatprep.subr.mxu0 0.0
        %485 = vmatpush1.msra.mxu0 0.0
        %486 = vmatprep.subr.mxu0 0.0
        %487 = vmatpush1.msra.mxu0 0.0
        %488 = vmatprep.subr.mxu0 0.0
        %489 = vmatpush1.msra.mxu0 0.0
        %490 = vmatprep.subr.mxu0 0.0
        %491 = vmatpush1.msra.mxu0 0.0
        %492 = vmatprep.subr.mxu0 0.0
        %493 = vmatpush1.msra.mxu0 0.0
        %494 = vmatprep.subr.mxu0 0.0
        %495 = vmatpush1.msra.mxu0 0.0
        %496 = vmatprep.subr.mxu0 0.0
        %497 = vmatpush1.msra.mxu0 0.0
        %498 = vmatprep.subr.mxu0 0.0
        %499 = vmatpush1.msra.mxu0 0.0
        %500 = vmatprep.subr.mxu0 0.0
        %501 = vmatpush1.msra.mxu0 0.0
        %502 = vmatprep.mubr.f32.mxu0 0.0
        %v503 = vand.u32 %v390, 4294901760
        %v504 = vsub.f32 %v390, %v503
        %v505 = vand.u32 %v504, 4294901760
        %v506 = vsub.f32 %v504, %v505
        %v507 = vand.u32 %v506, 4294901760
        %508 = vmatmul.mubr.f32.gmra.mrb[0].mxu0 %v507
        %v509 = vpop.f32.mrb[0].mxu0
        %v510 = vadd.f32 %v311, %v509
        %v511 = vpop.f32.mrb[0].mxu0
        %512 = vmatprep.mubr.f32.mxu0 0.0
        %v513 = vand.u32 %v393, 4294901760
        %v514 = vsub.f32 %v393, %v513
        %v515 = vand.u32 %v514, 4294901760
        %v516 = vsub.f32 %v514, %v515
        %v517 = vand.u32 %v516, 4294901760
        %518 = vmatmul.mubr.f32.gmra.mrb[0].mxu0 %v517
        %v519 = vpop.f32.mrb[0].mxu0
        %v520 = vadd.f32 %v316, %v519
        %v521 = vpop.f32.mrb[0].mxu0
        %522 = vmatprep.mubr.f32.mxu0 0.0
        %v523 = vand.u32 %v396, 4294901760
        %v524 = vsub.f32 %v396, %v523
        %v525 = vand.u32 %v524, 4294901760
        %v526 = vsub.f32 %v524, %v525
        %v527 = vand.u32 %v526, 4294901760
        %528 = vmatmul.mubr.f32.gmra.mrb[0].mxu0 %v527
        %v529 = vpop.f32.mrb[0].mxu0
        %v530 = vadd.f32 %v321, %v529
        %v531 = vpop.f32.mrb[0].mxu0
        %532 = vmatprep.mubr.f32.mxu0 0.0
        %v533 = vand.u32 %v399, 4294901760
        %v534 = vsub.f32 %v399, %v533
        %v535 = vand.u32 %v534, 4294901760
        %v536 = vsub.f32 %v534, %v535
        %v537 = vand.u32 %v536, 4294901760
        %538 = vmatmul.mubr.f32.gmra.mrb[0].mxu0 %v537
        %v539 = vpop.f32.mrb[0].mxu0
        %v540 = vadd.f32 %v326, %v539
        %v541 = vpop.f32.mrb[0].mxu0
        %542 = vmatprep.mubr.f32.mxu0 0.0
        %v543 = vand.u32 %v402, 4294901760
        %v544 = vsub.f32 %v402, %v543
        %v545 = vand.u32 %v544, 4294901760
        %v546 = vsub.f32 %v544, %v545
        %v547 = vand.u32 %v546, 4294901760
        %548 = vmatmul.mubr.f32.gmra.mrb[0].mxu0 %v547
        %v549 = vpop.f32.mrb[0].mxu0
        %v550 = vadd.f32 %v331, %v549
        %v551 = vpop.f32.mrb[0].mxu0
        %552 = vmatprep.mubr.f32.mxu0 0.0
        %v553 = vand.u32 %v405, 4294901760
        %v554 = vsub.f32 %v405, %v553
        %v555 = vand.u32 %v554, 4294901760
        %v556 = vsub.f32 %v554, %v555
        %v557 = vand.u32 %v556, 4294901760
        %558 = vmatmul.mubr.f32.gmra.mrb[0].mxu0 %v557
        %v559 = vpop.f32.mrb[0].mxu0
        %v560 = vadd.f32 %v336, %v559
        %v561 = vpop.f32.mrb[0].mxu0
        %562 = vmatprep.mubr.f32.mxu0 0.0
        %v563 = vand.u32 %v408, 4294901760
        %v564 = vsub.f32 %v408, %v563
        %v565 = vand.u32 %v564, 4294901760
        %v566 = vsub.f32 %v564, %v565
        %v567 = vand.u32 %v566, 4294901760
        %568 = vmatmul.mubr.f32.gmra.mrb[0].mxu0 %v567
        %v569 = vpop.f32.mrb[0].mxu0
        %v570 = vadd.f32 %v341, %v569
        %v571 = vpop.f32.mrb[0].mxu0
        %572 = vmatprep.mubr.f32.mxu0 0.0
        %v573 = vand.u32 %v411, 4294901760
        %v574 = vsub.f32 %v411, %v573
        %v575 = vand.u32 %v574, 4294901760
        %v576 = vsub.f32 %v574, %v575
        %v577 = vand.u32 %v576, 4294901760
        %578 = vmatmul.mubr.f32.gmra.mrb[0].mxu0 %v577
        %v579 = vpop.f32.mrb[0].mxu0
        %v580 = vadd.f32 %v346, %v579
        %v581 = vpop.f32.mrb[0].mxu0
        %582 = vmatprep.mubr.f32.mxu0 0.0
        %v583 = vand.u32 %v414, 4294901760
        %v584 = vsub.f32 %v414, %v583
        %v585 = vand.u32 %v584, 4294901760
        %v586 = vsub.f32 %v584, %v585
        %v587 = vand.u32 %v586, 4294901760
        %588 = vmatmul.mubr.f32.gmra.mrb[0].mxu0 %v587
        %v589 = vpop.f32.mrb[0].mxu0
        %v590 = vadd.f32 %v351, %v589
        %v591 = vpop.f32.mrb[0].mxu0
        %592 = vmatprep.mubr.f32.mxu0 0.0
        %v593 = vand.u32 %v417, 4294901760
        %v594 = vsub.f32 %v417, %v593
        %v595 = vand.u32 %v594, 4294901760
        %v596 = vsub.f32 %v594, %v595
        %v597 = vand.u32 %v596, 4294901760
        %598 = vmatmul.mubr.f32.gmra.mrb[0].mxu0 %v597
        %v599 = vpop.f32.mrb[0].mxu0
        %v600 = vadd.f32 %v356, %v599
        %v601 = vpop.f32.mrb[0].mxu0
        %602 = vmatprep.mubr.f32.mxu0 0.0
        %v603 = vand.u32 %v420, 4294901760
        %v604 = vsub.f32 %v420, %v603
        %v605 = vand.u32 %v604, 4294901760
        %v606 = vsub.f32 %v604, %v605
        %v607 = vand.u32 %v606, 4294901760
        %608 = vmatmul.mubr.f32.gmra.mrb[0].mxu0 %v607
        %v609 = vpop.f32.mrb[0].mxu0
        %v610 = vadd.f32 %v361, %v609
        %v611 = vpop.f32.mrb[0].mxu0
        %612 = vmatprep.mubr.f32.mxu0 0.0
        %v613 = vand.u32 %v423, 4294901760
        %v614 = vsub.f32 %v423, %v613
        %v615 = vand.u32 %v614, 4294901760
        %v616 = vsub.f32 %v614, %v615
        %v617 = vand.u32 %v616, 4294901760
        %618 = vmatmul.mubr.f32.gmra.mrb[0].mxu0 %v617
        %v619 = vpop.f32.mrb[0].mxu0
        %v620 = vadd.f32 %v366, %v619
        %v621 = vpop.f32.mrb[0].mxu0
        %622 = vmatprep.mubr.f32.mxu0 0.0
        %v623 = vand.u32 %v426, 4294901760
        %v624 = vsub.f32 %v426, %v623
        %v625 = vand.u32 %v624, 4294901760
        %v626 = vsub.f32 %v624, %v625
        %v627 = vand.u32 %v626, 4294901760
        %628 = vmatmul.mubr.f32.gmra.mrb[0].mxu0 %v627
        %v629 = vpop.f32.mrb[0].mxu0
        %v630 = vadd.f32 %v371, %v629
        %v631 = vpop.f32.mrb[0].mxu0
        %632 = vmatprep.mubr.f32.mxu0 0.0
        %v633 = vand.u32 %v429, 4294901760
        %v634 = vsub.f32 %v429, %v633
        %v635 = vand.u32 %v634, 4294901760
        %v636 = vsub.f32 %v634, %v635
        %v637 = vand.u32 %v636, 4294901760
        %638 = vmatmul.mubr.f32.gmra.mrb[0].mxu0 %v637
        %v639 = vpop.f32.mrb[0].mxu0
        %v640 = vadd.f32 %v376, %v639
        %v641 = vpop.f32.mrb[0].mxu0
        %642 = vmatprep.mubr.f32.mxu0 0.0
        %v643 = vand.u32 %v432, 4294901760
        %v644 = vsub.f32 %v432, %v643
        %v645 = vand.u32 %v644, 4294901760
        %v646 = vsub.f32 %v644, %v645
        %v647 = vand.u32 %v646, 4294901760
        %648 = vmatmul.mubr.f32.gmra.mrb[0].mxu0 %v647
        %v649 = vpop.f32.mrb[0].mxu0
        %v650 = vadd.f32 %v381, %v649
        %v651 = vpop.f32.mrb[0].mxu0
        %652 = vmatprep.mubr.f32.mxu0 0.0
        %v653 = vand.u32 %v435, 4294901760
        %v654 = vsub.f32 %v435, %v653
        %v655 = vand.u32 %v654, 4294901760
        %v656 = vsub.f32 %v654, %v655
        %v657 = vand.u32 %v656, 4294901760
        %658 = vmatmul.mubr.f32.gmra.mrb[0].mxu0 %v657
        %v659 = vpop.f32.mrb[0].mxu0
        %v660 = vadd.f32 %v386, %v659
        %v661 = vpop.f32.mrb[0].mxu0
        %662 = vdwg.mxu0
        %663 = vmatprep.subr.mxu0 0.0
        %v664 = vand.u32 %v275, 4294901760
        %v665 = vsub.f32 %v275, %v664
        %v666 = vand.u32 %v665, 4294901760
        %v667 = vsub.f32 %v665, %v666
        %v668 = vand.u32 %v667, 4294901760
        %669 = vmatpush1.msra.mxu0 %v668
        %670 = vmatprep.subr.mxu0 0.0
        %671 = vmatpush1.msra.mxu0 0.0
        %672 = vmatprep.subr.mxu0 0.0
        %673 = vmatpush1.msra.mxu0 0.0
        %674 = vmatprep.subr.mxu0 0.0
        %675 = vmatpush1.msra.mxu0 0.0
        %676 = vmatprep.subr.mxu0 0.0
        %677 = vmatpush1.msra.mxu0 0.0
        %678 = vmatprep.subr.mxu0 0.0
        %679 = vmatpush1.msra.mxu0 0.0
        %680 = vmatprep.subr.mxu0 0.0
        %681 = vmatpush1.msra.mxu0 0.0
        %682 = vmatprep.subr.mxu0 0.0
        %683 = vmatpush1.msra.mxu0 0.0
        %684 = vmatprep.subr.mxu0 0.0
        %685 = vmatpush1.msra.mxu0 0.0
        %686 = vmatprep.subr.mxu0 0.0
        %687 = vmatpush1.msra.mxu0 0.0
        %688 = vmatprep.subr.mxu0 0.0
        %689 = vmatpush1.msra.mxu0 0.0
        %690 = vmatprep.subr.mxu0 0.0
        %691 = vmatpush1.msra.mxu0 0.0
        %692 = vmatprep.subr.mxu0 0.0
        %693 = vmatpush1.msra.mxu0 0.0
        %694 = vmatprep.subr.mxu0 0.0
        %695 = vmatpush1.msra.mxu0 0.0
        %696 = vmatprep.subr.mxu0 0.0
        %697 = vmatpush1.msra.mxu0 0.0
        %698 = vmatprep.subr.mxu0 0.0
        %699 = vmatpush1.msra.mxu0 0.0
        %700 = vmatprep.subr.mxu0 0.0
        %701 = vmatpush1.msra.mxu0 0.0
        %702 = vmatprep.subr.mxu0 0.0
        %703 = vmatpush1.msra.mxu0 0.0
        %704 = vmatprep.subr.mxu0 0.0
        %705 = vmatpush1.msra.mxu0 0.0
        %706 = vmatprep.subr.mxu0 0.0
        %707 = vmatpush1.msra.mxu0 0.0
        %708 = vmatprep.subr.mxu0 0.0
        %709 = vmatpush1.msra.mxu0 0.0
        %710 = vmatprep.subr.mxu0 0.0
        %711 = vmatpush1.msra.mxu0 0.0
        %712 = vmatprep.subr.mxu0 0.0
        %713 = vmatpush1.msra.mxu0 0.0
        %714 = vmatprep.subr.mxu0 0.0
        %715 = vmatpush1.msra.mxu0 0.0
        %716 = vmatprep.subr.mxu0 0.0
        %717 = vmatpush1.msra.mxu0 0.0
        %718 = vmatprep.subr.mxu0 0.0
        %719 = vmatpush1.msra.mxu0 0.0
        %720 = vmatprep.subr.mxu0 0.0
        %721 = vmatpush1.msra.mxu0 0.0
        %722 = vmatprep.subr.mxu0 0.0
        %723 = vmatpush1.msra.mxu0 0.0
        %724 = vmatprep.subr.mxu0 0.0
        %725 = vmatpush1.msra.mxu0 0.0
        %726 = vmatprep.subr.mxu0 0.0
        %727 = vmatpush1.msra.mxu0 0.0
        %728 = vmatprep.subr.mxu0 0.0
        %729 = vmatpush1.msra.mxu0 0.0
        %730 = vmatprep.subr.mxu0 0.0
        %731 = vmatpush1.msra.mxu0 0.0
        %732 = vmatprep.mubr.f32.mxu0 0.0
        %v733 = vand.u32 %v390, 4294901760
        %734 = vmatmul.mubr.f32.gmra.mrb[0].mxu0 %v733
        %v735 = vpop.f32.mrb[0].mxu0
        %v736 = vadd.f32 %v510, %v735
        %v737 = vpop.f32.mrb[0].mxu0
        %738 = vmatprep.mubr.f32.mxu0 0.0
        %v739 = vand.u32 %v393, 4294901760
        %740 = vmatmul.mubr.f32.gmra.mrb[0].mxu0 %v739
        %v741 = vpop.f32.mrb[0].mxu0
        %v742 = vadd.f32 %v520, %v741
        %v743 = vpop.f32.mrb[0].mxu0
        %744 = vmatprep.mubr.f32.mxu0 0.0
        %v745 = vand.u32 %v396, 4294901760
        %746 = vmatmul.mubr.f32.gmra.mrb[0].mxu0 %v745
        %v747 = vpop.f32.mrb[0].mxu0
        %v748 = vadd.f32 %v530, %v747
        %v749 = vpop.f32.mrb[0].mxu0
        %750 = vmatprep.mubr.f32.mxu0 0.0
        %v751 = vand.u32 %v399, 4294901760
        %752 = vmatmul.mubr.f32.gmra.mrb[0].mxu0 %v751
        %v753 = vpop.f32.mrb[0].mxu0
        %v754 = vadd.f32 %v540, %v753
        %v755 = vpop.f32.mrb[0].mxu0
        %756 = vmatprep.mubr.f32.mxu0 0.0
        %v757 = vand.u32 %v402, 4294901760
        %758 = vmatmul.mubr.f32.gmra.mrb[0].mxu0 %v757
        %v759 = vpop.f32.mrb[0].mxu0
        %v760 = vadd.f32 %v550, %v759
        %v761 = vpop.f32.mrb[0].mxu0
        %762 = vmatprep.mubr.f32.mxu0 0.0
        %v763 = vand.u32 %v405, 4294901760
        %764 = vmatmul.mubr.f32.gmra.mrb[0].mxu0 %v763
        %v765 = vpop.f32.mrb[0].mxu0
        %v766 = vadd.f32 %v560, %v765
        %v767 = vpop.f32.mrb[0].mxu0
        %768 = vmatprep.mubr.f32.mxu0 0.0
        %v769 = vand.u32 %v408, 4294901760
        %770 = vmatmul.mubr.f32.gmra.mrb[0].mxu0 %v769
        %v771 = vpop.f32.mrb[0].mxu0
        %v772 = vadd.f32 %v570, %v771
        %v773 = vpop.f32.mrb[0].mxu0
        %774 = vmatprep.mubr.f32.mxu0 0.0
        %v775 = vand.u32 %v411, 4294901760
        %776 = vmatmul.mubr.f32.gmra.mrb[0].mxu0 %v775
        %v777 = vpop.f32.mrb[0].mxu0
        %v778 = vadd.f32 %v580, %v777
        %v779 = vpop.f32.mrb[0].mxu0
        %780 = vmatprep.mubr.f32.mxu0 0.0
        %v781 = vand.u32 %v414, 4294901760
        %782 = vmatmul.mubr.f32.gmra.mrb[0].mxu0 %v781
        %v783 = vpop.f32.mrb[0].mxu0
        %v784 = vadd.f32 %v590, %v783
        %v785 = vpop.f32.mrb[0].mxu0
        %786 = vmatprep.mubr.f32.mxu0 0.0
        %v787 = vand.u32 %v417, 4294901760
        %788 = vmatmul.mubr.f32.gmra.mrb[0].mxu0 %v787
        %v789 = vpop.f32.mrb[0].mxu0
        %v790 = vadd.f32 %v600, %v789
        %v791 = vpop.f32.mrb[0].mxu0
        %792 = vmatprep.mubr.f32.mxu0 0.0
        %v793 = vand.u32 %v420, 4294901760
        %794 = vmatmul.mubr.f32.gmra.mrb[0].mxu0 %v793
        %v795 = vpop.f32.mrb[0].mxu0
        %v796 = vadd.f32 %v610, %v795
        %v797 = vpop.f32.mrb[0].mxu0
        %798 = vmatprep.mubr.f32.mxu0 0.0
        %v799 = vand.u32 %v423, 4294901760
        %800 = vmatmul.mubr.f32.gmra.mrb[0].mxu0 %v799
        %v801 = vpop.f32.mrb[0].mxu0
        %v802 = vadd.f32 %v620, %v801
        %v803 = vpop.f32.mrb[0].mxu0
        %804 = vmatprep.mubr.f32.mxu0 0.0
        %v805 = vand.u32 %v426, 4294901760
        %806 = vmatmul.mubr.f32.gmra.mrb[0].mxu0 %v805
        %v807 = vpop.f32.mrb[0].mxu0
        %v808 = vadd.f32 %v630, %v807
        %v809 = vpop.f32.mrb[0].mxu0
        %810 = vmatprep.mubr.f32.mxu0 0.0
        %v811 = vand.u32 %v429, 4294901760
        %812 = vmatmul.mubr.f32.gmra.mrb[0].mxu0 %v811
        %v813 = vpop.f32.mrb[0].mxu0
        %v814 = vadd.f32 %v640, %v813
        %v815 = vpop.f32.mrb[0].mxu0
        %816 = vmatprep.mubr.f32.mxu0 0.0
        %v817 = vand.u32 %v432, 4294901760
        %818 = vmatmul.mubr.f32.gmra.mrb[0].mxu0 %v817
        %v819 = vpop.f32.mrb[0].mxu0
        %v820 = vadd.f32 %v650, %v819
        %v821 = vpop.f32.mrb[0].mxu0
        %822 = vmatprep.mubr.f32.mxu0 0.0
        %v823 = vand.u32 %v435, 4294901760
        %824 = vmatmul.mubr.f32.gmra.mrb[0].mxu0 %v823
        %v825 = vpop.f32.mrb[0].mxu0
        %v826 = vadd.f32 %v660, %v825
        %v827 = vpop.f32.mrb[0].mxu0
        %828 = vdwg.mxu0
        %829 = vmatprep.subr.mxu0 0.0
        %v830 = vand.u32 %v275, 4294901760
        %v831 = vsub.f32 %v275, %v830
        %832 = vmatpush1.msra.mxu0 %v831
        %833 = vmatprep.subr.mxu0 0.0
        %834 = vmatpush1.msra.mxu0 0.0
        %835 = vmatprep.subr.mxu0 0.0
        %836 = vmatpush1.msra.mxu0 0.0
        %837 = vmatprep.subr.mxu0 0.0
        %838 = vmatpush1.msra.mxu0 0.0
        %839 = vmatprep.subr.mxu0 0.0
        %840 = vmatpush1.msra.mxu0 0.0
        %841 = vmatprep.subr.mxu0 0.0
        %842 = vmatpush1.msra.mxu0 0.0
        %843 = vmatprep.subr.mxu0 0.0
        %844 = vmatpush1.msra.mxu0 0.0
        %845 = vmatprep.subr.mxu0 0.0
        %846 = vmatpush1.msra.mxu0 0.0
        %847 = vmatprep.subr.mxu0 0.0
        %848 = vmatpush1.msra.mxu0 0.0
        %849 = vmatprep.subr.mxu0 0.0
        %850 = vmatpush1.msra.mxu0 0.0
        %851 = vmatprep.subr.mxu0 0.0
        %852 = vmatpush1.msra.mxu0 0.0
        %853 = vmatprep.subr.mxu0 0.0
        %854 = vmatpush1.msra.mxu0 0.0
        %855 = vmatprep.subr.mxu0 0.0
        %856 = vmatpush1.msra.mxu0 0.0
        %857 = vmatprep.subr.mxu0 0.0
        %858 = vmatpush1.msra.mxu0 0.0
        %859 = vmatprep.subr.mxu0 0.0
        %860 = vmatpush1.msra.mxu0 0.0
        %861 = vmatprep.subr.mxu0 0.0
        %862 = vmatpush1.msra.mxu0 0.0
        %863 = vmatprep.subr.mxu0 0.0
        %864 = vmatpush1.msra.mxu0 0.0
        %865 = vmatprep.subr.mxu0 0.0
        %866 = vmatpush1.msra.mxu0 0.0
        %867 = vmatprep.subr.mxu0 0.0
        %868 = vmatpush1.msra.mxu0 0.0
        %869 = vmatprep.subr.mxu0 0.0
        %870 = vmatpush1.msra.mxu0 0.0
        %871 = vmatprep.subr.mxu0 0.0
        %872 = vmatpush1.msra.mxu0 0.0
        %873 = vmatprep.subr.mxu0 0.0
        %874 = vmatpush1.msra.mxu0 0.0
        %875 = vmatprep.subr.mxu0 0.0
        %876 = vmatpush1.msra.mxu0 0.0
        %877 = vmatprep.subr.mxu0 0.0
        %878 = vmatpush1.msra.mxu0 0.0
        %879 = vmatprep.subr.mxu0 0.0
        %880 = vmatpush1.msra.mxu0 0.0
        %881 = vmatprep.subr.mxu0 0.0
        %882 = vmatpush1.msra.mxu0 0.0
        %883 = vmatprep.subr.mxu0 0.0
        %884 = vmatpush1.msra.mxu0 0.0
        %885 = vmatprep.subr.mxu0 0.0
        %886 = vmatpush1.msra.mxu0 0.0
        %887 = vmatprep.subr.mxu0 0.0
        %888 = vmatpush1.msra.mxu0 0.0
        %889 = vmatprep.subr.mxu0 0.0
        %890 = vmatpush1.msra.mxu0 0.0
        %891 = vmatprep.subr.mxu0 0.0
        %892 = vmatpush1.msra.mxu0 0.0
        %893 = vmatprep.subr.mxu0 0.0
        %894 = vmatpush1.msra.mxu0 0.0
        %895 = vmatprep.mubr.f32.mxu0 0.0
        %v896 = vand.u32 %v390, 4294901760
        %v897 = vsub.f32 %v390, %v896
        %898 = vmatmul.mubr.f32.gmra.mrb[0].mxu0 %v897
        %v899 = vpop.f32.mrb[0].mxu0
        %v900 = vadd.f32 %v736, %v899
        %v901 = vpop.f32.mrb[0].mxu0
        %902 = vmatprep.mubr.f32.mxu0 0.0
        %v903 = vand.u32 %v393, 4294901760
        %v904 = vsub.f32 %v393, %v903
        %905 = vmatmul.mubr.f32.gmra.mrb[0].mxu0 %v904
        %v906 = vpop.f32.mrb[0].mxu0
        %v907 = vadd.f32 %v742, %v906
        %v908 = vpop.f32.mrb[0].mxu0
        %909 = vmatprep.mubr.f32.mxu0 0.0
        %v910 = vand.u32 %v396, 4294901760
        %v911 = vsub.f32 %v396, %v910
        %912 = vmatmul.mubr.f32.gmra.mrb[0].mxu0 %v911
        %v913 = vpop.f32.mrb[0].mxu0
        %v914 = vadd.f32 %v748, %v913
        %v915 = vpop.f32.mrb[0].mxu0
        %916 = vmatprep.mubr.f32.mxu0 0.0
        %v917 = vand.u32 %v399, 4294901760
        %v918 = vsub.f32 %v399, %v917
        %919 = vmatmul.mubr.f32.gmra.mrb[0].mxu0 %v918
        %v920 = vpop.f32.mrb[0].mxu0
        %v921 = vadd.f32 %v754, %v920
        %v922 = vpop.f32.mrb[0].mxu0
        %923 = vmatprep.mubr.f32.mxu0 0.0
        %v924 = vand.u32 %v402, 4294901760
        %v925 = vsub.f32 %v402, %v924
        %926 = vmatmul.mubr.f32.gmra.mrb[0].mxu0 %v925
        %v927 = vpop.f32.mrb[0].mxu0
        %v928 = vadd.f32 %v760, %v927
        %v929 = vpop.f32.mrb[0].mxu0
        %930 = vmatprep.mubr.f32.mxu0 0.0
        %v931 = vand.u32 %v405, 4294901760
        %v932 = vsub.f32 %v405, %v931
        %933 = vmatmul.mubr.f32.gmra.mrb[0].mxu0 %v932
        %v934 = vpop.f32.mrb[0].mxu0
        %v935 = vadd.f32 %v766, %v934
        %v936 = vpop.f32.mrb[0].mxu0
        %937 = vmatprep.mubr.f32.mxu0 0.0
        %v938 = vand.u32 %v408, 4294901760
        %v939 = vsub.f32 %v408, %v938
        %940 = vmatmul.mubr.f32.gmra.mrb[0].mxu0 %v939
        %v941 = vpop.f32.mrb[0].mxu0
        %v942 = vadd.f32 %v772, %v941
        %v943 = vpop.f32.mrb[0].mxu0
        %944 = vmatprep.mubr.f32.mxu0 0.0
        %v945 = vand.u32 %v411, 4294901760
        %v946 = vsub.f32 %v411, %v945
        %947 = vmatmul.mubr.f32.gmra.mrb[0].mxu0 %v946
        %v948 = vpop.f32.mrb[0].mxu0
        %v949 = vadd.f32 %v778, %v948
        %v950 = vpop.f32.mrb[0].mxu0
        %951 = vmatprep.mubr.f32.mxu0 0.0
        %v952 = vand.u32 %v414, 4294901760
        %v953 = vsub.f32 %v414, %v952
        %954 = vmatmul.mubr.f32.gmra.mrb[0].mxu0 %v953
        %v955 = vpop.f32.mrb[0].mxu0
        %v956 = vadd.f32 %v784, %v955
        %v957 = vpop.f32.mrb[0].mxu0
        %958 = vmatprep.mubr.f32.mxu0 0.0
        %v959 = vand.u32 %v417, 4294901760
        %v960 = vsub.f32 %v417, %v959
        %961 = vmatmul.mubr.f32.gmra.mrb[0].mxu0 %v960
        %v962 = vpop.f32.mrb[0].mxu0
        %v963 = vadd.f32 %v790, %v962
        %v964 = vpop.f32.mrb[0].mxu0
        %965 = vmatprep.mubr.f32.mxu0 0.0
        %v966 = vand.u32 %v420, 4294901760
        %v967 = vsub.f32 %v420, %v966
        %968 = vmatmul.mubr.f32.gmra.mrb[0].mxu0 %v967
        %v969 = vpop.f32.mrb[0].mxu0
        %v970 = vadd.f32 %v796, %v969
        %v971 = vpop.f32.mrb[0].mxu0
        %972 = vmatprep.mubr.f32.mxu0 0.0
        %v973 = vand.u32 %v423, 4294901760
        %v974 = vsub.f32 %v423, %v973
        %975 = vmatmul.mubr.f32.gmra.mrb[0].mxu0 %v974
        %v976 = vpop.f32.mrb[0].mxu0
        %v977 = vadd.f32 %v802, %v976
        %v978 = vpop.f32.mrb[0].mxu0
        %979 = vmatprep.mubr.f32.mxu0 0.0
        %v980 = vand.u32 %v426, 4294901760
        %v981 = vsub.f32 %v426, %v980
        %982 = vmatmul.mubr.f32.gmra.mrb[0].mxu0 %v981
        %v983 = vpop.f32.mrb[0].mxu0
        %v984 = vadd.f32 %v808, %v983
        %v985 = vpop.f32.mrb[0].mxu0
        %986 = vmatprep.mubr.f32.mxu0 0.0
        %v987 = vand.u32 %v429, 4294901760
        %v988 = vsub.f32 %v429, %v987
        %989 = vmatmul.mubr.f32.gmra.mrb[0].mxu0 %v988
        %v990 = vpop.f32.mrb[0].mxu0
        %v991 = vadd.f32 %v814, %v990
        %v992 = vpop.f32.mrb[0].mxu0
        %993 = vmatprep.mubr.f32.mxu0 0.0
        %v994 = vand.u32 %v432, 4294901760
        %v995 = vsub.f32 %v432, %v994
        %996 = vmatmul.mubr.f32.gmra.mrb[0].mxu0 %v995
        %v997 = vpop.f32.mrb[0].mxu0
        %v998 = vadd.f32 %v820, %v997
        %v999 = vpop.f32.mrb[0].mxu0
        %1000 = vmatprep.mubr.f32.mxu0 0.0
        %v1001 = vand.u32 %v435, 4294901760
        %v1002 = vsub.f32 %v435, %v1001
        %1003 = vmatmul.mubr.f32.gmra.mrb[0].mxu0 %v1002
        %v1004 = vpop.f32.mrb[0].mxu0
        %v1005 = vadd.f32 %v826, %v1004
        %v1006 = vpop.f32.mrb[0].mxu0
        %1007 = vdwg.mxu0
        %1008 = vmatprep.subr.mxu0 0.0
        %v1009 = vand.u32 %v275, 4294901760
        %1010 = vmatpush1.msra.mxu0 %v1009
        %1011 = vmatprep.subr.mxu0 0.0
        %1012 = vmatpush1.msra.mxu0 0.0
        %1013 = vmatprep.subr.mxu0 0.0
        %1014 = vmatpush1.msra.mxu0 0.0
        %1015 = vmatprep.subr.mxu0 0.0
        %1016 = vmatpush1.msra.mxu0 0.0
        %1017 = vmatprep.subr.mxu0 0.0
        %1018 = vmatpush1.msra.mxu0 0.0
        %1019 = vmatprep.subr.mxu0 0.0
        %1020 = vmatpush1.msra.mxu0 0.0
        %1021 = vmatprep.subr.mxu0 0.0
        %1022 = vmatpush1.msra.mxu0 0.0
        %1023 = vmatprep.subr.mxu0 0.0
        %1024 = vmatpush1.msra.mxu0 0.0
        %1025 = vmatprep.subr.mxu0 0.0
        %1026 = vmatpush1.msra.mxu0 0.0
        %1027 = vmatprep.subr.mxu0 0.0
        %1028 = vmatpush1.msra.mxu0 0.0
        %1029 = vmatprep.subr.mxu0 0.0
        %1030 = vmatpush1.msra.mxu0 0.0
        %1031 = vmatprep.subr.mxu0 0.0
        %1032 = vmatpush1.msra.mxu0 0.0
        %1033 = vmatprep.subr.mxu0 0.0
        %1034 = vmatpush1.msra.mxu0 0.0
        %1035 = vmatprep.subr.mxu0 0.0
        %1036 = vmatpush1.msra.mxu0 0.0
        %1037 = vmatprep.subr.mxu0 0.0
        %1038 = vmatpush1.msra.mxu0 0.0
        %1039 = vmatprep.subr.mxu0 0.0
        %1040 = vmatpush1.msra.mxu0 0.0
        %1041 = vmatprep.subr.mxu0 0.0
        %1042 = vmatpush1.msra.mxu0 0.0
        %1043 = vmatprep.subr.mxu0 0.0
        %1044 = vmatpush1.msra.mxu0 0.0
        %1045 = vmatprep.subr.mxu0 0.0
        %1046 = vmatpush1.msra.mxu0 0.0
        %1047 = vmatprep.subr.mxu0 0.0
        %1048 = vmatpush1.msra.mxu0 0.0
        %1049 = vmatprep.subr.mxu0 0.0
        %1050 = vmatpush1.msra.mxu0 0.0
        %1051 = vmatprep.subr.mxu0 0.0
        %1052 = vmatpush1.msra.mxu0 0.0
        %1053 = vmatprep.subr.mxu0 0.0
        %1054 = vmatpush1.msra.mxu0 0.0
        %1055 = vmatprep.subr.mxu0 0.0
        %1056 = vmatpush1.msra.mxu0 0.0
        %1057 = vmatprep.subr.mxu0 0.0
        %1058 = vmatpush1.msra.mxu0 0.0
        %1059 = vmatprep.subr.mxu0 0.0
        %1060 = vmatpush1.msra.mxu0 0.0
        %1061 = vmatprep.subr.mxu0 0.0
        %1062 = vmatpush1.msra.mxu0 0.0
        %1063 = vmatprep.subr.mxu0 0.0
        %1064 = vmatpush1.msra.mxu0 0.0
        %1065 = vmatprep.subr.mxu0 0.0
        %1066 = vmatpush1.msra.mxu0 0.0
        %1067 = vmatprep.subr.mxu0 0.0
        %1068 = vmatpush1.msra.mxu0 0.0
        %1069 = vmatprep.subr.mxu0 0.0
        %1070 = vmatpush1.msra.mxu0 0.0
        %1071 = vmatprep.subr.mxu0 0.0
        %1072 = vmatpush1.msra.mxu0 0.0
        %1073 = vmatprep.mubr.f32.mxu0 0.0
        %v1074 = vand.u32 %v390, 4294901760
        %v1075 = vsub.f32 %v390, %v1074
        %v1076 = vand.u32 %v1075, 4294901760
        %1077 = vmatmul.mubr.f32.gmra.mrb[0].mxu0 %v1076
        %v1078 = vpop.f32.mrb[0].mxu0
        %v1079 = vadd.f32 %v900, %v1078
        %v1080 = vpop.f32.mrb[0].mxu0
        %1081 = vmatprep.mubr.f32.mxu0 0.0
        %v1082 = vand.u32 %v393, 4294901760
        %v1083 = vsub.f32 %v393, %v1082
        %v1084 = vand.u32 %v1083, 4294901760
        %1085 = vmatmul.mubr.f32.gmra.mrb[0].mxu0 %v1084
        %v1086 = vpop.f32.mrb[0].mxu0
        %v1087 = vadd.f32 %v907, %v1086
        %v1088 = vpop.f32.mrb[0].mxu0
        %1089 = vmatprep.mubr.f32.mxu0 0.0
        %v1090 = vand.u32 %v396, 4294901760
        %v1091 = vsub.f32 %v396, %v1090
        %v1092 = vand.u32 %v1091, 4294901760
        %1093 = vmatmul.mubr.f32.gmra.mrb[0].mxu0 %v1092
        %v1094 = vpop.f32.mrb[0].mxu0
        %v1095 = vadd.f32 %v914, %v1094
        %v1096 = vpop.f32.mrb[0].mxu0
        %1097 = vmatprep.mubr.f32.mxu0 0.0
        %v1098 = vand.u32 %v399, 4294901760
        %v1099 = vsub.f32 %v399, %v1098
        %v1100 = vand.u32 %v1099, 4294901760
        %1101 = vmatmul.mubr.f32.gmra.mrb[0].mxu0 %v1100
        %v1102 = vpop.f32.mrb[0].mxu0
        %v1103 = vadd.f32 %v921, %v1102
        %v1104 = vpop.f32.mrb[0].mxu0
        %1105 = vmatprep.mubr.f32.mxu0 0.0
        %v1106 = vand.u32 %v402, 4294901760
        %v1107 = vsub.f32 %v402, %v1106
        %v1108 = vand.u32 %v1107, 4294901760
        %1109 = vmatmul.mubr.f32.gmra.mrb[0].mxu0 %v1108
        %v1110 = vpop.f32.mrb[0].mxu0
        %v1111 = vadd.f32 %v928, %v1110
        %v1112 = vpop.f32.mrb[0].mxu0
        %1113 = vmatprep.mubr.f32.mxu0 0.0
        %v1114 = vand.u32 %v405, 4294901760
        %v1115 = vsub.f32 %v405, %v1114
        %v1116 = vand.u32 %v1115, 4294901760
        %1117 = vmatmul.mubr.f32.gmra.mrb[0].mxu0 %v1116
        %v1118 = vpop.f32.mrb[0].mxu0
        %v1119 = vadd.f32 %v935, %v1118
        %v1120 = vpop.f32.mrb[0].mxu0
        %1121 = vmatprep.mubr.f32.mxu0 0.0
        %v1122 = vand.u32 %v408, 4294901760
        %v1123 = vsub.f32 %v408, %v1122
        %v1124 = vand.u32 %v1123, 4294901760
        %1125 = vmatmul.mubr.f32.gmra.mrb[0].mxu0 %v1124
        %v1126 = vpop.f32.mrb[0].mxu0
        %v1127 = vadd.f32 %v942, %v1126
        %v1128 = vpop.f32.mrb[0].mxu0
        %1129 = vmatprep.mubr.f32.mxu0 0.0
        %v1130 = vand.u32 %v411, 4294901760
        %v1131 = vsub.f32 %v411, %v1130
        %v1132 = vand.u32 %v1131, 4294901760
        %1133 = vmatmul.mubr.f32.gmra.mrb[0].mxu0 %v1132
        %v1134 = vpop.f32.mrb[0].mxu0
        %v1135 = vadd.f32 %v949, %v1134
        %v1136 = vpop.f32.mrb[0].mxu0
        %1137 = vmatprep.mubr.f32.mxu0 0.0
        %v1138 = vand.u32 %v414, 4294901760
        %v1139 = vsub.f32 %v414, %v1138
        %v1140 = vand.u32 %v1139, 4294901760
        %1141 = vmatmul.mubr.f32.gmra.mrb[0].mxu0 %v1140
        %v1142 = vpop.f32.mrb[0].mxu0
        %v1143 = vadd.f32 %v956, %v1142
        %v1144 = vpop.f32.mrb[0].mxu0
        %1145 = vmatprep.mubr.f32.mxu0 0.0
        %v1146 = vand.u32 %v417, 4294901760
        %v1147 = vsub.f32 %v417, %v1146
        %v1148 = vand.u32 %v1147, 4294901760
        %1149 = vmatmul.mubr.f32.gmra.mrb[0].mxu0 %v1148
        %v1150 = vpop.f32.mrb[0].mxu0
        %v1151 = vadd.f32 %v963, %v1150
        %v1152 = vpop.f32.mrb[0].mxu0
        %1153 = vmatprep.mubr.f32.mxu0 0.0
        %v1154 = vand.u32 %v420, 4294901760
        %v1155 = vsub.f32 %v420, %v1154
        %v1156 = vand.u32 %v1155, 4294901760
        %1157 = vmatmul.mubr.f32.gmra.mrb[0].mxu0 %v1156
        %v1158 = vpop.f32.mrb[0].mxu0
        %v1159 = vadd.f32 %v970, %v1158
        %v1160 = vpop.f32.mrb[0].mxu0
        %1161 = vmatprep.mubr.f32.mxu0 0.0
        %v1162 = vand.u32 %v423, 4294901760
        %v1163 = vsub.f32 %v423, %v1162
        %v1164 = vand.u32 %v1163, 4294901760
        %1165 = vmatmul.mubr.f32.gmra.mrb[0].mxu0 %v1164
        %v1166 = vpop.f32.mrb[0].mxu0
        %v1167 = vadd.f32 %v977, %v1166
        %v1168 = vpop.f32.mrb[0].mxu0
        %1169 = vmatprep.mubr.f32.mxu0 0.0
        %v1170 = vand.u32 %v426, 4294901760
        %v1171 = vsub.f32 %v426, %v1170
        %v1172 = vand.u32 %v1171, 4294901760
        %1173 = vmatmul.mubr.f32.gmra.mrb[0].mxu0 %v1172
        %v1174 = vpop.f32.mrb[0].mxu0
        %v1175 = vadd.f32 %v984, %v1174
        %v1176 = vpop.f32.mrb[0].mxu0
        %1177 = vmatprep.mubr.f32.mxu0 0.0
        %v1178 = vand.u32 %v429, 4294901760
        %v1179 = vsub.f32 %v429, %v1178
        %v1180 = vand.u32 %v1179, 4294901760
        %1181 = vmatmul.mubr.f32.gmra.mrb[0].mxu0 %v1180
        %v1182 = vpop.f32.mrb[0].mxu0
        %v1183 = vadd.f32 %v991, %v1182
        %v1184 = vpop.f32.mrb[0].mxu0
        %1185 = vmatprep.mubr.f32.mxu0 0.0
        %v1186 = vand.u32 %v432, 4294901760
        %v1187 = vsub.f32 %v432, %v1186
        %v1188 = vand.u32 %v1187, 4294901760
        %1189 = vmatmul.mubr.f32.gmra.mrb[0].mxu0 %v1188
        %v1190 = vpop.f32.mrb[0].mxu0
        %v1191 = vadd.f32 %v998, %v1190
        %v1192 = vpop.f32.mrb[0].mxu0
        %1193 = vmatprep.mubr.f32.mxu0 0.0
        %v1194 = vand.u32 %v435, 4294901760
        %v1195 = vsub.f32 %v435, %v1194
        %v1196 = vand.u32 %v1195, 4294901760
        %1197 = vmatmul.mubr.f32.gmra.mrb[0].mxu0 %v1196
        %v1198 = vpop.f32.mrb[0].mxu0
        %v1199 = vadd.f32 %v1005, %v1198
        %v1200 = vpop.f32.mrb[0].mxu0
        %1201 = vdwg.mxu0
        %1202 = vmatprep.subr.mxu0 0.0
        %v1203 = vand.u32 %v275, 4294901760
        %v1204 = vsub.f32 %v275, %v1203
        %v1205 = vand.u32 %v1204, 4294901760
        %1206 = vmatpush1.msra.mxu0 %v1205
        %1207 = vmatprep.subr.mxu0 0.0
        %1208 = vmatpush1.msra.mxu0 0.0
        %1209 = vmatprep.subr.mxu0 0.0
        %1210 = vmatpush1.msra.mxu0 0.0
        %1211 = vmatprep.subr.mxu0 0.0
        %1212 = vmatpush1.msra.mxu0 0.0
        %1213 = vmatprep.subr.mxu0 0.0
        %1214 = vmatpush1.msra.mxu0 0.0
        %1215 = vmatprep.subr.mxu0 0.0
        %1216 = vmatpush1.msra.mxu0 0.0
        %1217 = vmatprep.subr.mxu0 0.0
        %1218 = vmatpush1.msra.mxu0 0.0
        %1219 = vmatprep.subr.mxu0 0.0
        %1220 = vmatpush1.msra.mxu0 0.0
        %1221 = vmatprep.subr.mxu0 0.0
        %1222 = vmatpush1.msra.mxu0 0.0
        %1223 = vmatprep.subr.mxu0 0.0
        %1224 = vmatpush1.msra.mxu0 0.0
        %1225 = vmatprep.subr.mxu0 0.0
        %1226 = vmatpush1.msra.mxu0 0.0
        %1227 = vmatprep.subr.mxu0 0.0
        %1228 = vmatpush1.msra.mxu0 0.0
        %1229 = vmatprep.subr.mxu0 0.0
        %1230 = vmatpush1.msra.mxu0 0.0
        %1231 = vmatprep.subr.mxu0 0.0
        %1232 = vmatpush1.msra.mxu0 0.0
        %1233 = vmatprep.subr.mxu0 0.0
        %1234 = vmatpush1.msra.mxu0 0.0
        %1235 = vmatprep.subr.mxu0 0.0
        %1236 = vmatpush1.msra.mxu0 0.0
        %1237 = vmatprep.subr.mxu0 0.0
        %1238 = vmatpush1.msra.mxu0 0.0
        %1239 = vmatprep.subr.mxu0 0.0
        %1240 = vmatpush1.msra.mxu0 0.0
        %1241 = vmatprep.subr.mxu0 0.0
        %1242 = vmatpush1.msra.mxu0 0.0
        %1243 = vmatprep.subr.mxu0 0.0
        %1244 = vmatpush1.msra.mxu0 0.0
        %1245 = vmatprep.subr.mxu0 0.0
        %1246 = vmatpush1.msra.mxu0 0.0
        %1247 = vmatprep.subr.mxu0 0.0
        %1248 = vmatpush1.msra.mxu0 0.0
        %1249 = vmatprep.subr.mxu0 0.0
        %1250 = vmatpush1.msra.mxu0 0.0
        %1251 = vmatprep.subr.mxu0 0.0
        %1252 = vmatpush1.msra.mxu0 0.0
        %1253 = vmatprep.subr.mxu0 0.0
        %1254 = vmatpush1.msra.mxu0 0.0
        %1255 = vmatprep.subr.mxu0 0.0
        %1256 = vmatpush1.msra.mxu0 0.0
        %1257 = vmatprep.subr.mxu0 0.0
        %1258 = vmatpush1.msra.mxu0 0.0
        %1259 = vmatprep.subr.mxu0 0.0
        %1260 = vmatpush1.msra.mxu0 0.0
        %1261 = vmatprep.subr.mxu0 0.0
        %1262 = vmatpush1.msra.mxu0 0.0
        %1263 = vmatprep.subr.mxu0 0.0
        %1264 = vmatpush1.msra.mxu0 0.0
        %1265 = vmatprep.subr.mxu0 0.0
        %1266 = vmatpush1.msra.mxu0 0.0
        %1267 = vmatprep.subr.mxu0 0.0
        %1268 = vmatpush1.msra.mxu0 0.0
        %1269 = vmatprep.mubr.f32.mxu0 0.0
        %v1270 = vand.u32 %v390, 4294901760
        %1271 = vmatmul.mubr.f32.gmra.mrb[0].mxu0 %v1270
        %v1272 = vpop.f32.mrb[0].mxu0
        %v1273 = vadd.f32 %v1079, %v1272
        %v1274 = vpop.f32.mrb[0].mxu0
        %1275 = vmatprep.mubr.f32.mxu0 0.0
        %v1276 = vand.u32 %v393, 4294901760
        %1277 = vmatmul.mubr.f32.gmra.mrb[0].mxu0 %v1276
        %v1278 = vpop.f32.mrb[0].mxu0
        %v1279 = vadd.f32 %v1087, %v1278
        %v1280 = vpop.f32.mrb[0].mxu0
        %1281 = vmatprep.mubr.f32.mxu0 0.0
        %v1282 = vand.u32 %v396, 4294901760
        %1283 = vmatmul.mubr.f32.gmra.mrb[0].mxu0 %v1282
        %v1284 = vpop.f32.mrb[0].mxu0
        %v1285 = vadd.f32 %v1095, %v1284
        %v1286 = vpop.f32.mrb[0].mxu0
        %1287 = vmatprep.mubr.f32.mxu0 0.0
        %v1288 = vand.u32 %v399, 4294901760
        %1289 = vmatmul.mubr.f32.gmra.mrb[0].mxu0 %v1288
        %v1290 = vpop.f32.mrb[0].mxu0
        %v1291 = vadd.f32 %v1103, %v1290
        %v1292 = vpop.f32.mrb[0].mxu0
        %1293 = vmatprep.mubr.f32.mxu0 0.0
        %v1294 = vand.u32 %v402, 4294901760
        %1295 = vmatmul.mubr.f32.gmra.mrb[0].mxu0 %v1294
        %v1296 = vpop.f32.mrb[0].mxu0
        %v1297 = vadd.f32 %v1111, %v1296
        %v1298 = vpop.f32.mrb[0].mxu0
        %1299 = vmatprep.mubr.f32.mxu0 0.0
        %v1300 = vand.u32 %v405, 4294901760
        %1301 = vmatmul.mubr.f32.gmra.mrb[0].mxu0 %v1300
        %v1302 = vpop.f32.mrb[0].mxu0
        %v1303 = vadd.f32 %v1119, %v1302
        %v1304 = vpop.f32.mrb[0].mxu0
        %1305 = vmatprep.mubr.f32.mxu0 0.0
        %v1306 = vand.u32 %v408, 4294901760
        %1307 = vmatmul.mubr.f32.gmra.mrb[0].mxu0 %v1306
        %v1308 = vpop.f32.mrb[0].mxu0
        %v1309 = vadd.f32 %v1127, %v1308
        %v1310 = vpop.f32.mrb[0].mxu0
        %1311 = vmatprep.mubr.f32.mxu0 0.0
        %v1312 = vand.u32 %v411, 4294901760
        %1313 = vmatmul.mubr.f32.gmra.mrb[0].mxu0 %v1312
        %v1314 = vpop.f32.mrb[0].mxu0
        %v1315 = vadd.f32 %v1135, %v1314
        %v1316 = vpop.f32.mrb[0].mxu0
        %1317 = vmatprep.mubr.f32.mxu0 0.0
        %v1318 = vand.u32 %v414, 4294901760
        %1319 = vmatmul.mubr.f32.gmra.mrb[0].mxu0 %v1318
        %v1320 = vpop.f32.mrb[0].mxu0
        %v1321 = vadd.f32 %v1143, %v1320
        %v1322 = vpop.f32.mrb[0].mxu0
        %1323 = vmatprep.mubr.f32.mxu0 0.0
        %v1324 = vand.u32 %v417, 4294901760
        %1325 = vmatmul.mubr.f32.gmra.mrb[0].mxu0 %v1324
        %v1326 = vpop.f32.mrb[0].mxu0
        %v1327 = vadd.f32 %v1151, %v1326
        %v1328 = vpop.f32.mrb[0].mxu0
        %1329 = vmatprep.mubr.f32.mxu0 0.0
        %v1330 = vand.u32 %v420, 4294901760
        %1331 = vmatmul.mubr.f32.gmra.mrb[0].mxu0 %v1330
        %v1332 = vpop.f32.mrb[0].mxu0
        %v1333 = vadd.f32 %v1159, %v1332
        %v1334 = vpop.f32.mrb[0].mxu0
        %1335 = vmatprep.mubr.f32.mxu0 0.0
        %v1336 = vand.u32 %v423, 4294901760
        %1337 = vmatmul.mubr.f32.gmra.mrb[0].mxu0 %v1336
        %v1338 = vpop.f32.mrb[0].mxu0
        %v1339 = vadd.f32 %v1167, %v1338
        %v1340 = vpop.f32.mrb[0].mxu0
        %1341 = vmatprep.mubr.f32.mxu0 0.0
        %v1342 = vand.u32 %v426, 4294901760
        %1343 = vmatmul.mubr.f32.gmra.mrb[0].mxu0 %v1342
        %v1344 = vpop.f32.mrb[0].mxu0
        %v1345 = vadd.f32 %v1175, %v1344
        %v1346 = vpop.f32.mrb[0].mxu0
        %1347 = vmatprep.mubr.f32.mxu0 0.0
        %v1348 = vand.u32 %v429, 4294901760
        %1349 = vmatmul.mubr.f32.gmra.mrb[0].mxu0 %v1348
        %v1350 = vpop.f32.mrb[0].mxu0
        %v1351 = vadd.f32 %v1183, %v1350
        %v1352 = vpop.f32.mrb[0].mxu0
        %1353 = vmatprep.mubr.f32.mxu0 0.0
        %v1354 = vand.u32 %v432, 4294901760
        %1355 = vmatmul.mubr.f32.gmra.mrb[0].mxu0 %v1354
        %v1356 = vpop.f32.mrb[0].mxu0
        %v1357 = vadd.f32 %v1191, %v1356
        %v1358 = vpop.f32.mrb[0].mxu0
        %1359 = vmatprep.mubr.f32.mxu0 0.0
        %v1360 = vand.u32 %v435, 4294901760
        %1361 = vmatmul.mubr.f32.gmra.mrb[0].mxu0 %v1360
        %v1362 = vpop.f32.mrb[0].mxu0
        %v1363 = vadd.f32 %v1199, %v1362
        %v1364 = vpop.f32.mrb[0].mxu0
        %1365 = vdwg.mxu0
        %1366 = vmatprep.subr.mxu0 0.0
        %v1367 = vand.u32 %v275, 4294901760
        %1368 = vmatpush1.msra.mxu0 %v1367
        %1369 = vmatprep.subr.mxu0 0.0
        %1370 = vmatpush1.msra.mxu0 0.0
        %1371 = vmatprep.subr.mxu0 0.0
        %1372 = vmatpush1.msra.mxu0 0.0
        %1373 = vmatprep.subr.mxu0 0.0
        %1374 = vmatpush1.msra.mxu0 0.0
        %1375 = vmatprep.subr.mxu0 0.0
        %1376 = vmatpush1.msra.mxu0 0.0
        %1377 = vmatprep.subr.mxu0 0.0
        %1378 = vmatpush1.msra.mxu0 0.0
        %1379 = vmatprep.subr.mxu0 0.0
        %1380 = vmatpush1.msra.mxu0 0.0
        %1381 = vmatprep.subr.mxu0 0.0
        %1382 = vmatpush1.msra.mxu0 0.0
        %1383 = vmatprep.subr.mxu0 0.0
        %1384 = vmatpush1.msra.mxu0 0.0
        %1385 = vmatprep.subr.mxu0 0.0
        %1386 = vmatpush1.msra.mxu0 0.0
        %1387 = vmatprep.subr.mxu0 0.0
        %1388 = vmatpush1.msra.mxu0 0.0
        %1389 = vmatprep.subr.mxu0 0.0
        %1390 = vmatpush1.msra.mxu0 0.0
        %1391 = vmatprep.subr.mxu0 0.0
        %1392 = vmatpush1.msra.mxu0 0.0
        %1393 = vmatprep.subr.mxu0 0.0
        %1394 = vmatpush1.msra.mxu0 0.0
        %1395 = vmatprep.subr.mxu0 0.0
        %1396 = vmatpush1.msra.mxu0 0.0
        %1397 = vmatprep.subr.mxu0 0.0
        %1398 = vmatpush1.msra.mxu0 0.0
        %1399 = vmatprep.subr.mxu0 0.0
        %1400 = vmatpush1.msra.mxu0 0.0
        %1401 = vmatprep.subr.mxu0 0.0
        %1402 = vmatpush1.msra.mxu0 0.0
        %1403 = vmatprep.subr.mxu0 0.0
        %1404 = vmatpush1.msra.mxu0 0.0
        %1405 = vmatprep.subr.mxu0 0.0
        %1406 = vmatpush1.msra.mxu0 0.0
        %1407 = vmatprep.subr.mxu0 0.0
        %1408 = vmatpush1.msra.mxu0 0.0
        %1409 = vmatprep.subr.mxu0 0.0
        %1410 = vmatpush1.msra.mxu0 0.0
        %1411 = vmatprep.subr.mxu0 0.0
        %1412 = vmatpush1.msra.mxu0 0.0
        %1413 = vmatprep.subr.mxu0 0.0
        %1414 = vmatpush1.msra.mxu0 0.0
        %1415 = vmatprep.subr.mxu0 0.0
        %1416 = vmatpush1.msra.mxu0 0.0
        %1417 = vmatprep.subr.mxu0 0.0
        %1418 = vmatpush1.msra.mxu0 0.0
        %1419 = vmatprep.subr.mxu0 0.0
        %1420 = vmatpush1.msra.mxu0 0.0
        %1421 = vmatprep.subr.mxu0 0.0
        %1422 = vmatpush1.msra.mxu0 0.0
        %1423 = vmatprep.subr.mxu0 0.0
        %1424 = vmatpush1.msra.mxu0 0.0
        %1425 = vmatprep.subr.mxu0 0.0
        %1426 = vmatpush1.msra.mxu0 0.0
        %1427 = vmatprep.subr.mxu0 0.0
        %1428 = vmatpush1.msra.mxu0 0.0
        %1429 = vmatprep.subr.mxu0 0.0
        %1430 = vmatpush1.msra.mxu0 0.0
        %1431 = vmatprep.mubr.f32.mxu0 0.0
        %v1432 = vand.u32 %v390, 4294901760
        %1433 = vmatmul.mubr.f32.gmra.mrb[0].mxu0 %v1432
        %v1434 = vpop.f32.mrb[0].mxu0
        %v1435 = vadd.f32 %v1273, %v1434
        %v1436 = vpop.f32.mrb[0].mxu0
        %1437 = vmatprep.mubr.f32.mxu0 0.0
        %v1438 = vand.u32 %v393, 4294901760
        %1439 = vmatmul.mubr.f32.gmra.mrb[0].mxu0 %v1438
        %v1440 = vpop.f32.mrb[0].mxu0
        %v1441 = vadd.f32 %v1279, %v1440
        %v1442 = vpop.f32.mrb[0].mxu0
        %1443 = vmatprep.mubr.f32.mxu0 0.0
        %v1444 = vand.u32 %v396, 4294901760
        %1445 = vmatmul.mubr.f32.gmra.mrb[0].mxu0 %v1444
        %v1446 = vpop.f32.mrb[0].mxu0
        %v1447 = vadd.f32 %v1285, %v1446
        %v1448 = vpop.f32.mrb[0].mxu0
        %1449 = vmatprep.mubr.f32.mxu0 0.0
        %v1450 = vand.u32 %v399, 4294901760
        %1451 = vmatmul.mubr.f32.gmra.mrb[0].mxu0 %v1450
        %v1452 = vpop.f32.mrb[0].mxu0
        %v1453 = vadd.f32 %v1291, %v1452
        %v1454 = vpop.f32.mrb[0].mxu0
        %1455 = vmatprep.mubr.f32.mxu0 0.0
        %v1456 = vand.u32 %v402, 4294901760
        %1457 = vmatmul.mubr.f32.gmra.mrb[0].mxu0 %v1456
        %v1458 = vpop.f32.mrb[0].mxu0
        %v1459 = vadd.f32 %v1297, %v1458
        %v1460 = vpop.f32.mrb[0].mxu0
        %1461 = vmatprep.mubr.f32.mxu0 0.0
        %v1462 = vand.u32 %v405, 4294901760
        %1463 = vmatmul.mubr.f32.gmra.mrb[0].mxu0 %v1462
        %v1464 = vpop.f32.mrb[0].mxu0
        %v1465 = vadd.f32 %v1303, %v1464
        %v1466 = vpop.f32.mrb[0].mxu0
        %1467 = vmatprep.mubr.f32.mxu0 0.0
        %v1468 = vand.u32 %v408, 4294901760
        %1469 = vmatmul.mubr.f32.gmra.mrb[0].mxu0 %v1468
        %v1470 = vpop.f32.mrb[0].mxu0
        %v1471 = vadd.f32 %v1309, %v1470
        %v1472 = vpop.f32.mrb[0].mxu0
        %1473 = vmatprep.mubr.f32.mxu0 0.0
        %v1474 = vand.u32 %v411, 4294901760
        %1475 = vmatmul.mubr.f32.gmra.mrb[0].mxu0 %v1474
        %v1476 = vpop.f32.mrb[0].mxu0
        %v1477 = vadd.f32 %v1315, %v1476
        %v1478 = vpop.f32.mrb[0].mxu0
        %1479 = vmatprep.mubr.f32.mxu0 0.0
        %v1480 = vand.u32 %v414, 4294901760
        %1481 = vmatmul.mubr.f32.gmra.mrb[0].mxu0 %v1480
        %v1482 = vpop.f32.mrb[0].mxu0
        %v1483 = vadd.f32 %v1321, %v1482
        %v1484 = vpop.f32.mrb[0].mxu0
        %1485 = vmatprep.mubr.f32.mxu0 0.0
        %v1486 = vand.u32 %v417, 4294901760
        %1487 = vmatmul.mubr.f32.gmra.mrb[0].mxu0 %v1486
        %v1488 = vpop.f32.mrb[0].mxu0
        %v1489 = vadd.f32 %v1327, %v1488
        %v1490 = vpop.f32.mrb[0].mxu0
        %1491 = vmatprep.mubr.f32.mxu0 0.0
        %v1492 = vand.u32 %v420, 4294901760
        %1493 = vmatmul.mubr.f32.gmra.mrb[0].mxu0 %v1492
        %v1494 = vpop.f32.mrb[0].mxu0
        %v1495 = vadd.f32 %v1333, %v1494
        %v1496 = vpop.f32.mrb[0].mxu0
        %1497 = vmatprep.mubr.f32.mxu0 0.0
        %v1498 = vand.u32 %v423, 4294901760
        %1499 = vmatmul.mubr.f32.gmra.mrb[0].mxu0 %v1498
        %v1500 = vpop.f32.mrb[0].mxu0
        %v1501 = vadd.f32 %v1339, %v1500
        %v1502 = vpop.f32.mrb[0].mxu0
        %1503 = vmatprep.mubr.f32.mxu0 0.0
        %v1504 = vand.u32 %v426, 4294901760
        %1505 = vmatmul.mubr.f32.gmra.mrb[0].mxu0 %v1504
        %v1506 = vpop.f32.mrb[0].mxu0
        %v1507 = vadd.f32 %v1345, %v1506
        %v1508 = vpop.f32.mrb[0].mxu0
        %1509 = vmatprep.mubr.f32.mxu0 0.0
        %v1510 = vand.u32 %v429, 4294901760
        %1511 = vmatmul.mubr.f32.gmra.mrb[0].mxu0 %v1510
        %v1512 = vpop.f32.mrb[0].mxu0
        %v1513 = vadd.f32 %v1351, %v1512
        %v1514 = vpop.f32.mrb[0].mxu0
        %1515 = vmatprep.mubr.f32.mxu0 0.0
        %v1516 = vand.u32 %v432, 4294901760
        %1517 = vmatmul.mubr.f32.gmra.mrb[0].mxu0 %v1516
        %v1518 = vpop.f32.mrb[0].mxu0
        %v1519 = vadd.f32 %v1357, %v1518
        %v1520 = vpop.f32.mrb[0].mxu0
        %1521 = vmatprep.mubr.f32.mxu0 0.0
        %v1522 = vand.u32 %v435, 4294901760
        %1523 = vmatmul.mubr.f32.gmra.mrb[0].mxu0 %v1522
        %v1524 = vpop.f32.mrb[0].mxu0
        %v1525 = vadd.f32 %v1363, %v1524
        %v1526 = vpop.f32.mrb[0].mxu0
        %1527 = vdwg.mxu0
        %v1528 = vmax.f32 %v1435, 0.0
        %v1529 = vmax.f32 %v1441, 0.0
        %v1530 = vmax.f32 %v1447, 0.0
        %v1531 = vmax.f32 %v1453, 0.0
        %v1532 = vmax.f32 %v1459, 0.0
        %v1533 = vmax.f32 %v1465, 0.0
        %v1534 = vmax.f32 %v1471, 0.0
        %v1535 = vmax.f32 %v1477, 0.0
        %v1536 = vmax.f32 %v1483, 0.0
        %v1537 = vmax.f32 %v1489, 0.0
        %v1538 = vmax.f32 %v1495, 0.0
        %v1539 = vmax.f32 %v1501, 0.0
        %v1540 = vmax.f32 %v1507, 0.0
        %v1541 = vmax.f32 %v1513, 0.0
        %v1542 = vmax.f32 %v1519, 0.0
        %v1543 = vmax.f32 %v1525, 0.0
        %v1544 = vld [vmem:[%s3] sm:$0xff]
        %v1545 = vld [vmem:[%s3 + $0x8] sm:$0xff]
        %v1546 = vld [vmem:[%s3 + $0x10] sm:$0xff]
        %v1547 = vld [vmem:[%s3 + $0x18] sm:$0xff]
        %v1548 = vld [vmem:[%s3 + $0x20] sm:$0xff]
        %v1549 = vld [vmem:[%s3 + $0x28] sm:$0xff]
        %v1550 = vld [vmem:[%s3 + $0x30] sm:$0xff]
        %v1551 = vld [vmem:[%s3 + $0x38] sm:$0xff]
        %v1552 = vld [vmem:[%s3 + $0x40] sm:$0xff]
        %v1553 = vld [vmem:[%s3 + $0x48] sm:$0xff]
        %v1554 = vld [vmem:[%s3 + $0x50] sm:$0xff]
        %v1555 = vld [vmem:[%s3 + $0x58] sm:$0xff]
        %v1556 = vld [vmem:[%s3 + $0x60] sm:$0xff]
        %v1557 = vld [vmem:[%s3 + $0x68] sm:$0xff]
        %v1558 = vld [vmem:[%s3 + $0x70] sm:$0xff]
        %v1559 = vld [vmem:[%s3 + $0x78] sm:$0xff]
        %v1560 = vld [vmem:[%s4] sm:$0xff]
        %v1561 = vld [vmem:[%s4 + $0x8] sm:$0xff]
        %v1562 = vld [vmem:[%s4 + $0x10] sm:$0xff]
        %v1563 = vld [vmem:[%s4 + $0x18] sm:$0xff]
        %v1564 = vld [vmem:[%s4 + $0x20] sm:$0xff]
        %v1565 = vld [vmem:[%s4 + $0x28] sm:$0xff]
        %v1566 = vld [vmem:[%s4 + $0x30] sm:$0xff]
        %v1567 = vld [vmem:[%s4 + $0x38] sm:$0xff]
        %v1568 = vld [vmem:[%s4 + $0x40] sm:$0xff]
        %v1569 = vld [vmem:[%s4 + $0x48] sm:$0xff]
        %v1570 = vld [vmem:[%s4 + $0x50] sm:$0xff]
        %v1571 = vld [vmem:[%s4 + $0x58] sm:$0xff]
        %v1572 = vld [vmem:[%s4 + $0x60] sm:$0xff]
        %v1573 = vld [vmem:[%s4 + $0x68] sm:$0xff]
        %v1574 = vld [vmem:[%s4 + $0x70] sm:$0xff]
        %v1575 = vld [vmem:[%s4 + $0x78] sm:$0xff]
        %1577 = vset.pattern.permute.xlu0 0
        %1578 = vperm.xlu0 %1577, %v1560
        %v1579 = vpop.permute.xlu0 %1578
        %1582 = vset.pattern.permute.xlu0 0
        %1583 = vperm.xlu0 %1582, %v1561
        %v1584 = vpop.permute.xlu0 %1583
        %1587 = vset.pattern.permute.xlu0 0
        %1588 = vperm.xlu0 %1587, %v1562
        %v1589 = vpop.permute.xlu0 %1588
        %1592 = vset.pattern.permute.xlu0 0
        %1593 = vperm.xlu0 %1592, %v1563
        %v1594 = vpop.permute.xlu0 %1593
        %1597 = vset.pattern.permute.xlu0 0
        %1598 = vperm.xlu0 %1597, %v1564
        %v1599 = vpop.permute.xlu0 %1598
        %1602 = vset.pattern.permute.xlu0 0
        %1603 = vperm.xlu0 %1602, %v1565
        %v1604 = vpop.permute.xlu0 %1603
        %1607 = vset.pattern.permute.xlu0 0
        %1608 = vperm.xlu0 %1607, %v1566
        %v1609 = vpop.permute.xlu0 %1608
        %1612 = vset.pattern.permute.xlu0 0
        %1613 = vperm.xlu0 %1612, %v1567
        %v1614 = vpop.permute.xlu0 %1613
        %1617 = vset.pattern.permute.xlu0 0
        %1618 = vperm.xlu0 %1617, %v1568
        %v1619 = vpop.permute.xlu0 %1618
        %1622 = vset.pattern.permute.xlu0 0
        %1623 = vperm.xlu0 %1622, %v1569
        %v1624 = vpop.permute.xlu0 %1623
        %1627 = vset.pattern.permute.xlu0 0
        %1628 = vperm.xlu0 %1627, %v1570
        %v1629 = vpop.permute.xlu0 %1628
        %1632 = vset.pattern.permute.xlu0 0
        %1633 = vperm.xlu0 %1632, %v1571
        %v1634 = vpop.permute.xlu0 %1633
        %1637 = vset.pattern.permute.xlu0 0
        %1638 = vperm.xlu0 %1637, %v1572
        %v1639 = vpop.permute.xlu0 %1638
        %1642 = vset.pattern.permute.xlu0 0
        %1643 = vperm.xlu0 %1642, %v1573
        %v1644 = vpop.permute.xlu0 %1643
        %1647 = vset.pattern.permute.xlu0 0
        %1648 = vperm.xlu0 %1647, %v1574
        %v1649 = vpop.permute.xlu0 %1648
        %1652 = vset.pattern.permute.xlu0 0
        %1653 = vperm.xlu0 %1652, %v1575
        %v1654 = vpop.permute.xlu0 %1653
        %1656 = vmatprep.subr.mxu0 0.0
        %v1657 = vand.u32 %v1528, 4294901760
        %1658 = vmatpush1.msra.mxu0 %v1657
        %1659 = vmatprep.subr.mxu0 0.0
        %v1660 = vand.u32 %v1529, 4294901760
        %1661 = vmatpush1.msra.mxu0 %v1660
        %1662 = vmatprep.subr.mxu0 0.0
        %v1663 = vand.u32 %v1530, 4294901760
        %1664 = vmatpush1.msra.mxu0 %v1663
        %1665 = vmatprep.subr.mxu0 0.0
        %v1666 = vand.u32 %v1531, 4294901760
        %1667 = vmatpush1.msra.mxu0 %v1666
        %1668 = vmatprep.subr.mxu0 0.0
        %v1669 = vand.u32 %v1532, 4294901760
        %1670 = vmatpush1.msra.mxu0 %v1669
        %1671 = vmatprep.subr.mxu0 0.0
        %v1672 = vand.u32 %v1533, 4294901760
        %1673 = vmatpush1.msra.mxu0 %v1672
        %1674 = vmatprep.subr.mxu0 0.0
        %v1675 = vand.u32 %v1534, 4294901760
        %1676 = vmatpush1.msra.mxu0 %v1675
        %1677 = vmatprep.subr.mxu0 0.0
        %v1678 = vand.u32 %v1535, 4294901760
        %1679 = vmatpush1.msra.mxu0 %v1678
        %1680 = vmatprep.subr.mxu0 0.0
        %v1681 = vand.u32 %v1536, 4294901760
        %1682 = vmatpush1.msra.mxu0 %v1681
        %1683 = vmatprep.subr.mxu0 0.0
        %v1684 = vand.u32 %v1537, 4294901760
        %1685 = vmatpush1.msra.mxu0 %v1684
        %1686 = vmatprep.subr.mxu0 0.0
        %v1687 = vand.u32 %v1538, 4294901760
        %1688 = vmatpush1.msra.mxu0 %v1687
        %1689 = vmatprep.subr.mxu0 0.0
        %v1690 = vand.u32 %v1539, 4294901760
        %1691 = vmatpush1.msra.mxu0 %v1690
        %1692 = vmatprep.subr.mxu0 0.0
        %v1693 = vand.u32 %v1540, 4294901760
        %1694 = vmatpush1.msra.mxu0 %v1693
        %1695 = vmatprep.subr.mxu0 0.0
        %v1696 = vand.u32 %v1541, 4294901760
        %1697 = vmatpush1.msra.mxu0 %v1696
        %1698 = vmatprep.subr.mxu0 0.0
        %v1699 = vand.u32 %v1542, 4294901760
        %1700 = vmatpush1.msra.mxu0 %v1699
        %1701 = vmatprep.subr.mxu0 0.0
        %v1702 = vand.u32 %v1543, 4294901760
        %1703 = vmatpush1.msra.mxu0 %v1702
        %1704 = vmatprep.subr.mxu0 0.0
        %1705 = vmatpush1.msra.mxu0 0.0
        %1706 = vmatprep.subr.mxu0 0.0
        %1707 = vmatpush1.msra.mxu0 0.0
        %1708 = vmatprep.subr.mxu0 0.0
        %1709 = vmatpush1.msra.mxu0 0.0
        %1710 = vmatprep.subr.mxu0 0.0
        %1711 = vmatpush1.msra.mxu0 0.0
        %1712 = vmatprep.subr.mxu0 0.0
        %1713 = vmatpush1.msra.mxu0 0.0
        %1714 = vmatprep.subr.mxu0 0.0
        %1715 = vmatpush1.msra.mxu0 0.0
        %1716 = vmatprep.subr.mxu0 0.0
        %1717 = vmatpush1.msra.mxu0 0.0
        %1718 = vmatprep.subr.mxu0 0.0
        %1719 = vmatpush1.msra.mxu0 0.0
        %1720 = vmatprep.subr.mxu0 0.0
        %1721 = vmatpush1.msra.mxu0 0.0
        %1722 = vmatprep.subr.mxu0 0.0
        %1723 = vmatpush1.msra.mxu0 0.0
        %1724 = vmatprep.subr.mxu0 0.0
        %1725 = vmatpush1.msra.mxu0 0.0
        %1726 = vmatprep.subr.mxu0 0.0
        %1727 = vmatpush1.msra.mxu0 0.0
        %1728 = vmatprep.subr.mxu0 0.0
        %1729 = vmatpush1.msra.mxu0 0.0
        %1730 = vmatprep.subr.mxu0 0.0
        %1731 = vmatpush1.msra.mxu0 0.0
        %1732 = vmatprep.subr.mxu0 0.0
        %1733 = vmatpush1.msra.mxu0 0.0
        %1734 = vmatprep.subr.mxu0 0.0
        %1735 = vmatpush1.msra.mxu0 0.0
        %1736 = vmatprep.mubr.f32.mxu0 0.0
        %v1737 = vand.u32 %v1544, 4294901760
        %v1738 = vsub.f32 %v1544, %v1737
        %v1739 = vand.u32 %v1738, 4294901760
        %v1740 = vsub.f32 %v1738, %v1739
        %v1741 = vand.u32 %v1740, 4294901760
        %1742 = vmatmul.mubr.f32.gmra.mrb[0].mxu0 %v1741
        %v1743 = vpop.f32.mrb[0].mxu0
        %v1744 = vadd.f32 %v1579, %v1743
        %v1745 = vpop.f32.mrb[0].mxu0
        %1746 = vmatprep.mubr.f32.mxu0 0.0
        %v1747 = vand.u32 %v1545, 4294901760
        %v1748 = vsub.f32 %v1545, %v1747
        %v1749 = vand.u32 %v1748, 4294901760
        %v1750 = vsub.f32 %v1748, %v1749
        %v1751 = vand.u32 %v1750, 4294901760
        %1752 = vmatmul.mubr.f32.gmra.mrb[0].mxu0 %v1751
        %v1753 = vpop.f32.mrb[0].mxu0
        %v1754 = vadd.f32 %v1584, %v1753
        %v1755 = vpop.f32.mrb[0].mxu0
        %1756 = vmatprep.mubr.f32.mxu0 0.0
        %v1757 = vand.u32 %v1546, 4294901760
        %v1758 = vsub.f32 %v1546, %v1757
        %v1759 = vand.u32 %v1758, 4294901760
        %v1760 = vsub.f32 %v1758, %v1759
        %v1761 = vand.u32 %v1760, 4294901760
        %1762 = vmatmul.mubr.f32.gmra.mrb[0].mxu0 %v1761
        %v1763 = vpop.f32.mrb[0].mxu0
        %v1764 = vadd.f32 %v1589, %v1763
        %v1765 = vpop.f32.mrb[0].mxu0
        %1766 = vmatprep.mubr.f32.mxu0 0.0
        %v1767 = vand.u32 %v1547, 4294901760
        %v1768 = vsub.f32 %v1547, %v1767
        %v1769 = vand.u32 %v1768, 4294901760
        %v1770 = vsub.f32 %v1768, %v1769
        %v1771 = vand.u32 %v1770, 4294901760
        %1772 = vmatmul.mubr.f32.gmra.mrb[0].mxu0 %v1771
        %v1773 = vpop.f32.mrb[0].mxu0
        %v1774 = vadd.f32 %v1594, %v1773
        %v1775 = vpop.f32.mrb[0].mxu0
        %1776 = vmatprep.mubr.f32.mxu0 0.0
        %v1777 = vand.u32 %v1548, 4294901760
        %v1778 = vsub.f32 %v1548, %v1777
        %v1779 = vand.u32 %v1778, 4294901760
        %v1780 = vsub.f32 %v1778, %v1779
        %v1781 = vand.u32 %v1780, 4294901760
        %1782 = vmatmul.mubr.f32.gmra.mrb[0].mxu0 %v1781
        %v1783 = vpop.f32.mrb[0].mxu0
        %v1784 = vadd.f32 %v1599, %v1783
        %v1785 = vpop.f32.mrb[0].mxu0
        %1786 = vmatprep.mubr.f32.mxu0 0.0
        %v1787 = vand.u32 %v1549, 4294901760
        %v1788 = vsub.f32 %v1549, %v1787
        %v1789 = vand.u32 %v1788, 4294901760
        %v1790 = vsub.f32 %v1788, %v1789
        %v1791 = vand.u32 %v1790, 4294901760
        %1792 = vmatmul.mubr.f32.gmra.mrb[0].mxu0 %v1791
        %v1793 = vpop.f32.mrb[0].mxu0
        %v1794 = vadd.f32 %v1604, %v1793
        %v1795 = vpop.f32.mrb[0].mxu0
        %1796 = vmatprep.mubr.f32.mxu0 0.0
        %v1797 = vand.u32 %v1550, 4294901760
        %v1798 = vsub.f32 %v1550, %v1797
        %v1799 = vand.u32 %v1798, 4294901760
        %v1800 = vsub.f32 %v1798, %v1799
        %v1801 = vand.u32 %v1800, 4294901760
        %1802 = vmatmul.mubr.f32.gmra.mrb[0].mxu0 %v1801
        %v1803 = vpop.f32.mrb[0].mxu0
        %v1804 = vadd.f32 %v1609, %v1803
        %v1805 = vpop.f32.mrb[0].mxu0
        %1806 = vmatprep.mubr.f32.mxu0 0.0
        %v1807 = vand.u32 %v1551, 4294901760
        %v1808 = vsub.f32 %v1551, %v1807
        %v1809 = vand.u32 %v1808, 4294901760
        %v1810 = vsub.f32 %v1808, %v1809
        %v1811 = vand.u32 %v1810, 4294901760
        %1812 = vmatmul.mubr.f32.gmra.mrb[0].mxu0 %v1811
        %v1813 = vpop.f32.mrb[0].mxu0
        %v1814 = vadd.f32 %v1614, %v1813
        %v1815 = vpop.f32.mrb[0].mxu0
        %1816 = vmatprep.mubr.f32.mxu0 0.0
        %v1817 = vand.u32 %v1552, 4294901760
        %v1818 = vsub.f32 %v1552, %v1817
        %v1819 = vand.u32 %v1818, 4294901760
        %v1820 = vsub.f32 %v1818, %v1819
        %v1821 = vand.u32 %v1820, 4294901760
        %1822 = vmatmul.mubr.f32.gmra.mrb[0].mxu0 %v1821
        %v1823 = vpop.f32.mrb[0].mxu0
        %v1824 = vadd.f32 %v1619, %v1823
        %v1825 = vpop.f32.mrb[0].mxu0
        %1826 = vmatprep.mubr.f32.mxu0 0.0
        %v1827 = vand.u32 %v1553, 4294901760
        %v1828 = vsub.f32 %v1553, %v1827
        %v1829 = vand.u32 %v1828, 4294901760
        %v1830 = vsub.f32 %v1828, %v1829
        %v1831 = vand.u32 %v1830, 4294901760
        %1832 = vmatmul.mubr.f32.gmra.mrb[0].mxu0 %v1831
        %v1833 = vpop.f32.mrb[0].mxu0
        %v1834 = vadd.f32 %v1624, %v1833
        %v1835 = vpop.f32.mrb[0].mxu0
        %1836 = vmatprep.mubr.f32.mxu0 0.0
        %v1837 = vand.u32 %v1554, 4294901760
        %v1838 = vsub.f32 %v1554, %v1837
        %v1839 = vand.u32 %v1838, 4294901760
        %v1840 = vsub.f32 %v1838, %v1839
        %v1841 = vand.u32 %v1840, 4294901760
        %1842 = vmatmul.mubr.f32.gmra.mrb[0].mxu0 %v1841
        %v1843 = vpop.f32.mrb[0].mxu0
        %v1844 = vadd.f32 %v1629, %v1843
        %v1845 = vpop.f32.mrb[0].mxu0
        %1846 = vmatprep.mubr.f32.mxu0 0.0
        %v1847 = vand.u32 %v1555, 4294901760
        %v1848 = vsub.f32 %v1555, %v1847
        %v1849 = vand.u32 %v1848, 4294901760
        %v1850 = vsub.f32 %v1848, %v1849
        %v1851 = vand.u32 %v1850, 4294901760
        %1852 = vmatmul.mubr.f32.gmra.mrb[0].mxu0 %v1851
        %v1853 = vpop.f32.mrb[0].mxu0
        %v1854 = vadd.f32 %v1634, %v1853
        %v1855 = vpop.f32.mrb[0].mxu0
        %1856 = vmatprep.mubr.f32.mxu0 0.0
        %v1857 = vand.u32 %v1556, 4294901760
        %v1858 = vsub.f32 %v1556, %v1857
        %v1859 = vand.u32 %v1858, 4294901760
        %v1860 = vsub.f32 %v1858, %v1859
        %v1861 = vand.u32 %v1860, 4294901760
        %1862 = vmatmul.mubr.f32.gmra.mrb[0].mxu0 %v1861
        %v1863 = vpop.f32.mrb[0].mxu0
        %v1864 = vadd.f32 %v1639, %v1863
        %v1865 = vpop.f32.mrb[0].mxu0
        %1866 = vmatprep.mubr.f32.mxu0 0.0
        %v1867 = vand.u32 %v1557, 4294901760
        %v1868 = vsub.f32 %v1557, %v1867
        %v1869 = vand.u32 %v1868, 4294901760
        %v1870 = vsub.f32 %v1868, %v1869
        %v1871 = vand.u32 %v1870, 4294901760
        %1872 = vmatmul.mubr.f32.gmra.mrb[0].mxu0 %v1871
        %v1873 = vpop.f32.mrb[0].mxu0
        %v1874 = vadd.f32 %v1644, %v1873
        %v1875 = vpop.f32.mrb[0].mxu0
        %1876 = vmatprep.mubr.f32.mxu0 0.0
        %v1877 = vand.u32 %v1558, 4294901760
        %v1878 = vsub.f32 %v1558, %v1877
        %v1879 = vand.u32 %v1878, 4294901760
        %v1880 = vsub.f32 %v1878, %v1879
        %v1881 = vand.u32 %v1880, 4294901760
        %1882 = vmatmul.mubr.f32.gmra.mrb[0].mxu0 %v1881
        %v1883 = vpop.f32.mrb[0].mxu0
        %v1884 = vadd.f32 %v1649, %v1883
        %v1885 = vpop.f32.mrb[0].mxu0
        %1886 = vmatprep.mubr.f32.mxu0 0.0
        %v1887 = vand.u32 %v1559, 4294901760
        %v1888 = vsub.f32 %v1559, %v1887
        %v1889 = vand.u32 %v1888, 4294901760
        %v1890 = vsub.f32 %v1888, %v1889
        %v1891 = vand.u32 %v1890, 4294901760
        %1892 = vmatmul.mubr.f32.gmra.mrb[0].mxu0 %v1891
        %v1893 = vpop.f32.mrb[0].mxu0
        %v1894 = vadd.f32 %v1654, %v1893
        %v1895 = vpop.f32.mrb[0].mxu0
        %1896 = vdwg.mxu0
        %1897 = vmatprep.subr.mxu0 0.0
        %v1898 = vand.u32 %v1528, 4294901760
        %v1899 = vsub.f32 %v1528, %v1898
        %v1900 = vand.u32 %v1899, 4294901760
        %v1901 = vsub.f32 %v1899, %v1900
        %v1902 = vand.u32 %v1901, 4294901760
        %1903 = vmatpush1.msra.mxu0 %v1902
        %1904 = vmatprep.subr.mxu0 0.0
        %v1905 = vand.u32 %v1529, 4294901760
        %v1906 = vsub.f32 %v1529, %v1905
        %v1907 = vand.u32 %v1906, 4294901760
        %v1908 = vsub.f32 %v1906, %v1907
        %v1909 = vand.u32 %v1908, 4294901760
        %1910 = vmatpush1.msra.mxu0 %v1909
        %1911 = vmatprep.subr.mxu0 0.0
        %v1912 = vand.u32 %v1530, 4294901760
        %v1913 = vsub.f32 %v1530, %v1912
        %v1914 = vand.u32 %v1913, 4294901760
        %v1915 = vsub.f32 %v1913, %v1914
        %v1916 = vand.u32 %v1915, 4294901760
        %1917 = vmatpush1.msra.mxu0 %v1916
        %1918 = vmatprep.subr.mxu0 0.0
        %v1919 = vand.u32 %v1531, 4294901760
        %v1920 = vsub.f32 %v1531, %v1919
        %v1921 = vand.u32 %v1920, 4294901760
        %v1922 = vsub.f32 %v1920, %v1921
        %v1923 = vand.u32 %v1922, 4294901760
        %1924 = vmatpush1.msra.mxu0 %v1923
        %1925 = vmatprep.subr.mxu0 0.0
        %v1926 = vand.u32 %v1532, 4294901760
        %v1927 = vsub.f32 %v1532, %v1926
        %v1928 = vand.u32 %v1927, 4294901760
        %v1929 = vsub.f32 %v1927, %v1928
        %v1930 = vand.u32 %v1929, 4294901760
        %1931 = vmatpush1.msra.mxu0 %v1930
        %1932 = vmatprep.subr.mxu0 0.0
        %v1933 = vand.u32 %v1533, 4294901760
        %v1934 = vsub.f32 %v1533, %v1933
        %v1935 = vand.u32 %v1934, 4294901760
        %v1936 = vsub.f32 %v1934, %v1935
        %v1937 = vand.u32 %v1936, 4294901760
        %1938 = vmatpush1.msra.mxu0 %v1937
        %1939 = vmatprep.subr.mxu0 0.0
        %v1940 = vand.u32 %v1534, 4294901760
        %v1941 = vsub.f32 %v1534, %v1940
        %v1942 = vand.u32 %v1941, 4294901760
        %v1943 = vsub.f32 %v1941, %v1942
        %v1944 = vand.u32 %v1943, 4294901760
        %1945 = vmatpush1.msra.mxu0 %v1944
        %1946 = vmatprep.subr.mxu0 0.0
        %v1947 = vand.u32 %v1535, 4294901760
        %v1948 = vsub.f32 %v1535, %v1947
        %v1949 = vand.u32 %v1948, 4294901760
        %v1950 = vsub.f32 %v1948, %v1949
        %v1951 = vand.u32 %v1950, 4294901760
        %1952 = vmatpush1.msra.mxu0 %v1951
        %1953 = vmatprep.subr.mxu0 0.0
        %v1954 = vand.u32 %v1536, 4294901760
        %v1955 = vsub.f32 %v1536, %v1954
        %v1956 = vand.u32 %v1955, 4294901760
        %v1957 = vsub.f32 %v1955, %v1956
        %v1958 = vand.u32 %v1957, 4294901760
        %1959 = vmatpush1.msra.mxu0 %v1958
        %1960 = vmatprep.subr.mxu0 0.0
        %v1961 = vand.u32 %v1537, 4294901760
        %v1962 = vsub.f32 %v1537, %v1961
        %v1963 = vand.u32 %v1962, 4294901760
        %v1964 = vsub.f32 %v1962, %v1963
        %v1965 = vand.u32 %v1964, 4294901760
        %1966 = vmatpush1.msra.mxu0 %v1965
        %1967 = vmatprep.subr.mxu0 0.0
        %v1968 = vand.u32 %v1538, 4294901760
        %v1969 = vsub.f32 %v1538, %v1968
        %v1970 = vand.u32 %v1969, 4294901760
        %v1971 = vsub.f32 %v1969, %v1970
        %v1972 = vand.u32 %v1971, 4294901760
        %1973 = vmatpush1.msra.mxu0 %v1972
        %1974 = vmatprep.subr.mxu0 0.0
        %v1975 = vand.u32 %v1539, 4294901760
        %v1976 = vsub.f32 %v1539, %v1975
        %v1977 = vand.u32 %v1976, 4294901760
        %v1978 = vsub.f32 %v1976, %v1977
        %v1979 = vand.u32 %v1978, 4294901760
        %1980 = vmatpush1.msra.mxu0 %v1979
        %1981 = vmatprep.subr.mxu0 0.0
        %v1982 = vand.u32 %v1540, 4294901760
        %v1983 = vsub.f32 %v1540, %v1982
        %v1984 = vand.u32 %v1983, 4294901760
        %v1985 = vsub.f32 %v1983, %v1984
        %v1986 = vand.u32 %v1985, 4294901760
        %1987 = vmatpush1.msra.mxu0 %v1986
        %1988 = vmatprep.subr.mxu0 0.0
        %v1989 = vand.u32 %v1541, 4294901760
        %v1990 = vsub.f32 %v1541, %v1989
        %v1991 = vand.u32 %v1990, 4294901760
        %v1992 = vsub.f32 %v1990, %v1991
        %v1993 = vand.u32 %v1992, 4294901760
        %1994 = vmatpush1.msra.mxu0 %v1993
        %1995 = vmatprep.subr.mxu0 0.0
        %v1996 = vand.u32 %v1542, 4294901760
        %v1997 = vsub.f32 %v1542, %v1996
        %v1998 = vand.u32 %v1997, 4294901760
        %v1999 = vsub.f32 %v1997, %v1998
        %v2000 = vand.u32 %v1999, 4294901760
        %2001 = vmatpush1.msra.mxu0 %v2000
        %2002 = vmatprep.subr.mxu0 0.0
        %v2003 = vand.u32 %v1543, 4294901760
        %v2004 = vsub.f32 %v1543, %v2003
        %v2005 = vand.u32 %v2004, 4294901760
        %v2006 = vsub.f32 %v2004, %v2005
        %v2007 = vand.u32 %v2006, 4294901760
        %2008 = vmatpush1.msra.mxu0 %v2007
        %2009 = vmatprep.subr.mxu0 0.0
        %2010 = vmatpush1.msra.mxu0 0.0
        %2011 = vmatprep.subr.mxu0 0.0
        %2012 = vmatpush1.msra.mxu0 0.0
        %2013 = vmatprep.subr.mxu0 0.0
        %2014 = vmatpush1.msra.mxu0 0.0
        %2015 = vmatprep.subr.mxu0 0.0
        %2016 = vmatpush1.msra.mxu0 0.0
        %2017 = vmatprep.subr.mxu0 0.0
        %2018 = vmatpush1.msra.mxu0 0.0
        %2019 = vmatprep.subr.mxu0 0.0
        %2020 = vmatpush1.msra.mxu0 0.0
        %2021 = vmatprep.subr.mxu0 0.0
        %2022 = vmatpush1.msra.mxu0 0.0
        %2023 = vmatprep.subr.mxu0 0.0
        %2024 = vmatpush1.msra.mxu0 0.0
        %2025 = vmatprep.subr.mxu0 0.0
        %2026 = vmatpush1.msra.mxu0 0.0
        %2027 = vmatprep.subr.mxu0 0.0
        %2028 = vmatpush1.msra.mxu0 0.0
        %2029 = vmatprep.subr.mxu0 0.0
        %2030 = vmatpush1.msra.mxu0 0.0
        %2031 = vmatprep.subr.mxu0 0.0
        %2032 = vmatpush1.msra.mxu0 0.0
        %2033 = vmatprep.subr.mxu0 0.0
        %2034 = vmatpush1.msra.mxu0 0.0
        %2035 = vmatprep.subr.mxu0 0.0
        %2036 = vmatpush1.msra.mxu0 0.0
        %2037 = vmatprep.subr.mxu0 0.0
        %2038 = vmatpush1.msra.mxu0 0.0
        %2039 = vmatprep.subr.mxu0 0.0
        %2040 = vmatpush1.msra.mxu0 0.0
        %2041 = vmatprep.mubr.f32.mxu0 0.0
        %v2042 = vand.u32 %v1544, 4294901760
        %2043 = vmatmul.mubr.f32.gmra.mrb[0].mxu0 %v2042
        %v2044 = vpop.f32.mrb[0].mxu0
        %v2045 = vadd.f32 %v1744, %v2044
        %v2046 = vpop.f32.mrb[0].mxu0
        %2047 = vmatprep.mubr.f32.mxu0 0.0
        %v2048 = vand.u32 %v1545, 4294901760
        %2049 = vmatmul.mubr.f32.gmra.mrb[0].mxu0 %v2048
        %v2050 = vpop.f32.mrb[0].mxu0
        %v2051 = vadd.f32 %v1754, %v2050
        %v2052 = vpop.f32.mrb[0].mxu0
        %2053 = vmatprep.mubr.f32.mxu0 0.0
        %v2054 = vand.u32 %v1546, 4294901760
        %2055 = vmatmul.mubr.f32.gmra.mrb[0].mxu0 %v2054
        %v2056 = vpop.f32.mrb[0].mxu0
        %v2057 = vadd.f32 %v1764, %v2056
        %v2058 = vpop.f32.mrb[0].mxu0
        %2059 = vmatprep.mubr.f32.mxu0 0.0
        %v2060 = vand.u32 %v1547, 4294901760
        %2061 = vmatmul.mubr.f32.gmra.mrb[0].mxu0 %v2060
        %v2062 = vpop.f32.mrb[0].mxu0
        %v2063 = vadd.f32 %v1774, %v2062
        %v2064 = vpop.f32.mrb[0].mxu0
        %2065 = vmatprep.mubr.f32.mxu0 0.0
        %v2066 = vand.u32 %v1548, 4294901760
        %2067 = vmatmul.mubr.f32.gmra.mrb[0].mxu0 %v2066
        %v2068 = vpop.f32.mrb[0].mxu0
        %v2069 = vadd.f32 %v1784, %v2068
        %v2070 = vpop.f32.mrb[0].mxu0
        %2071 = vmatprep.mubr.f32.mxu0 0.0
        %v2072 = vand.u32 %v1549, 4294901760
        %2073 = vmatmul.mubr.f32.gmra.mrb[0].mxu0 %v2072
        %v2074 = vpop.f32.mrb[0].mxu0
        %v2075 = vadd.f32 %v1794, %v2074
        %v2076 = vpop.f32.mrb[0].mxu0
        %2077 = vmatprep.mubr.f32.mxu0 0.0
        %v2078 = vand.u32 %v1550, 4294901760
        %2079 = vmatmul.mubr.f32.gmra.mrb[0].mxu0 %v2078
        %v2080 = vpop.f32.mrb[0].mxu0
        %v2081 = vadd.f32 %v1804, %v2080
        %v2082 = vpop.f32.mrb[0].mxu0
        %2083 = vmatprep.mubr.f32.mxu0 0.0
        %v2084 = vand.u32 %v1551, 4294901760
        %2085 = vmatmul.mubr.f32.gmra.mrb[0].mxu0 %v2084
        %v2086 = vpop.f32.mrb[0].mxu0
        %v2087 = vadd.f32 %v1814, %v2086
        %v2088 = vpop.f32.mrb[0].mxu0
        %2089 = vmatprep.mubr.f32.mxu0 0.0
        %v2090 = vand.u32 %v1552, 4294901760
        %2091 = vmatmul.mubr.f32.gmra.mrb[0].mxu0 %v2090
        %v2092 = vpop.f32.mrb[0].mxu0
        %v2093 = vadd.f32 %v1824, %v2092
        %v2094 = vpop.f32.mrb[0].mxu0
        %2095 = vmatprep.mubr.f32.mxu0 0.0
        %v2096 = vand.u32 %v1553, 4294901760
        %2097 = vmatmul.mubr.f32.gmra.mrb[0].mxu0 %v2096
        %v2098 = vpop.f32.mrb[0].mxu0
        %v2099 = vadd.f32 %v1834, %v2098
        %v2100 = vpop.f32.mrb[0].mxu0
        %2101 = vmatprep.mubr.f32.mxu0 0.0
        %v2102 = vand.u32 %v1554, 4294901760
        %2103 = vmatmul.mubr.f32.gmra.mrb[0].mxu0 %v2102
        %v2104 = vpop.f32.mrb[0].mxu0
        %v2105 = vadd.f32 %v1844, %v2104
        %v2106 = vpop.f32.mrb[0].mxu0
        %2107 = vmatprep.mubr.f32.mxu0 0.0
        %v2108 = vand.u32 %v1555, 4294901760
        %2109 = vmatmul.mubr.f32.gmra.mrb[0].mxu0 %v2108
        %v2110 = vpop.f32.mrb[0].mxu0
        %v2111 = vadd.f32 %v1854, %v2110
        %v2112 = vpop.f32.mrb[0].mxu0
        %2113 = vmatprep.mubr.f32.mxu0 0.0
        %v2114 = vand.u32 %v1556, 4294901760
        %2115 = vmatmul.mubr.f32.gmra.mrb[0].mxu0 %v2114
        %v2116 = vpop.f32.mrb[0].mxu0
        %v2117 = vadd.f32 %v1864, %v2116
        %v2118 = vpop.f32.mrb[0].mxu0
        %2119 = vmatprep.mubr.f32.mxu0 0.0
        %v2120 = vand.u32 %v1557, 4294901760
        %2121 = vmatmul.mubr.f32.gmra.mrb[0].mxu0 %v2120
        %v2122 = vpop.f32.mrb[0].mxu0
        %v2123 = vadd.f32 %v1874, %v2122
        %v2124 = vpop.f32.mrb[0].mxu0
        %2125 = vmatprep.mubr.f32.mxu0 0.0
        %v2126 = vand.u32 %v1558, 4294901760
        %2127 = vmatmul.mubr.f32.gmra.mrb[0].mxu0 %v2126
        %v2128 = vpop.f32.mrb[0].mxu0
        %v2129 = vadd.f32 %v1884, %v2128
        %v2130 = vpop.f32.mrb[0].mxu0
        %2131 = vmatprep.mubr.f32.mxu0 0.0
        %v2132 = vand.u32 %v1559, 4294901760
        %2133 = vmatmul.mubr.f32.gmra.mrb[0].mxu0 %v2132
        %v2134 = vpop.f32.mrb[0].mxu0
        %v2135 = vadd.f32 %v1894, %v2134
        %v2136 = vpop.f32.mrb[0].mxu0
        %2137 = vdwg.mxu0
        %2138 = vmatprep.subr.mxu0 0.0
        %v2139 = vand.u32 %v1528, 4294901760
        %v2140 = vsub.f32 %v1528, %v2139
        %2141 = vmatpush1.msra.mxu0 %v2140
        %2142 = vmatprep.subr.mxu0 0.0
        %v2143 = vand.u32 %v1529, 4294901760
        %v2144 = vsub.f32 %v1529, %v2143
        %2145 = vmatpush1.msra.mxu0 %v2144
        %2146 = vmatprep.subr.mxu0 0.0
        %v2147 = vand.u32 %v1530, 4294901760
        %v2148 = vsub.f32 %v1530, %v2147
        %2149 = vmatpush1.msra.mxu0 %v2148
        %2150 = vmatprep.subr.mxu0 0.0
        %v2151 = vand.u32 %v1531, 4294901760
        %v2152 = vsub.f32 %v1531, %v2151
        %2153 = vmatpush1.msra.mxu0 %v2152
        %2154 = vmatprep.subr.mxu0 0.0
        %v2155 = vand.u32 %v1532, 4294901760
        %v2156 = vsub.f32 %v1532, %v2155
        %2157 = vmatpush1.msra.mxu0 %v2156
        %2158 = vmatprep.subr.mxu0 0.0
        %v2159 = vand.u32 %v1533, 4294901760
        %v2160 = vsub.f32 %v1533, %v2159
        %2161 = vmatpush1.msra.mxu0 %v2160
        %2162 = vmatprep.subr.mxu0 0.0
        %v2163 = vand.u32 %v1534, 4294901760
        %v2164 = vsub.f32 %v1534, %v2163
        %2165 = vmatpush1.msra.mxu0 %v2164
        %2166 = vmatprep.subr.mxu0 0.0
        %v2167 = vand.u32 %v1535, 4294901760
        %v2168 = vsub.f32 %v1535, %v2167
        %2169 = vmatpush1.msra.mxu0 %v2168
        %2170 = vmatprep.subr.mxu0 0.0
        %v2171 = vand.u32 %v1536, 4294901760
        %v2172 = vsub.f32 %v1536, %v2171
        %2173 = vmatpush1.msra.mxu0 %v2172
        %2174 = vmatprep.subr.mxu0 0.0
        %v2175 = vand.u32 %v1537, 4294901760
        %v2176 = vsub.f32 %v1537, %v2175
        %2177 = vmatpush1.msra.mxu0 %v2176
        %2178 = vmatprep.subr.mxu0 0.0
        %v2179 = vand.u32 %v1538, 4294901760
        %v2180 = vsub.f32 %v1538, %v2179
        %2181 = vmatpush1.msra.mxu0 %v2180
        %2182 = vmatprep.subr.mxu0 0.0
        %v2183 = vand.u32 %v1539, 4294901760
        %v2184 = vsub.f32 %v1539, %v2183
        %2185 = vmatpush1.msra.mxu0 %v2184
        %2186 = vmatprep.subr.mxu0 0.0
        %v2187 = vand.u32 %v1540, 4294901760
        %v2188 = vsub.f32 %v1540, %v2187
        %2189 = vmatpush1.msra.mxu0 %v2188
        %2190 = vmatprep.subr.mxu0 0.0
        %v2191 = vand.u32 %v1541, 4294901760
        %v2192 = vsub.f32 %v1541, %v2191
        %2193 = vmatpush1.msra.mxu0 %v2192
        %2194 = vmatprep.subr.mxu0 0.0
        %v2195 = vand.u32 %v1542, 4294901760
        %v2196 = vsub.f32 %v1542, %v2195
        %2197 = vmatpush1.msra.mxu0 %v2196
        %2198 = vmatprep.subr.mxu0 0.0
        %v2199 = vand.u32 %v1543, 4294901760
        %v2200 = vsub.f32 %v1543, %v2199
        %2201 = vmatpush1.msra.mxu0 %v2200
        %2202 = vmatprep.subr.mxu0 0.0
        %2203 = vmatpush1.msra.mxu0 0.0
        %2204 = vmatprep.subr.mxu0 0.0
        %2205 = vmatpush1.msra.mxu0 0.0
        %2206 = vmatprep.subr.mxu0 0.0
        %2207 = vmatpush1.msra.mxu0 0.0
        %2208 = vmatprep.subr.mxu0 0.0
        %2209 = vmatpush1.msra.mxu0 0.0
        %2210 = vmatprep.subr.mxu0 0.0
        %2211 = vmatpush1.msra.mxu0 0.0
        %2212 = vmatprep.subr.mxu0 0.0
        %2213 = vmatpush1.msra.mxu0 0.0
        %2214 = vmatprep.subr.mxu0 0.0
        %2215 = vmatpush1.msra.mxu0 0.0
        %2216 = vmatprep.subr.mxu0 0.0
        %2217 = vmatpush1.msra.mxu0 0.0
        %2218 = vmatprep.subr.mxu0 0.0
        %2219 = vmatpush1.msra.mxu0 0.0
        %2220 = vmatprep.subr.mxu0 0.0
        %2221 = vmatpush1.msra.mxu0 0.0
        %2222 = vmatprep.subr.mxu0 0.0
        %2223 = vmatpush1.msra.mxu0 0.0
        %2224 = vmatprep.subr.mxu0 0.0
        %2225 = vmatpush1.msra.mxu0 0.0
        %2226 = vmatprep.subr.mxu0 0.0
        %2227 = vmatpush1.msra.mxu0 0.0
        %2228 = vmatprep.subr.mxu0 0.0
        %2229 = vmatpush1.msra.mxu0 0.0
        %2230 = vmatprep.subr.mxu0 0.0
        %2231 = vmatpush1.msra.mxu0 0.0
        %2232 = vmatprep.subr.mxu0 0.0
        %2233 = vmatpush1.msra.mxu0 0.0
        %2234 = vmatprep.mubr.f32.mxu0 0.0
        %v2235 = vand.u32 %v1544, 4294901760
        %v2236 = vsub.f32 %v1544, %v2235
        %2237 = vmatmul.mubr.f32.gmra.mrb[0].mxu0 %v2236
        %v2238 = vpop.f32.mrb[0].mxu0
        %v2239 = vadd.f32 %v2045, %v2238
        %v2240 = vpop.f32.mrb[0].mxu0
        %2241 = vmatprep.mubr.f32.mxu0 0.0
        %v2242 = vand.u32 %v1545, 4294901760
        %v2243 = vsub.f32 %v1545, %v2242
        %2244 = vmatmul.mubr.f32.gmra.mrb[0].mxu0 %v2243
        %v2245 = vpop.f32.mrb[0].mxu0
        %v2246 = vadd.f32 %v2051, %v2245
        %v2247 = vpop.f32.mrb[0].mxu0
        %2248 = vmatprep.mubr.f32.mxu0 0.0
        %v2249 = vand.u32 %v1546, 4294901760
        %v2250 = vsub.f32 %v1546, %v2249
        %2251 = vmatmul.mubr.f32.gmra.mrb[0].mxu0 %v2250
        %v2252 = vpop.f32.mrb[0].mxu0
        %v2253 = vadd.f32 %v2057, %v2252
        %v2254 = vpop.f32.mrb[0].mxu0
        %2255 = vmatprep.mubr.f32.mxu0 0.0
        %v2256 = vand.u32 %v1547, 4294901760
        %v2257 = vsub.f32 %v1547, %v2256
        %2258 = vmatmul.mubr.f32.gmra.mrb[0].mxu0 %v2257
        %v2259 = vpop.f32.mrb[0].mxu0
        %v2260 = vadd.f32 %v2063, %v2259
        %v2261 = vpop.f32.mrb[0].mxu0
        %2262 = vmatprep.mubr.f32.mxu0 0.0
        %v2263 = vand.u32 %v1548, 4294901760
        %v2264 = vsub.f32 %v1548, %v2263
        %2265 = vmatmul.mubr.f32.gmra.mrb[0].mxu0 %v2264
        %v2266 = vpop.f32.mrb[0].mxu0
        %v2267 = vadd.f32 %v2069, %v2266
        %v2268 = vpop.f32.mrb[0].mxu0
        %2269 = vmatprep.mubr.f32.mxu0 0.0
        %v2270 = vand.u32 %v1549, 4294901760
        %v2271 = vsub.f32 %v1549, %v2270
        %2272 = vmatmul.mubr.f32.gmra.mrb[0].mxu0 %v2271
        %v2273 = vpop.f32.mrb[0].mxu0
        %v2274 = vadd.f32 %v2075, %v2273
        %v2275 = vpop.f32.mrb[0].mxu0
        %2276 = vmatprep.mubr.f32.mxu0 0.0
        %v2277 = vand.u32 %v1550, 4294901760
        %v2278 = vsub.f32 %v1550, %v2277
        %2279 = vmatmul.mubr.f32.gmra.mrb[0].mxu0 %v2278
        %v2280 = vpop.f32.mrb[0].mxu0
        %v2281 = vadd.f32 %v2081, %v2280
        %v2282 = vpop.f32.mrb[0].mxu0
        %2283 = vmatprep.mubr.f32.mxu0 0.0
        %v2284 = vand.u32 %v1551, 4294901760
        %v2285 = vsub.f32 %v1551, %v2284
        %2286 = vmatmul.mubr.f32.gmra.mrb[0].mxu0 %v2285
        %v2287 = vpop.f32.mrb[0].mxu0
        %v2288 = vadd.f32 %v2087, %v2287
        %v2289 = vpop.f32.mrb[0].mxu0
        %2290 = vmatprep.mubr.f32.mxu0 0.0
        %v2291 = vand.u32 %v1552, 4294901760
        %v2292 = vsub.f32 %v1552, %v2291
        %2293 = vmatmul.mubr.f32.gmra.mrb[0].mxu0 %v2292
        %v2294 = vpop.f32.mrb[0].mxu0
        %v2295 = vadd.f32 %v2093, %v2294
        %v2296 = vpop.f32.mrb[0].mxu0
        %2297 = vmatprep.mubr.f32.mxu0 0.0
        %v2298 = vand.u32 %v1553, 4294901760
        %v2299 = vsub.f32 %v1553, %v2298
        %2300 = vmatmul.mubr.f32.gmra.mrb[0].mxu0 %v2299
        %v2301 = vpop.f32.mrb[0].mxu0
        %v2302 = vadd.f32 %v2099, %v2301
        %v2303 = vpop.f32.mrb[0].mxu0
        %2304 = vmatprep.mubr.f32.mxu0 0.0
        %v2305 = vand.u32 %v1554, 4294901760
        %v2306 = vsub.f32 %v1554, %v2305
        %2307 = vmatmul.mubr.f32.gmra.mrb[0].mxu0 %v2306
        %v2308 = vpop.f32.mrb[0].mxu0
        %v2309 = vadd.f32 %v2105, %v2308
        %v2310 = vpop.f32.mrb[0].mxu0
        %2311 = vmatprep.mubr.f32.mxu0 0.0
        %v2312 = vand.u32 %v1555, 4294901760
        %v2313 = vsub.f32 %v1555, %v2312
        %2314 = vmatmul.mubr.f32.gmra.mrb[0].mxu0 %v2313
        %v2315 = vpop.f32.mrb[0].mxu0
        %v2316 = vadd.f32 %v2111, %v2315
        %v2317 = vpop.f32.mrb[0].mxu0
        %2318 = vmatprep.mubr.f32.mxu0 0.0
        %v2319 = vand.u32 %v1556, 4294901760
        %v2320 = vsub.f32 %v1556, %v2319
        %2321 = vmatmul.mubr.f32.gmra.mrb[0].mxu0 %v2320
        %v2322 = vpop.f32.mrb[0].mxu0
        %v2323 = vadd.f32 %v2117, %v2322
        %v2324 = vpop.f32.mrb[0].mxu0
        %2325 = vmatprep.mubr.f32.mxu0 0.0
        %v2326 = vand.u32 %v1557, 4294901760
        %v2327 = vsub.f32 %v1557, %v2326
        %2328 = vmatmul.mubr.f32.gmra.mrb[0].mxu0 %v2327
        %v2329 = vpop.f32.mrb[0].mxu0
        %v2330 = vadd.f32 %v2123, %v2329
        %v2331 = vpop.f32.mrb[0].mxu0
        %2332 = vmatprep.mubr.f32.mxu0 0.0
        %v2333 = vand.u32 %v1558, 4294901760
        %v2334 = vsub.f32 %v1558, %v2333
        %2335 = vmatmul.mubr.f32.gmra.mrb[0].mxu0 %v2334
        %v2336 = vpop.f32.mrb[0].mxu0
        %v2337 = vadd.f32 %v2129, %v2336
        %v2338 = vpop.f32.mrb[0].mxu0
        %2339 = vmatprep.mubr.f32.mxu0 0.0
        %v2340 = vand.u32 %v1559, 4294901760
        %v2341 = vsub.f32 %v1559, %v2340
        %2342 = vmatmul.mubr.f32.gmra.mrb[0].mxu0 %v2341
        %v2343 = vpop.f32.mrb[0].mxu0
        %v2344 = vadd.f32 %v2135, %v2343
        %v2345 = vpop.f32.mrb[0].mxu0
        %2346 = vdwg.mxu0
        %2347 = vmatprep.subr.mxu0 0.0
        %v2348 = vand.u32 %v1528, 4294901760
        %2349 = vmatpush1.msra.mxu0 %v2348
        %2350 = vmatprep.subr.mxu0 0.0
        %v2351 = vand.u32 %v1529, 4294901760
        %2352 = vmatpush1.msra.mxu0 %v2351
        %2353 = vmatprep.subr.mxu0 0.0
        %v2354 = vand.u32 %v1530, 4294901760
        %2355 = vmatpush1.msra.mxu0 %v2354
        %2356 = vmatprep.subr.mxu0 0.0
        %v2357 = vand.u32 %v1531, 4294901760
        %2358 = vmatpush1.msra.mxu0 %v2357
        %2359 = vmatprep.subr.mxu0 0.0
        %v2360 = vand.u32 %v1532, 4294901760
        %2361 = vmatpush1.msra.mxu0 %v2360
        %2362 = vmatprep.subr.mxu0 0.0
        %v2363 = vand.u32 %v1533, 4294901760
        %2364 = vmatpush1.msra.mxu0 %v2363
        %2365 = vmatprep.subr.mxu0 0.0
        %v2366 = vand.u32 %v1534, 4294901760
        %2367 = vmatpush1.msra.mxu0 %v2366
        %2368 = vmatprep.subr.mxu0 0.0
        %v2369 = vand.u32 %v1535, 4294901760
        %2370 = vmatpush1.msra.mxu0 %v2369
        %2371 = vmatprep.subr.mxu0 0.0
        %v2372 = vand.u32 %v1536, 4294901760
        %2373 = vmatpush1.msra.mxu0 %v2372
        %2374 = vmatprep.subr.mxu0 0.0
        %v2375 = vand.u32 %v1537, 4294901760
        %2376 = vmatpush1.msra.mxu0 %v2375
        %2377 = vmatprep.subr.mxu0 0.0
        %v2378 = vand.u32 %v1538, 4294901760
        %2379 = vmatpush1.msra.mxu0 %v2378
        %2380 = vmatprep.subr.mxu0 0.0
        %v2381 = vand.u32 %v1539, 4294901760
        %2382 = vmatpush1.msra.mxu0 %v2381
        %2383 = vmatprep.subr.mxu0 0.0
        %v2384 = vand.u32 %v1540, 4294901760
        %2385 = vmatpush1.msra.mxu0 %v2384
        %2386 = vmatprep.subr.mxu0 0.0
        %v2387 = vand.u32 %v1541, 4294901760
        %2388 = vmatpush1.msra.mxu0 %v2387
        %2389 = vmatprep.subr.mxu0 0.0
        %v2390 = vand.u32 %v1542, 4294901760
        %2391 = vmatpush1.msra.mxu0 %v2390
        %2392 = vmatprep.subr.mxu0 0.0
        %v2393 = vand.u32 %v1543, 4294901760
        %2394 = vmatpush1.msra.mxu0 %v2393
        %2395 = vmatprep.subr.mxu0 0.0
        %2396 = vmatpush1.msra.mxu0 0.0
        %2397 = vmatprep.subr.mxu0 0.0
        %2398 = vmatpush1.msra.mxu0 0.0
        %2399 = vmatprep.subr.mxu0 0.0
        %2400 = vmatpush1.msra.mxu0 0.0
        %2401 = vmatprep.subr.mxu0 0.0
        %2402 = vmatpush1.msra.mxu0 0.0
        %2403 = vmatprep.subr.mxu0 0.0
        %2404 = vmatpush1.msra.mxu0 0.0
        %2405 = vmatprep.subr.mxu0 0.0
        %2406 = vmatpush1.msra.mxu0 0.0
        %2407 = vmatprep.subr.mxu0 0.0
        %2408 = vmatpush1.msra.mxu0 0.0
        %2409 = vmatprep.subr.mxu0 0.0
        %2410 = vmatpush1.msra.mxu0 0.0
        %2411 = vmatprep.subr.mxu0 0.0
        %2412 = vmatpush1.msra.mxu0 0.0
        %2413 = vmatprep.subr.mxu0 0.0
        %2414 = vmatpush1.msra.mxu0 0.0
        %2415 = vmatprep.subr.mxu0 0.0
        %2416 = vmatpush1.msra.mxu0 0.0
        %2417 = vmatprep.subr.mxu0 0.0
        %2418 = vmatpush1.msra.mxu0 0.0
        %2419 = vmatprep.subr.mxu0 0.0
        %2420 = vmatpush1.msra.mxu0 0.0
        %2421 = vmatprep.subr.mxu0 0.0
        %2422 = vmatpush1.msra.mxu0 0.0
        %2423 = vmatprep.subr.mxu0 0.0
        %2424 = vmatpush1.msra.mxu0 0.0
        %2425 = vmatprep.subr.mxu0 0.0
        %2426 = vmatpush1.msra.mxu0 0.0
        %2427 = vmatprep.mubr.f32.mxu0 0.0
        %v2428 = vand.u32 %v1544, 4294901760
        %v2429 = vsub.f32 %v1544, %v2428
        %v2430 = vand.u32 %v2429, 4294901760
        %2431 = vmatmul.mubr.f32.gmra.mrb[0].mxu0 %v2430
        %v2432 = vpop.f32.mrb[0].mxu0
        %v2433 = vadd.f32 %v2239, %v2432
        %v2434 = vpop.f32.mrb[0].mxu0
        %2435 = vmatprep.mubr.f32.mxu0 0.0
        %v2436 = vand.u32 %v1545, 4294901760
        %v2437 = vsub.f32 %v1545, %v2436
        %v2438 = vand.u32 %v2437, 4294901760
        %2439 = vmatmul.mubr.f32.gmra.mrb[0].mxu0 %v2438
        %v2440 = vpop.f32.mrb[0].mxu0
        %v2441 = vadd.f32 %v2246, %v2440
        %v2442 = vpop.f32.mrb[0].mxu0
        %2443 = vmatprep.mubr.f32.mxu0 0.0
        %v2444 = vand.u32 %v1546, 4294901760
        %v2445 = vsub.f32 %v1546, %v2444
        %v2446 = vand.u32 %v2445, 4294901760
        %2447 = vmatmul.mubr.f32.gmra.mrb[0].mxu0 %v2446
        %v2448 = vpop.f32.mrb[0].mxu0
        %v2449 = vadd.f32 %v2253, %v2448
        %v2450 = vpop.f32.mrb[0].mxu0
        %2451 = vmatprep.mubr.f32.mxu0 0.0
        %v2452 = vand.u32 %v1547, 4294901760
        %v2453 = vsub.f32 %v1547, %v2452
        %v2454 = vand.u32 %v2453, 4294901760
        %2455 = vmatmul.mubr.f32.gmra.mrb[0].mxu0 %v2454
        %v2456 = vpop.f32.mrb[0].mxu0
        %v2457 = vadd.f32 %v2260, %v2456
        %v2458 = vpop.f32.mrb[0].mxu0
        %2459 = vmatprep.mubr.f32.mxu0 0.0
        %v2460 = vand.u32 %v1548, 4294901760
        %v2461 = vsub.f32 %v1548, %v2460
        %v2462 = vand.u32 %v2461, 4294901760
        %2463 = vmatmul.mubr.f32.gmra.mrb[0].mxu0 %v2462
        %v2464 = vpop.f32.mrb[0].mxu0
        %v2465 = vadd.f32 %v2267, %v2464
        %v2466 = vpop.f32.mrb[0].mxu0
        %2467 = vmatprep.mubr.f32.mxu0 0.0
        %v2468 = vand.u32 %v1549, 4294901760
        %v2469 = vsub.f32 %v1549, %v2468
        %v2470 = vand.u32 %v2469, 4294901760
        %2471 = vmatmul.mubr.f32.gmra.mrb[0].mxu0 %v2470
        %v2472 = vpop.f32.mrb[0].mxu0
        %v2473 = vadd.f32 %v2274, %v2472
        %v2474 = vpop.f32.mrb[0].mxu0
        %2475 = vmatprep.mubr.f32.mxu0 0.0
        %v2476 = vand.u32 %v1550, 4294901760
        %v2477 = vsub.f32 %v1550, %v2476
        %v2478 = vand.u32 %v2477, 4294901760
        %2479 = vmatmul.mubr.f32.gmra.mrb[0].mxu0 %v2478
        %v2480 = vpop.f32.mrb[0].mxu0
        %v2481 = vadd.f32 %v2281, %v2480
        %v2482 = vpop.f32.mrb[0].mxu0
        %2483 = vmatprep.mubr.f32.mxu0 0.0
        %v2484 = vand.u32 %v1551, 4294901760
        %v2485 = vsub.f32 %v1551, %v2484
        %v2486 = vand.u32 %v2485, 4294901760
        %2487 = vmatmul.mubr.f32.gmra.mrb[0].mxu0 %v2486
        %v2488 = vpop.f32.mrb[0].mxu0
        %v2489 = vadd.f32 %v2288, %v2488
        %v2490 = vpop.f32.mrb[0].mxu0
        %2491 = vmatprep.mubr.f32.mxu0 0.0
        %v2492 = vand.u32 %v1552, 4294901760
        %v2493 = vsub.f32 %v1552, %v2492
        %v2494 = vand.u32 %v2493, 4294901760
        %2495 = vmatmul.mubr.f32.gmra.mrb[0].mxu0 %v2494
        %v2496 = vpop.f32.mrb[0].mxu0
        %v2497 = vadd.f32 %v2295, %v2496
        %v2498 = vpop.f32.mrb[0].mxu0
        %2499 = vmatprep.mubr.f32.mxu0 0.0
        %v2500 = vand.u32 %v1553, 4294901760
        %v2501 = vsub.f32 %v1553, %v2500
        %v2502 = vand.u32 %v2501, 4294901760
        %2503 = vmatmul.mubr.f32.gmra.mrb[0].mxu0 %v2502
        %v2504 = vpop.f32.mrb[0].mxu0
        %v2505 = vadd.f32 %v2302, %v2504
        %v2506 = vpop.f32.mrb[0].mxu0
        %2507 = vmatprep.mubr.f32.mxu0 0.0
        %v2508 = vand.u32 %v1554, 4294901760
        %v2509 = vsub.f32 %v1554, %v2508
        %v2510 = vand.u32 %v2509, 4294901760
        %2511 = vmatmul.mubr.f32.gmra.mrb[0].mxu0 %v2510
        %v2512 = vpop.f32.mrb[0].mxu0
        %v2513 = vadd.f32 %v2309, %v2512
        %v2514 = vpop.f32.mrb[0].mxu0
        %2515 = vmatprep.mubr.f32.mxu0 0.0
        %v2516 = vand.u32 %v1555, 4294901760
        %v2517 = vsub.f32 %v1555, %v2516
        %v2518 = vand.u32 %v2517, 4294901760
        %2519 = vmatmul.mubr.f32.gmra.mrb[0].mxu0 %v2518
        %v2520 = vpop.f32.mrb[0].mxu0
        %v2521 = vadd.f32 %v2316, %v2520
        %v2522 = vpop.f32.mrb[0].mxu0
        %2523 = vmatprep.mubr.f32.mxu0 0.0
        %v2524 = vand.u32 %v1556, 4294901760
        %v2525 = vsub.f32 %v1556, %v2524
        %v2526 = vand.u32 %v2525, 4294901760
        %2527 = vmatmul.mubr.f32.gmra.mrb[0].mxu0 %v2526
        %v2528 = vpop.f32.mrb[0].mxu0
        %v2529 = vadd.f32 %v2323, %v2528
        %v2530 = vpop.f32.mrb[0].mxu0
        %2531 = vmatprep.mubr.f32.mxu0 0.0
        %v2532 = vand.u32 %v1557, 4294901760
        %v2533 = vsub.f32 %v1557, %v2532
        %v2534 = vand.u32 %v2533, 4294901760
        %2535 = vmatmul.mubr.f32.gmra.mrb[0].mxu0 %v2534
        %v2536 = vpop.f32.mrb[0].mxu0
        %v2537 = vadd.f32 %v2330, %v2536
        %v2538 = vpop.f32.mrb[0].mxu0
        %2539 = vmatprep.mubr.f32.mxu0 0.0
        %v2540 = vand.u32 %v1558, 4294901760
        %v2541 = vsub.f32 %v1558, %v2540
        %v2542 = vand.u32 %v2541, 4294901760
        %2543 = vmatmul.mubr.f32.gmra.mrb[0].mxu0 %v2542
        %v2544 = vpop.f32.mrb[0].mxu0
        %v2545 = vadd.f32 %v2337, %v2544
        %v2546 = vpop.f32.mrb[0].mxu0
        %2547 = vmatprep.mubr.f32.mxu0 0.0
        %v2548 = vand.u32 %v1559, 4294901760
        %v2549 = vsub.f32 %v1559, %v2548
        %v2550 = vand.u32 %v2549, 4294901760
        %2551 = vmatmul.mubr.f32.gmra.mrb[0].mxu0 %v2550
        %v2552 = vpop.f32.mrb[0].mxu0
        %v2553 = vadd.f32 %v2344, %v2552
        %v2554 = vpop.f32.mrb[0].mxu0
        %2555 = vdwg.mxu0
        %2556 = vmatprep.subr.mxu0 0.0
        %v2557 = vand.u32 %v1528, 4294901760
        %v2558 = vsub.f32 %v1528, %v2557
        %v2559 = vand.u32 %v2558, 4294901760
        %2560 = vmatpush1.msra.mxu0 %v2559
        %2561 = vmatprep.subr.mxu0 0.0
        %v2562 = vand.u32 %v1529, 4294901760
        %v2563 = vsub.f32 %v1529, %v2562
        %v2564 = vand.u32 %v2563, 4294901760
        %2565 = vmatpush1.msra.mxu0 %v2564
        %2566 = vmatprep.subr.mxu0 0.0
        %v2567 = vand.u32 %v1530, 4294901760
        %v2568 = vsub.f32 %v1530, %v2567
        %v2569 = vand.u32 %v2568, 4294901760
        %2570 = vmatpush1.msra.mxu0 %v2569
        %2571 = vmatprep.subr.mxu0 0.0
        %v2572 = vand.u32 %v1531, 4294901760
        %v2573 = vsub.f32 %v1531, %v2572
        %v2574 = vand.u32 %v2573, 4294901760
        %2575 = vmatpush1.msra.mxu0 %v2574
        %2576 = vmatprep.subr.mxu0 0.0
        %v2577 = vand.u32 %v1532, 4294901760
        %v2578 = vsub.f32 %v1532, %v2577
        %v2579 = vand.u32 %v2578, 4294901760
        %2580 = vmatpush1.msra.mxu0 %v2579
        %2581 = vmatprep.subr.mxu0 0.0
        %v2582 = vand.u32 %v1533, 4294901760
        %v2583 = vsub.f32 %v1533, %v2582
        %v2584 = vand.u32 %v2583, 4294901760
        %2585 = vmatpush1.msra.mxu0 %v2584
        %2586 = vmatprep.subr.mxu0 0.0
        %v2587 = vand.u32 %v1534, 4294901760
        %v2588 = vsub.f32 %v1534, %v2587
        %v2589 = vand.u32 %v2588, 4294901760
        %2590 = vmatpush1.msra.mxu0 %v2589
        %2591 = vmatprep.subr.mxu0 0.0
        %v2592 = vand.u32 %v1535, 4294901760
        %v2593 = vsub.f32 %v1535, %v2592
        %v2594 = vand.u32 %v2593, 4294901760
        %2595 = vmatpush1.msra.mxu0 %v2594
        %2596 = vmatprep.subr.mxu0 0.0
        %v2597 = vand.u32 %v1536, 4294901760
        %v2598 = vsub.f32 %v1536, %v2597
        %v2599 = vand.u32 %v2598, 4294901760
        %2600 = vmatpush1.msra.mxu0 %v2599
        %2601 = vmatprep.subr.mxu0 0.0
        %v2602 = vand.u32 %v1537, 4294901760
        %v2603 = vsub.f32 %v1537, %v2602
        %v2604 = vand.u32 %v2603, 4294901760
        %2605 = vmatpush1.msra.mxu0 %v2604
        %2606 = vmatprep.subr.mxu0 0.0
        %v2607 = vand.u32 %v1538, 4294901760
        %v2608 = vsub.f32 %v1538, %v2607
        %v2609 = vand.u32 %v2608, 4294901760
        %2610 = vmatpush1.msra.mxu0 %v2609
        %2611 = vmatprep.subr.mxu0 0.0
        %v2612 = vand.u32 %v1539, 4294901760
        %v2613 = vsub.f32 %v1539, %v2612
        %v2614 = vand.u32 %v2613, 4294901760
        %2615 = vmatpush1.msra.mxu0 %v2614
        %2616 = vmatprep.subr.mxu0 0.0
        %v2617 = vand.u32 %v1540, 4294901760
        %v2618 = vsub.f32 %v1540, %v2617
        %v2619 = vand.u32 %v2618, 4294901760
        %2620 = vmatpush1.msra.mxu0 %v2619
        %2621 = vmatprep.subr.mxu0 0.0
        %v2622 = vand.u32 %v1541, 4294901760
        %v2623 = vsub.f32 %v1541, %v2622
        %v2624 = vand.u32 %v2623, 4294901760
        %2625 = vmatpush1.msra.mxu0 %v2624
        %2626 = vmatprep.subr.mxu0 0.0
        %v2627 = vand.u32 %v1542, 4294901760
        %v2628 = vsub.f32 %v1542, %v2627
        %v2629 = vand.u32 %v2628, 4294901760
        %2630 = vmatpush1.msra.mxu0 %v2629
        %2631 = vmatprep.subr.mxu0 0.0
        %v2632 = vand.u32 %v1543, 4294901760
        %v2633 = vsub.f32 %v1543, %v2632
        %v2634 = vand.u32 %v2633, 4294901760
        %2635 = vmatpush1.msra.mxu0 %v2634
        %2636 = vmatprep.subr.mxu0 0.0
        %2637 = vmatpush1.msra.mxu0 0.0
        %2638 = vmatprep.subr.mxu0 0.0
        %2639 = vmatpush1.msra.mxu0 0.0
        %2640 = vmatprep.subr.mxu0 0.0
        %2641 = vmatpush1.msra.mxu0 0.0
        %2642 = vmatprep.subr.mxu0 0.0
        %2643 = vmatpush1.msra.mxu0 0.0
        %2644 = vmatprep.subr.mxu0 0.0
        %2645 = vmatpush1.msra.mxu0 0.0
        %2646 = vmatprep.subr.mxu0 0.0
        %2647 = vmatpush1.msra.mxu0 0.0
        %2648 = vmatprep.subr.mxu0 0.0
        %2649 = vmatpush1.msra.mxu0 0.0
        %2650 = vmatprep.subr.mxu0 0.0
        %2651 = vmatpush1.msra.mxu0 0.0
        %2652 = vmatprep.subr.mxu0 0.0
        %2653 = vmatpush1.msra.mxu0 0.0
        %2654 = vmatprep.subr.mxu0 0.0
        %2655 = vmatpush1.msra.mxu0 0.0
        %2656 = vmatprep.subr.mxu0 0.0
        %2657 = vmatpush1.msra.mxu0 0.0
        %2658 = vmatprep.subr.mxu0 0.0
        %2659 = vmatpush1.msra.mxu0 0.0
        %2660 = vmatprep.subr.mxu0 0.0
        %2661 = vmatpush1.msra.mxu0 0.0
        %2662 = vmatprep.subr.mxu0 0.0
        %2663 = vmatpush1.msra.mxu0 0.0
        %2664 = vmatprep.subr.mxu0 0.0
        %2665 = vmatpush1.msra.mxu0 0.0
        %2666 = vmatprep.subr.mxu0 0.0
        %2667 = vmatpush1.msra.mxu0 0.0
        %2668 = vmatprep.mubr.f32.mxu0 0.0
        %v2669 = vand.u32 %v1544, 4294901760
        %2670 = vmatmul.mubr.f32.gmra.mrb[0].mxu0 %v2669
        %v2671 = vpop.f32.mrb[0].mxu0
        %v2672 = vadd.f32 %v2433, %v2671
        %v2673 = vpop.f32.mrb[0].mxu0
        %2674 = vmatprep.mubr.f32.mxu0 0.0
        %v2675 = vand.u32 %v1545, 4294901760
        %2676 = vmatmul.mubr.f32.gmra.mrb[0].mxu0 %v2675
        %v2677 = vpop.f32.mrb[0].mxu0
        %v2678 = vadd.f32 %v2441, %v2677
        %v2679 = vpop.f32.mrb[0].mxu0
        %2680 = vmatprep.mubr.f32.mxu0 0.0
        %v2681 = vand.u32 %v1546, 4294901760
        %2682 = vmatmul.mubr.f32.gmra.mrb[0].mxu0 %v2681
        %v2683 = vpop.f32.mrb[0].mxu0
        %v2684 = vadd.f32 %v2449, %v2683
        %v2685 = vpop.f32.mrb[0].mxu0
        %2686 = vmatprep.mubr.f32.mxu0 0.0
        %v2687 = vand.u32 %v1547, 4294901760
        %2688 = vmatmul.mubr.f32.gmra.mrb[0].mxu0 %v2687
        %v2689 = vpop.f32.mrb[0].mxu0
        %v2690 = vadd.f32 %v2457, %v2689
        %v2691 = vpop.f32.mrb[0].mxu0
        %2692 = vmatprep.mubr.f32.mxu0 0.0
        %v2693 = vand.u32 %v1548, 4294901760
        %2694 = vmatmul.mubr.f32.gmra.mrb[0].mxu0 %v2693
        %v2695 = vpop.f32.mrb[0].mxu0
        %v2696 = vadd.f32 %v2465, %v2695
        %v2697 = vpop.f32.mrb[0].mxu0
        %2698 = vmatprep.mubr.f32.mxu0 0.0
        %v2699 = vand.u32 %v1549, 4294901760
        %2700 = vmatmul.mubr.f32.gmra.mrb[0].mxu0 %v2699
        %v2701 = vpop.f32.mrb[0].mxu0
        %v2702 = vadd.f32 %v2473, %v2701
        %v2703 = vpop.f32.mrb[0].mxu0
        %2704 = vmatprep.mubr.f32.mxu0 0.0
        %v2705 = vand.u32 %v1550, 4294901760
        %2706 = vmatmul.mubr.f32.gmra.mrb[0].mxu0 %v2705
        %v2707 = vpop.f32.mrb[0].mxu0
        %v2708 = vadd.f32 %v2481, %v2707
        %v2709 = vpop.f32.mrb[0].mxu0
        %2710 = vmatprep.mubr.f32.mxu0 0.0
        %v2711 = vand.u32 %v1551, 4294901760
        %2712 = vmatmul.mubr.f32.gmra.mrb[0].mxu0 %v2711
        %v2713 = vpop.f32.mrb[0].mxu0
        %v2714 = vadd.f32 %v2489, %v2713
        %v2715 = vpop.f32.mrb[0].mxu0
        %2716 = vmatprep.mubr.f32.mxu0 0.0
        %v2717 = vand.u32 %v1552, 4294901760
        %2718 = vmatmul.mubr.f32.gmra.mrb[0].mxu0 %v2717
        %v2719 = vpop.f32.mrb[0].mxu0
        %v2720 = vadd.f32 %v2497, %v2719
        %v2721 = vpop.f32.mrb[0].mxu0
        %2722 = vmatprep.mubr.f32.mxu0 0.0
        %v2723 = vand.u32 %v1553, 4294901760
        %2724 = vmatmul.mubr.f32.gmra.mrb[0].mxu0 %v2723
        %v2725 = vpop.f32.mrb[0].mxu0
        %v2726 = vadd.f32 %v2505, %v2725
        %v2727 = vpop.f32.mrb[0].mxu0
        %2728 = vmatprep.mubr.f32.mxu0 0.0
        %v2729 = vand.u32 %v1554, 4294901760
        %2730 = vmatmul.mubr.f32.gmra.mrb[0].mxu0 %v2729
        %v2731 = vpop.f32.mrb[0].mxu0
        %v2732 = vadd.f32 %v2513, %v2731
        %v2733 = vpop.f32.mrb[0].mxu0
        %2734 = vmatprep.mubr.f32.mxu0 0.0
        %v2735 = vand.u32 %v1555, 4294901760
        %2736 = vmatmul.mubr.f32.gmra.mrb[0].mxu0 %v2735
        %v2737 = vpop.f32.mrb[0].mxu0
        %v2738 = vadd.f32 %v2521, %v2737
        %v2739 = vpop.f32.mrb[0].mxu0
        %2740 = vmatprep.mubr.f32.mxu0 0.0
        %v2741 = vand.u32 %v1556, 4294901760
        %2742 = vmatmul.mubr.f32.gmra.mrb[0].mxu0 %v2741
        %v2743 = vpop.f32.mrb[0].mxu0
        %v2744 = vadd.f32 %v2529, %v2743
        %v2745 = vpop.f32.mrb[0].mxu0
        %2746 = vmatprep.mubr.f32.mxu0 0.0
        %v2747 = vand.u32 %v1557, 4294901760
        %2748 = vmatmul.mubr.f32.gmra.mrb[0].mxu0 %v2747
        %v2749 = vpop.f32.mrb[0].mxu0
        %v2750 = vadd.f32 %v2537, %v2749
        %v2751 = vpop.f32.mrb[0].mxu0
        %2752 = vmatprep.mubr.f32.mxu0 0.0
        %v2753 = vand.u32 %v1558, 4294901760
        %2754 = vmatmul.mubr.f32.gmra.mrb[0].mxu0 %v2753
        %v2755 = vpop.f32.mrb[0].mxu0
        %v2756 = vadd.f32 %v2545, %v2755
        %v2757 = vpop.f32.mrb[0].mxu0
        %2758 = vmatprep.mubr.f32.mxu0 0.0
        %v2759 = vand.u32 %v1559, 4294901760
        %2760 = vmatmul.mubr.f32.gmra.mrb[0].mxu0 %v2759
        %v2761 = vpop.f32.mrb[0].mxu0
        %v2762 = vadd.f32 %v2553, %v2761
        %v2763 = vpop.f32.mrb[0].mxu0
        %2764 = vdwg.mxu0
        %2765 = vmatprep.subr.mxu0 0.0
        %v2766 = vand.u32 %v1528, 4294901760
        %2767 = vmatpush1.msra.mxu0 %v2766
        %2768 = vmatprep.subr.mxu0 0.0
        %v2769 = vand.u32 %v1529, 4294901760
        %2770 = vmatpush1.msra.mxu0 %v2769
        %2771 = vmatprep.subr.mxu0 0.0
        %v2772 = vand.u32 %v1530, 4294901760
        %2773 = vmatpush1.msra.mxu0 %v2772
        %2774 = vmatprep.subr.mxu0 0.0
        %v2775 = vand.u32 %v1531, 4294901760
        %2776 = vmatpush1.msra.mxu0 %v2775
        %2777 = vmatprep.subr.mxu0 0.0
        %v2778 = vand.u32 %v1532, 4294901760
        %2779 = vmatpush1.msra.mxu0 %v2778
        %2780 = vmatprep.subr.mxu0 0.0
        %v2781 = vand.u32 %v1533, 4294901760
        %2782 = vmatpush1.msra.mxu0 %v2781
        %2783 = vmatprep.subr.mxu0 0.0
        %v2784 = vand.u32 %v1534, 4294901760
        %2785 = vmatpush1.msra.mxu0 %v2784
        %2786 = vmatprep.subr.mxu0 0.0
        %v2787 = vand.u32 %v1535, 4294901760
        %2788 = vmatpush1.msra.mxu0 %v2787
        %2789 = vmatprep.subr.mxu0 0.0
        %v2790 = vand.u32 %v1536, 4294901760
        %2791 = vmatpush1.msra.mxu0 %v2790
        %2792 = vmatprep.subr.mxu0 0.0
        %v2793 = vand.u32 %v1537, 4294901760
        %2794 = vmatpush1.msra.mxu0 %v2793
        %2795 = vmatprep.subr.mxu0 0.0
        %v2796 = vand.u32 %v1538, 4294901760
        %2797 = vmatpush1.msra.mxu0 %v2796
        %2798 = vmatprep.subr.mxu0 0.0
        %v2799 = vand.u32 %v1539, 4294901760
        %2800 = vmatpush1.msra.mxu0 %v2799
        %2801 = vmatprep.subr.mxu0 0.0
        %v2802 = vand.u32 %v1540, 4294901760
        %2803 = vmatpush1.msra.mxu0 %v2802
        %2804 = vmatprep.subr.mxu0 0.0
        %v2805 = vand.u32 %v1541, 4294901760
        %2806 = vmatpush1.msra.mxu0 %v2805
        %2807 = vmatprep.subr.mxu0 0.0
        %v2808 = vand.u32 %v1542, 4294901760
        %2809 = vmatpush1.msra.mxu0 %v2808
        %2810 = vmatprep.subr.mxu0 0.0
        %v2811 = vand.u32 %v1543, 4294901760
        %2812 = vmatpush1.msra.mxu0 %v2811
        %2813 = vmatprep.subr.mxu0 0.0
        %2814 = vmatpush1.msra.mxu0 0.0
        %2815 = vmatprep.subr.mxu0 0.0
        %2816 = vmatpush1.msra.mxu0 0.0
        %2817 = vmatprep.subr.mxu0 0.0
        %2818 = vmatpush1.msra.mxu0 0.0
        %2819 = vmatprep.subr.mxu0 0.0
        %2820 = vmatpush1.msra.mxu0 0.0
        %2821 = vmatprep.subr.mxu0 0.0
        %2822 = vmatpush1.msra.mxu0 0.0
        %2823 = vmatprep.subr.mxu0 0.0
        %2824 = vmatpush1.msra.mxu0 0.0
        %2825 = vmatprep.subr.mxu0 0.0
        %2826 = vmatpush1.msra.mxu0 0.0
        %2827 = vmatprep.subr.mxu0 0.0
        %2828 = vmatpush1.msra.mxu0 0.0
        %2829 = vmatprep.subr.mxu0 0.0
        %2830 = vmatpush1.msra.mxu0 0.0
        %2831 = vmatprep.subr.mxu0 0.0
        %2832 = vmatpush1.msra.mxu0 0.0
        %2833 = vmatprep.subr.mxu0 0.0
        %2834 = vmatpush1.msra.mxu0 0.0
        %2835 = vmatprep.subr.mxu0 0.0
        %2836 = vmatpush1.msra.mxu0 0.0
        %2837 = vmatprep.subr.mxu0 0.0
        %2838 = vmatpush1.msra.mxu0 0.0
        %2839 = vmatprep.subr.mxu0 0.0
        %2840 = vmatpush1.msra.mxu0 0.0
        %2841 = vmatprep.subr.mxu0 0.0
        %2842 = vmatpush1.msra.mxu0 0.0
        %2843 = vmatprep.subr.mxu0 0.0
        %2844 = vmatpush1.msra.mxu0 0.0
        %2845 = vmatprep.mubr.f32.mxu0 0.0
        %v2846 = vand.u32 %v1544, 4294901760
        %2847 = vmatmul.mubr.f32.gmra.mrb[0].mxu0 %v2846
        %v2848 = vpop.f32.mrb[0].mxu0
        %v2849 = vadd.f32 %v2672, %v2848
        %v2850 = vpop.f32.mrb[0].mxu0
        %2851 = vmatprep.mubr.f32.mxu0 0.0
        %v2852 = vand.u32 %v1545, 4294901760
        %2853 = vmatmul.mubr.f32.gmra.mrb[0].mxu0 %v2852
        %v2854 = vpop.f32.mrb[0].mxu0
        %v2855 = vadd.f32 %v2678, %v2854
        %v2856 = vpop.f32.mrb[0].mxu0
        %2857 = vmatprep.mubr.f32.mxu0 0.0
        %v2858 = vand.u32 %v1546, 4294901760
        %2859 = vmatmul.mubr.f32.gmra.mrb[0].mxu0 %v2858
        %v2860 = vpop.f32.mrb[0].mxu0
        %v2861 = vadd.f32 %v2684, %v2860
        %v2862 = vpop.f32.mrb[0].mxu0
        %2863 = vmatprep.mubr.f32.mxu0 0.0
        %v2864 = vand.u32 %v1547, 4294901760
        %2865 = vmatmul.mubr.f32.gmra.mrb[0].mxu0 %v2864
        %v2866 = vpop.f32.mrb[0].mxu0
        %v2867 = vadd.f32 %v2690, %v2866
        %v2868 = vpop.f32.mrb[0].mxu0
        %2869 = vmatprep.mubr.f32.mxu0 0.0
        %v2870 = vand.u32 %v1548, 4294901760
        %2871 = vmatmul.mubr.f32.gmra.mrb[0].mxu0 %v2870
        %v2872 = vpop.f32.mrb[0].mxu0
        %v2873 = vadd.f32 %v2696, %v2872
        %v2874 = vpop.f32.mrb[0].mxu0
        %2875 = vmatprep.mubr.f32.mxu0 0.0
        %v2876 = vand.u32 %v1549, 4294901760
        %2877 = vmatmul.mubr.f32.gmra.mrb[0].mxu0 %v2876
        %v2878 = vpop.f32.mrb[0].mxu0
        %v2879 = vadd.f32 %v2702, %v2878
        %v2880 = vpop.f32.mrb[0].mxu0
        %2881 = vmatprep.mubr.f32.mxu0 0.0
        %v2882 = vand.u32 %v1550, 4294901760
        %2883 = vmatmul.mubr.f32.gmra.mrb[0].mxu0 %v2882
        %v2884 = vpop.f32.mrb[0].mxu0
        %v2885 = vadd.f32 %v2708, %v2884
        %v2886 = vpop.f32.mrb[0].mxu0
        %2887 = vmatprep.mubr.f32.mxu0 0.0
        %v2888 = vand.u32 %v1551, 4294901760
        %2889 = vmatmul.mubr.f32.gmra.mrb[0].mxu0 %v2888
        %v2890 = vpop.f32.mrb[0].mxu0
        %v2891 = vadd.f32 %v2714, %v2890
        %v2892 = vpop.f32.mrb[0].mxu0
        %2893 = vmatprep.mubr.f32.mxu0 0.0
        %v2894 = vand.u32 %v1552, 4294901760
        %2895 = vmatmul.mubr.f32.gmra.mrb[0].mxu0 %v2894
        %v2896 = vpop.f32.mrb[0].mxu0
        %v2897 = vadd.f32 %v2720, %v2896
        %v2898 = vpop.f32.mrb[0].mxu0
        %2899 = vmatprep.mubr.f32.mxu0 0.0
        %v2900 = vand.u32 %v1553, 4294901760
        %2901 = vmatmul.mubr.f32.gmra.mrb[0].mxu0 %v2900
        %v2902 = vpop.f32.mrb[0].mxu0
        %v2903 = vadd.f32 %v2726, %v2902
        %v2904 = vpop.f32.mrb[0].mxu0
        %2905 = vmatprep.mubr.f32.mxu0 0.0
        %v2906 = vand.u32 %v1554, 4294901760
        %2907 = vmatmul.mubr.f32.gmra.mrb[0].mxu0 %v2906
        %v2908 = vpop.f32.mrb[0].mxu0
        %v2909 = vadd.f32 %v2732, %v2908
        %v2910 = vpop.f32.mrb[0].mxu0
        %2911 = vmatprep.mubr.f32.mxu0 0.0
        %v2912 = vand.u32 %v1555, 4294901760
        %2913 = vmatmul.mubr.f32.gmra.mrb[0].mxu0 %v2912
        %v2914 = vpop.f32.mrb[0].mxu0
        %v2915 = vadd.f32 %v2738, %v2914
        %v2916 = vpop.f32.mrb[0].mxu0
        %2917 = vmatprep.mubr.f32.mxu0 0.0
        %v2918 = vand.u32 %v1556, 4294901760
        %2919 = vmatmul.mubr.f32.gmra.mrb[0].mxu0 %v2918
        %v2920 = vpop.f32.mrb[0].mxu0
        %v2921 = vadd.f32 %v2744, %v2920
        %v2922 = vpop.f32.mrb[0].mxu0
        %2923 = vmatprep.mubr.f32.mxu0 0.0
        %v2924 = vand.u32 %v1557, 4294901760
        %2925 = vmatmul.mubr.f32.gmra.mrb[0].mxu0 %v2924
        %v2926 = vpop.f32.mrb[0].mxu0
        %v2927 = vadd.f32 %v2750, %v2926
        %v2928 = vpop.f32.mrb[0].mxu0
        %2929 = vmatprep.mubr.f32.mxu0 0.0
        %v2930 = vand.u32 %v1558, 4294901760
        %2931 = vmatmul.mubr.f32.gmra.mrb[0].mxu0 %v2930
        %v2932 = vpop.f32.mrb[0].mxu0
        %v2933 = vadd.f32 %v2756, %v2932
        %v2934 = vpop.f32.mrb[0].mxu0
        %2935 = vmatprep.mubr.f32.mxu0 0.0
        %v2936 = vand.u32 %v1559, 4294901760
        %2937 = vmatmul.mubr.f32.gmra.mrb[0].mxu0 %v2936
        %v2938 = vpop.f32.mrb[0].mxu0
        %v2939 = vadd.f32 %v2762, %v2938
        %v2940 = vpop.f32.mrb[0].mxu0
        %2941 = vdwg.mxu0
        %v2942 = vmax.f32 %v2849, 0.0
        %v2943 = vmax.f32 %v2855, 0.0
        %v2944 = vmax.f32 %v2861, 0.0
        %v2945 = vmax.f32 %v2867, 0.0
        %v2946 = vmax.f32 %v2873, 0.0
        %v2947 = vmax.f32 %v2879, 0.0
        %v2948 = vmax.f32 %v2885, 0.0
        %v2949 = vmax.f32 %v2891, 0.0
        %v2950 = vmax.f32 %v2897, 0.0
        %v2951 = vmax.f32 %v2903, 0.0
        %v2952 = vmax.f32 %v2909, 0.0
        %v2953 = vmax.f32 %v2915, 0.0
        %v2954 = vmax.f32 %v2921, 0.0
        %v2955 = vmax.f32 %v2927, 0.0
        %v2956 = vmax.f32 %v2933, 0.0
        %v2957 = vmax.f32 %v2939, 0.0
        %v2958 = vld [vmem:[%s5] sm:$0xff]
        %s2959 = sld [smem:[#allocation2]]
        %v2960 = vstv %s2959
        %2961 = vmatprep.subr.mxu0 0.0
        %v2962 = vand.u32 %v2942, 4294901760
        %2963 = vmatpush1.msra.mxu0 %v2962
        %2964 = vmatprep.subr.mxu0 0.0
        %v2965 = vand.u32 %v2943, 4294901760
        %2966 = vmatpush1.msra.mxu0 %v2965
        %2967 = vmatprep.subr.mxu0 0.0
        %v2968 = vand.u32 %v2944, 4294901760
        %2969 = vmatpush1.msra.mxu0 %v2968
        %2970 = vmatprep.subr.mxu0 0.0
        %v2971 = vand.u32 %v2945, 4294901760
        %2972 = vmatpush1.msra.mxu0 %v2971
        %2973 = vmatprep.subr.mxu0 0.0
        %v2974 = vand.u32 %v2946, 4294901760
        %2975 = vmatpush1.msra.mxu0 %v2974
        %2976 = vmatprep.subr.mxu0 0.0
        %v2977 = vand.u32 %v2947, 4294901760
        %2978 = vmatpush1.msra.mxu0 %v2977
        %2979 = vmatprep.subr.mxu0 0.0
        %v2980 = vand.u32 %v2948, 4294901760
        %2981 = vmatpush1.msra.mxu0 %v2980
        %2982 = vmatprep.subr.mxu0 0.0
        %v2983 = vand.u32 %v2949, 4294901760
        %2984 = vmatpush1.msra.mxu0 %v2983
        %2985 = vmatprep.subr.mxu0 0.0
        %v2986 = vand.u32 %v2950, 4294901760
        %2987 = vmatpush1.msra.mxu0 %v2986
        %2988 = vmatprep.subr.mxu0 0.0
        %v2989 = vand.u32 %v2951, 4294901760
        %2990 = vmatpush1.msra.mxu0 %v2989
        %2991 = vmatprep.subr.mxu0 0.0
        %v2992 = vand.u32 %v2952, 4294901760
        %2993 = vmatpush1.msra.mxu0 %v2992
        %2994 = vmatprep.subr.mxu0 0.0
        %v2995 = vand.u32 %v2953, 4294901760
        %2996 = vmatpush1.msra.mxu0 %v2995
        %2997 = vmatprep.subr.mxu0 0.0
        %v2998 = vand.u32 %v2954, 4294901760
        %2999 = vmatpush1.msra.mxu0 %v2998
        %3000 = vmatprep.subr.mxu0 0.0
        %v3001 = vand.u32 %v2955, 4294901760
        %3002 = vmatpush1.msra.mxu0 %v3001
        %3003 = vmatprep.subr.mxu0 0.0
        %v3004 = vand.u32 %v2956, 4294901760
        %3005 = vmatpush1.msra.mxu0 %v3004
        %3006 = vmatprep.subr.mxu0 0.0
        %v3007 = vand.u32 %v2957, 4294901760
        %3008 = vmatpush1.msra.mxu0 %v3007
        %3009 = vmatprep.subr.mxu0 0.0
        %3010 = vmatpush1.msra.mxu0 0.0
        %3011 = vmatprep.subr.mxu0 0.0
        %3012 = vmatpush1.msra.mxu0 0.0
        %3013 = vmatprep.subr.mxu0 0.0
        %3014 = vmatpush1.msra.mxu0 0.0
        %3015 = vmatprep.subr.mxu0 0.0
        %3016 = vmatpush1.msra.mxu0 0.0
        %3017 = vmatprep.subr.mxu0 0.0
        %3018 = vmatpush1.msra.mxu0 0.0
        %3019 = vmatprep.subr.mxu0 0.0
        %3020 = vmatpush1.msra.mxu0 0.0
        %3021 = vmatprep.subr.mxu0 0.0
        %3022 = vmatpush1.msra.mxu0 0.0
        %3023 = vmatprep.subr.mxu0 0.0
        %3024 = vmatpush1.msra.mxu0 0.0
        %3025 = vmatprep.subr.mxu0 0.0
        %3026 = vmatpush1.msra.mxu0 0.0
        %3027 = vmatprep.subr.mxu0 0.0
        %3028 = vmatpush1.msra.mxu0 0.0
        %3029 = vmatprep.subr.mxu0 0.0
        %3030 = vmatpush1.msra.mxu0 0.0
        %3031 = vmatprep.subr.mxu0 0.0
        %3032 = vmatpush1.msra.mxu0 0.0
        %3033 = vmatprep.subr.mxu0 0.0
        %3034 = vmatpush1.msra.mxu0 0.0
        %3035 = vmatprep.subr.mxu0 0.0
        %3036 = vmatpush1.msra.mxu0 0.0
        %3037 = vmatprep.subr.mxu0 0.0
        %3038 = vmatpush1.msra.mxu0 0.0
        %3039 = vmatprep.subr.mxu0 0.0
        %3040 = vmatpush1.msra.mxu0 0.0
        %3041 = vmatprep.mubr.f32.mxu0 0.0
        %v3042 = vand.u32 %v2958, 4294901760
        %v3043 = vsub.f32 %v2958, %v3042
        %v3044 = vand.u32 %v3043, 4294901760
        %v3045 = vsub.f32 %v3043, %v3044
        %v3046 = vand.u32 %v3045, 4294901760
        %3047 = vmatmul.mubr.f32.gmra.mrb[0].mxu0 %v3046
        %v3048 = vpop.f32.mrb[0].mxu0
        %v3049 = vadd.f32 %v2960, %v3048
        %v3050 = vpop.f32.mrb[0].mxu0
        %3051 = vdwg.mxu0
        %3052 = vmatprep.subr.mxu0 0.0
        %v3053 = vand.u32 %v2942, 4294901760
        %v3054 = vsub.f32 %v2942, %v3053
        %v3055 = vand.u32 %v3054, 4294901760
        %v3056 = vsub.f32 %v3054, %v3055
        %v3057 = vand.u32 %v3056, 4294901760
        %3058 = vmatpush1.msra.mxu0 %v3057
        %3059 = vmatprep.subr.mxu0 0.0
        %v3060 = vand.u32 %v2943, 4294901760
        %v3061 = vsub.f32 %v2943, %v3060
        %v3062 = vand.u32 %v3061, 4294901760
        %v3063 = vsub.f32 %v3061, %v3062
        %v3064 = vand.u32 %v3063, 4294901760
        %3065 = vmatpush1.msra.mxu0 %v3064
        %3066 = vmatprep.subr.mxu0 0.0
        %v3067 = vand.u32 %v2944, 4294901760
        %v3068 = vsub.f32 %v2944, %v3067
        %v3069 = vand.u32 %v3068, 4294901760
        %v3070 = vsub.f32 %v3068, %v3069
        %v3071 = vand.u32 %v3070, 4294901760
        %3072 = vmatpush1.msra.mxu0 %v3071
        %3073 = vmatprep.subr.mxu0 0.0
        %v3074 = vand.u32 %v2945, 4294901760
        %v3075 = vsub.f32 %v2945, %v3074
        %v3076 = vand.u32 %v3075, 4294901760
        %v3077 = vsub.f32 %v3075, %v3076
        %v3078 = vand.u32 %v3077, 4294901760
        %3079 = vmatpush1.msra.mxu0 %v3078
        %3080 = vmatprep.subr.mxu0 0.0
        %v3081 = vand.u32 %v2946, 4294901760
        %v3082 = vsub.f32 %v2946, %v3081
        %v3083 = vand.u32 %v3082, 4294901760
        %v3084 = vsub.f32 %v3082, %v3083
        %v3085 = vand.u32 %v3084, 4294901760
        %3086 = vmatpush1.msra.mxu0 %v3085
        %3087 = vmatprep.subr.mxu0 0.0
        %v3088 = vand.u32 %v2947, 4294901760
        %v3089 = vsub.f32 %v2947, %v3088
        %v3090 = vand.u32 %v3089, 4294901760
        %v3091 = vsub.f32 %v3089, %v3090
        %v3092 = vand.u32 %v3091, 4294901760
        %3093 = vmatpush1.msra.mxu0 %v3092
        %3094 = vmatprep.subr.mxu0 0.0
        %v3095 = vand.u32 %v2948, 4294901760
        %v3096 = vsub.f32 %v2948, %v3095
        %v3097 = vand.u32 %v3096, 4294901760
        %v3098 = vsub.f32 %v3096, %v3097
        %v3099 = vand.u32 %v3098, 4294901760
        %3100 = vmatpush1.msra.mxu0 %v3099
        %3101 = vmatprep.subr.mxu0 0.0
        %v3102 = vand.u32 %v2949, 4294901760
        %v3103 = vsub.f32 %v2949, %v3102
        %v3104 = vand.u32 %v3103, 4294901760
        %v3105 = vsub.f32 %v3103, %v3104
        %v3106 = vand.u32 %v3105, 4294901760
        %3107 = vmatpush1.msra.mxu0 %v3106
        %3108 = vmatprep.subr.mxu0 0.0
        %v3109 = vand.u32 %v2950, 4294901760
        %v3110 = vsub.f32 %v2950, %v3109
        %v3111 = vand.u32 %v3110, 4294901760
        %v3112 = vsub.f32 %v3110, %v3111
        %v3113 = vand.u32 %v3112, 4294901760
        %3114 = vmatpush1.msra.mxu0 %v3113
        %3115 = vmatprep.subr.mxu0 0.0
        %v3116 = vand.u32 %v2951, 4294901760
        %v3117 = vsub.f32 %v2951, %v3116
        %v3118 = vand.u32 %v3117, 4294901760
        %v3119 = vsub.f32 %v3117, %v3118
        %v3120 = vand.u32 %v3119, 4294901760
        %3121 = vmatpush1.msra.mxu0 %v3120
        %3122 = vmatprep.subr.mxu0 0.0
        %v3123 = vand.u32 %v2952, 4294901760
        %v3124 = vsub.f32 %v2952, %v3123
        %v3125 = vand.u32 %v3124, 4294901760
        %v3126 = vsub.f32 %v3124, %v3125
        %v3127 = vand.u32 %v3126, 4294901760
        %3128 = vmatpush1.msra.mxu0 %v3127
        %3129 = vmatprep.subr.mxu0 0.0
        %v3130 = vand.u32 %v2953, 4294901760
        %v3131 = vsub.f32 %v2953, %v3130
        %v3132 = vand.u32 %v3131, 4294901760
        %v3133 = vsub.f32 %v3131, %v3132
        %v3134 = vand.u32 %v3133, 4294901760
        %3135 = vmatpush1.msra.mxu0 %v3134
        %3136 = vmatprep.subr.mxu0 0.0
        %v3137 = vand.u32 %v2954, 4294901760
        %v3138 = vsub.f32 %v2954, %v3137
        %v3139 = vand.u32 %v3138, 4294901760
        %v3140 = vsub.f32 %v3138, %v3139
        %v3141 = vand.u32 %v3140, 4294901760
        %3142 = vmatpush1.msra.mxu0 %v3141
        %3143 = vmatprep.subr.mxu0 0.0
        %v3144 = vand.u32 %v2955, 4294901760
        %v3145 = vsub.f32 %v2955, %v3144
        %v3146 = vand.u32 %v3145, 4294901760
        %v3147 = vsub.f32 %v3145, %v3146
        %v3148 = vand.u32 %v3147, 4294901760
        %3149 = vmatpush1.msra.mxu0 %v3148
        %3150 = vmatprep.subr.mxu0 0.0
        %v3151 = vand.u32 %v2956, 4294901760
        %v3152 = vsub.f32 %v2956, %v3151
        %v3153 = vand.u32 %v3152, 4294901760
        %v3154 = vsub.f32 %v3152, %v3153
        %v3155 = vand.u32 %v3154, 4294901760
        %3156 = vmatpush1.msra.mxu0 %v3155
        %3157 = vmatprep.subr.mxu0 0.0
        %v3158 = vand.u32 %v2957, 4294901760
        %v3159 = vsub.f32 %v2957, %v3158
        %v3160 = vand.u32 %v3159, 4294901760
        %v3161 = vsub.f32 %v3159, %v3160
        %v3162 = vand.u32 %v3161, 4294901760
        %3163 = vmatpush1.msra.mxu0 %v3162
        %3164 = vmatprep.subr.mxu0 0.0
        %3165 = vmatpush1.msra.mxu0 0.0
        %3166 = vmatprep.subr.mxu0 0.0
        %3167 = vmatpush1.msra.mxu0 0.0
        %3168 = vmatprep.subr.mxu0 0.0
        %3169 = vmatpush1.msra.mxu0 0.0
        %3170 = vmatprep.subr.mxu0 0.0
        %3171 = vmatpush1.msra.mxu0 0.0
        %3172 = vmatprep.subr.mxu0 0.0
        %3173 = vmatpush1.msra.mxu0 0.0
        %3174 = vmatprep.subr.mxu0 0.0
        %3175 = vmatpush1.msra.mxu0 0.0
        %3176 = vmatprep.subr.mxu0 0.0
        %3177 = vmatpush1.msra.mxu0 0.0
        %3178 = vmatprep.subr.mxu0 0.0
        %3179 = vmatpush1.msra.mxu0 0.0
        %3180 = vmatprep.subr.mxu0 0.0
        %3181 = vmatpush1.msra.mxu0 0.0
        %3182 = vmatprep.subr.mxu0 0.0
        %3183 = vmatpush1.msra.mxu0 0.0
        %3184 = vmatprep.subr.mxu0 0.0
        %3185 = vmatpush1.msra.mxu0 0.0
        %3186 = vmatprep.subr.mxu0 0.0
        %3187 = vmatpush1.msra.mxu0 0.0
        %3188 = vmatprep.subr.mxu0 0.0
        %3189 = vmatpush1.msra.mxu0 0.0
        %3190 = vmatprep.subr.mxu0 0.0
        %3191 = vmatpush1.msra.mxu0 0.0
        %3192 = vmatprep.subr.mxu0 0.0
        %3193 = vmatpush1.msra.mxu0 0.0
        %3194 = vmatprep.subr.mxu0 0.0
        %3195 = vmatpush1.msra.mxu0 0.0
        %3196 = vmatprep.mubr.f32.mxu0 0.0
        %v3197 = vand.u32 %v2958, 4294901760
        %3198 = vmatmul.mubr.f32.gmra.mrb[0].mxu0 %v3197
        %v3199 = vpop.f32.mrb[0].mxu0
        %v3200 = vadd.f32 %v3049, %v3199
        %v3201 = vpop.f32.mrb[0].mxu0
        %3202 = vdwg.mxu0
        %3203 = vmatprep.subr.mxu0 0.0
        %v3204 = vand.u32 %v2942, 4294901760
        %v3205 = vsub.f32 %v2942, %v3204
        %3206 = vmatpush1.msra.mxu0 %v3205
        %3207 = vmatprep.subr.mxu0 0.0
        %v3208 = vand.u32 %v2943, 4294901760
        %v3209 = vsub.f32 %v2943, %v3208
        %3210 = vmatpush1.msra.mxu0 %v3209
        %3211 = vmatprep.subr.mxu0 0.0
        %v3212 = vand.u32 %v2944, 4294901760
        %v3213 = vsub.f32 %v2944, %v3212
        %3214 = vmatpush1.msra.mxu0 %v3213
        %3215 = vmatprep.subr.mxu0 0.0
        %v3216 = vand.u32 %v2945, 4294901760
        %v3217 = vsub.f32 %v2945, %v3216
        %3218 = vmatpush1.msra.mxu0 %v3217
        %3219 = vmatprep.subr.mxu0 0.0
        %v3220 = vand.u32 %v2946, 4294901760
        %v3221 = vsub.f32 %v2946, %v3220
        %3222 = vmatpush1.msra.mxu0 %v3221
        %3223 = vmatprep.subr.mxu0 0.0
        %v3224 = vand.u32 %v2947, 4294901760
        %v3225 = vsub.f32 %v2947, %v3224
        %3226 = vmatpush1.msra.mxu0 %v3225
        %3227 = vmatprep.subr.mxu0 0.0
        %v3228 = vand.u32 %v2948, 4294901760
        %v3229 = vsub.f32 %v2948, %v3228
        %3230 = vmatpush1.msra.mxu0 %v3229
        %3231 = vmatprep.subr.mxu0 0.0
        %v3232 = vand.u32 %v2949, 4294901760
        %v3233 = vsub.f32 %v2949, %v3232
        %3234 = vmatpush1.msra.mxu0 %v3233
        %3235 = vmatprep.subr.mxu0 0.0
        %v3236 = vand.u32 %v2950, 4294901760
        %v3237 = vsub.f32 %v2950, %v3236
        %3238 = vmatpush1.msra.mxu0 %v3237
        %3239 = vmatprep.subr.mxu0 0.0
        %v3240 = vand.u32 %v2951, 4294901760
        %v3241 = vsub.f32 %v2951, %v3240
        %3242 = vmatpush1.msra.mxu0 %v3241
        %3243 = vmatprep.subr.mxu0 0.0
        %v3244 = vand.u32 %v2952, 4294901760
        %v3245 = vsub.f32 %v2952, %v3244
        %3246 = vmatpush1.msra.mxu0 %v3245
        %3247 = vmatprep.subr.mxu0 0.0
        %v3248 = vand.u32 %v2953, 4294901760
        %v3249 = vsub.f32 %v2953, %v3248
        %3250 = vmatpush1.msra.mxu0 %v3249
        %3251 = vmatprep.subr.mxu0 0.0
        %v3252 = vand.u32 %v2954, 4294901760
        %v3253 = vsub.f32 %v2954, %v3252
        %3254 = vmatpush1.msra.mxu0 %v3253
        %3255 = vmatprep.subr.mxu0 0.0
        %v3256 = vand.u32 %v2955, 4294901760
        %v3257 = vsub.f32 %v2955, %v3256
        %3258 = vmatpush1.msra.mxu0 %v3257
        %3259 = vmatprep.subr.mxu0 0.0
        %v3260 = vand.u32 %v2956, 4294901760
        %v3261 = vsub.f32 %v2956, %v3260
        %3262 = vmatpush1.msra.mxu0 %v3261
        %3263 = vmatprep.subr.mxu0 0.0
        %v3264 = vand.u32 %v2957, 4294901760
        %v3265 = vsub.f32 %v2957, %v3264
        %3266 = vmatpush1.msra.mxu0 %v3265
        %3267 = vmatprep.subr.mxu0 0.0
        %3268 = vmatpush1.msra.mxu0 0.0
        %3269 = vmatprep.subr.mxu0 0.0
        %3270 = vmatpush1.msra.mxu0 0.0
        %3271 = vmatprep.subr.mxu0 0.0
        %3272 = vmatpush1.msra.mxu0 0.0
        %3273 = vmatprep.subr.mxu0 0.0
        %3274 = vmatpush1.msra.mxu0 0.0
        %3275 = vmatprep.subr.mxu0 0.0
        %3276 = vmatpush1.msra.mxu0 0.0
        %3277 = vmatprep.subr.mxu0 0.0
        %3278 = vmatpush1.msra.mxu0 0.0
        %3279 = vmatprep.subr.mxu0 0.0
        %3280 = vmatpush1.msra.mxu0 0.0
        %3281 = vmatprep.subr.mxu0 0.0
        %3282 = vmatpush1.msra.mxu0 0.0
        %3283 = vmatprep.subr.mxu0 0.0
        %3284 = vmatpush1.msra.mxu0 0.0
        %3285 = vmatprep.subr.mxu0 0.0
        %3286 = vmatpush1.msra.mxu0 0.0
        %3287 = vmatprep.subr.mxu0 0.0
        %3288 = vmatpush1.msra.mxu0 0.0
        %3289 = vmatprep.subr.mxu0 0.0
        %3290 = vmatpush1.msra.mxu0 0.0
        %3291 = vmatprep.subr.mxu0 0.0
        %3292 = vmatpush1.msra.mxu0 0.0
        %3293 = vmatprep.subr.mxu0 0.0
        %3294 = vmatpush1.msra.mxu0 0.0
        %3295 = vmatprep.subr.mxu0 0.0
        %3296 = vmatpush1.msra.mxu0 0.0
        %3297 = vmatprep.subr.mxu0 0.0
        %3298 = vmatpush1.msra.mxu0 0.0
        %3299 = vmatprep.mubr.f32.mxu0 0.0
        %v3300 = vand.u32 %v2958, 4294901760
        %v3301 = vsub.f32 %v2958, %v3300
        %3302 = vmatmul.mubr.f32.gmra.mrb[0].mxu0 %v3301
        %v3303 = vpop.f32.mrb[0].mxu0
        %v3304 = vadd.f32 %v3200, %v3303
        %v3305 = vpop.f32.mrb[0].mxu0
        %3306 = vdwg.mxu0
        %3307 = vmatprep.subr.mxu0 0.0
        %v3308 = vand.u32 %v2942, 4294901760
        %3309 = vmatpush1.msra.mxu0 %v3308
        %3310 = vmatprep.subr.mxu0 0.0
        %v3311 = vand.u32 %v2943, 4294901760
        %3312 = vmatpush1.msra.mxu0 %v3311
        %3313 = vmatprep.subr.mxu0 0.0
        %v3314 = vand.u32 %v2944, 4294901760
        %3315 = vmatpush1.msra.mxu0 %v3314
        %3316 = vmatprep.subr.mxu0 0.0
        %v3317 = vand.u32 %v2945, 4294901760
        %3318 = vmatpush1.msra.mxu0 %v3317
        %3319 = vmatprep.subr.mxu0 0.0
        %v3320 = vand.u32 %v2946, 4294901760
        %3321 = vmatpush1.msra.mxu0 %v3320
        %3322 = vmatprep.subr.mxu0 0.0
        %v3323 = vand.u32 %v2947, 4294901760
        %3324 = vmatpush1.msra.mxu0 %v3323
        %3325 = vmatprep.subr.mxu0 0.0
        %v3326 = vand.u32 %v2948, 4294901760
        %3327 = vmatpush1.msra.mxu0 %v3326
        %3328 = vmatprep.subr.mxu0 0.0
        %v3329 = vand.u32 %v2949, 4294901760
        %3330 = vmatpush1.msra.mxu0 %v3329
        %3331 = vmatprep.subr.mxu0 0.0
        %v3332 = vand.u32 %v2950, 4294901760
        %3333 = vmatpush1.msra.mxu0 %v3332
        %3334 = vmatprep.subr.mxu0 0.0
        %v3335 = vand.u32 %v2951, 4294901760
        %3336 = vmatpush1.msra.mxu0 %v3335
        %3337 = vmatprep.subr.mxu0 0.0
        %v3338 = vand.u32 %v2952, 4294901760
        %3339 = vmatpush1.msra.mxu0 %v3338
        %3340 = vmatprep.subr.mxu0 0.0
        %v3341 = vand.u32 %v2953, 4294901760
        %3342 = vmatpush1.msra.mxu0 %v3341
        %3343 = vmatprep.subr.mxu0 0.0
        %v3344 = vand.u32 %v2954, 4294901760
        %3345 = vmatpush1.msra.mxu0 %v3344
        %3346 = vmatprep.subr.mxu0 0.0
        %v3347 = vand.u32 %v2955, 4294901760
        %3348 = vmatpush1.msra.mxu0 %v3347
        %3349 = vmatprep.subr.mxu0 0.0
        %v3350 = vand.u32 %v2956, 4294901760
        %3351 = vmatpush1.msra.mxu0 %v3350
        %3352 = vmatprep.subr.mxu0 0.0
        %v3353 = vand.u32 %v2957, 4294901760
        %3354 = vmatpush1.msra.mxu0 %v3353
        %3355 = vmatprep.subr.mxu0 0.0
        %3356 = vmatpush1.msra.mxu0 0.0
        %3357 = vmatprep.subr.mxu0 0.0
        %3358 = vmatpush1.msra.mxu0 0.0
        %3359 = vmatprep.subr.mxu0 0.0
        %3360 = vmatpush1.msra.mxu0 0.0
        %3361 = vmatprep.subr.mxu0 0.0
        %3362 = vmatpush1.msra.mxu0 0.0
        %3363 = vmatprep.subr.mxu0 0.0
        %3364 = vmatpush1.msra.mxu0 0.0
        %3365 = vmatprep.subr.mxu0 0.0
        %3366 = vmatpush1.msra.mxu0 0.0
        %3367 = vmatprep.subr.mxu0 0.0
        %3368 = vmatpush1.msra.mxu0 0.0
        %3369 = vmatprep.subr.mxu0 0.0
        %3370 = vmatpush1.msra.mxu0 0.0
        %3371 = vmatprep.subr.mxu0 0.0
        %3372 = vmatpush1.msra.mxu0 0.0
        %3373 = vmatprep.subr.mxu0 0.0
        %3374 = vmatpush1.msra.mxu0 0.0
        %3375 = vmatprep.subr.mxu0 0.0
        %3376 = vmatpush1.msra.mxu0 0.0
        %3377 = vmatprep.subr.mxu0 0.0
        %3378 = vmatpush1.msra.mxu0 0.0
        %3379 = vmatprep.subr.mxu0 0.0
        %3380 = vmatpush1.msra.mxu0 0.0
        %3381 = vmatprep.subr.mxu0 0.0
        %3382 = vmatpush1.msra.mxu0 0.0
        %3383 = vmatprep.subr.mxu0 0.0
        %3384 = vmatpush1.msra.mxu0 0.0
        %3385 = vmatprep.subr.mxu0 0.0
        %3386 = vmatpush1.msra.mxu0 0.0
        %3387 = vmatprep.mubr.f32.mxu0 0.0
        %v3388 = vand.u32 %v2958, 4294901760
        %v3389 = vsub.f32 %v2958, %v3388
        %v3390 = vand.u32 %v3389, 4294901760
        %3391 = vmatmul.mubr.f32.gmra.mrb[0].mxu0 %v3390
        %v3392 = vpop.f32.mrb[0].mxu0
        %v3393 = vadd.f32 %v3304, %v3392
        %v3394 = vpop.f32.mrb[0].mxu0
        %3395 = vdwg.mxu0
        %3396 = vmatprep.subr.mxu0 0.0
        %v3397 = vand.u32 %v2942, 4294901760
        %v3398 = vsub.f32 %v2942, %v3397
        %v3399 = vand.u32 %v3398, 4294901760
        %3400 = vmatpush1.msra.mxu0 %v3399
        %3401 = vmatprep.subr.mxu0 0.0
        %v3402 = vand.u32 %v2943, 4294901760
        %v3403 = vsub.f32 %v2943, %v3402
        %v3404 = vand.u32 %v3403, 4294901760
        %3405 = vmatpush1.msra.mxu0 %v3404
        %3406 = vmatprep.subr.mxu0 0.0
        %v3407 = vand.u32 %v2944, 4294901760
        %v3408 = vsub.f32 %v2944, %v3407
        %v3409 = vand.u32 %v3408, 4294901760
        %3410 = vmatpush1.msra.mxu0 %v3409
        %3411 = vmatprep.subr.mxu0 0.0
        %v3412 = vand.u32 %v2945, 4294901760
        %v3413 = vsub.f32 %v2945, %v3412
        %v3414 = vand.u32 %v3413, 4294901760
        %3415 = vmatpush1.msra.mxu0 %v3414
        %3416 = vmatprep.subr.mxu0 0.0
        %v3417 = vand.u32 %v2946, 4294901760
        %v3418 = vsub.f32 %v2946, %v3417
        %v3419 = vand.u32 %v3418, 4294901760
        %3420 = vmatpush1.msra.mxu0 %v3419
        %3421 = vmatprep.subr.mxu0 0.0
        %v3422 = vand.u32 %v2947, 4294901760
        %v3423 = vsub.f32 %v2947, %v3422
        %v3424 = vand.u32 %v3423, 4294901760
        %3425 = vmatpush1.msra.mxu0 %v3424
        %3426 = vmatprep.subr.mxu0 0.0
        %v3427 = vand.u32 %v2948, 4294901760
        %v3428 = vsub.f32 %v2948, %v3427
        %v3429 = vand.u32 %v3428, 4294901760
        %3430 = vmatpush1.msra.mxu0 %v3429
        %3431 = vmatprep.subr.mxu0 0.0
        %v3432 = vand.u32 %v2949, 4294901760
        %v3433 = vsub.f32 %v2949, %v3432
        %v3434 = vand.u32 %v3433, 4294901760
        %3435 = vmatpush1.msra.mxu0 %v3434
        %3436 = vmatprep.subr.mxu0 0.0
        %v3437 = vand.u32 %v2950, 4294901760
        %v3438 = vsub.f32 %v2950, %v3437
        %v3439 = vand.u32 %v3438, 4294901760
        %3440 = vmatpush1.msra.mxu0 %v3439
        %3441 = vmatprep.subr.mxu0 0.0
        %v3442 = vand.u32 %v2951, 4294901760
        %v3443 = vsub.f32 %v2951, %v3442
        %v3444 = vand.u32 %v3443, 4294901760
        %3445 = vmatpush1.msra.mxu0 %v3444
        %3446 = vmatprep.subr.mxu0 0.0
        %v3447 = vand.u32 %v2952, 4294901760
        %v3448 = vsub.f32 %v2952, %v3447
        %v3449 = vand.u32 %v3448, 4294901760
        %3450 = vmatpush1.msra.mxu0 %v3449
        %3451 = vmatprep.subr.mxu0 0.0
        %v3452 = vand.u32 %v2953, 4294901760
        %v3453 = vsub.f32 %v2953, %v3452
        %v3454 = vand.u32 %v3453, 4294901760
        %3455 = vmatpush1.msra.mxu0 %v3454
        %3456 = vmatprep.subr.mxu0 0.0
        %v3457 = vand.u32 %v2954, 4294901760
        %v3458 = vsub.f32 %v2954, %v3457
        %v3459 = vand.u32 %v3458, 4294901760
        %3460 = vmatpush1.msra.mxu0 %v3459
        %3461 = vmatprep.subr.mxu0 0.0
        %v3462 = vand.u32 %v2955, 4294901760
        %v3463 = vsub.f32 %v2955, %v3462
        %v3464 = vand.u32 %v3463, 4294901760
        %3465 = vmatpush1.msra.mxu0 %v3464
        %3466 = vmatprep.subr.mxu0 0.0
        %v3467 = vand.u32 %v2956, 4294901760
        %v3468 = vsub.f32 %v2956, %v3467
        %v3469 = vand.u32 %v3468, 4294901760
        %3470 = vmatpush1.msra.mxu0 %v3469
        %3471 = vmatprep.subr.mxu0 0.0
        %v3472 = vand.u32 %v2957, 4294901760
        %v3473 = vsub.f32 %v2957, %v3472
        %v3474 = vand.u32 %v3473, 4294901760
        %3475 = vmatpush1.msra.mxu0 %v3474
        %3476 = vmatprep.subr.mxu0 0.0
        %3477 = vmatpush1.msra.mxu0 0.0
        %3478 = vmatprep.subr.mxu0 0.0
        %3479 = vmatpush1.msra.mxu0 0.0
        %3480 = vmatprep.subr.mxu0 0.0
        %3481 = vmatpush1.msra.mxu0 0.0
        %3482 = vmatprep.subr.mxu0 0.0
        %3483 = vmatpush1.msra.mxu0 0.0
        %3484 = vmatprep.subr.mxu0 0.0
        %3485 = vmatpush1.msra.mxu0 0.0
        %3486 = vmatprep.subr.mxu0 0.0
        %3487 = vmatpush1.msra.mxu0 0.0
        %3488 = vmatprep.subr.mxu0 0.0
        %3489 = vmatpush1.msra.mxu0 0.0
        %3490 = vmatprep.subr.mxu0 0.0
        %3491 = vmatpush1.msra.mxu0 0.0
        %3492 = vmatprep.subr.mxu0 0.0
        %3493 = vmatpush1.msra.mxu0 0.0
        %3494 = vmatprep.subr.mxu0 0.0
        %3495 = vmatpush1.msra.mxu0 0.0
        %3496 = vmatprep.subr.mxu0 0.0
        %3497 = vmatpush1.msra.mxu0 0.0
        %3498 = vmatprep.subr.mxu0 0.0
        %3499 = vmatpush1.msra.mxu0 0.0
        %3500 = vmatprep.subr.mxu0 0.0
        %3501 = vmatpush1.msra.mxu0 0.0
        %3502 = vmatprep.subr.mxu0 0.0
        %3503 = vmatpush1.msra.mxu0 0.0
        %3504 = vmatprep.subr.mxu0 0.0
        %3505 = vmatpush1.msra.mxu0 0.0
        %3506 = vmatprep.subr.mxu0 0.0
        %3507 = vmatpush1.msra.mxu0 0.0
        %3508 = vmatprep.mubr.f32.mxu0 0.0
        %v3509 = vand.u32 %v2958, 4294901760
        %3510 = vmatmul.mubr.f32.gmra.mrb[0].mxu0 %v3509
        %v3511 = vpop.f32.mrb[0].mxu0
        %v3512 = vadd.f32 %v3393, %v3511
        %v3513 = vpop.f32.mrb[0].mxu0
        %3514 = vdwg.mxu0
        %3515 = vmatprep.subr.mxu0 0.0
        %v3516 = vand.u32 %v2942, 4294901760
        %3517 = vmatpush1.msra.mxu0 %v3516
        %3518 = vmatprep.subr.mxu0 0.0
        %v3519 = vand.u32 %v2943, 4294901760
        %3520 = vmatpush1.msra.mxu0 %v3519
        %3521 = vmatprep.subr.mxu0 0.0
        %v3522 = vand.u32 %v2944, 4294901760
        %3523 = vmatpush1.msra.mxu0 %v3522
        %3524 = vmatprep.subr.mxu0 0.0
        %v3525 = vand.u32 %v2945, 4294901760
        %3526 = vmatpush1.msra.mxu0 %v3525
        %3527 = vmatprep.subr.mxu0 0.0
        %v3528 = vand.u32 %v2946, 4294901760
        %3529 = vmatpush1.msra.mxu0 %v3528
        %3530 = vmatprep.subr.mxu0 0.0
        %v3531 = vand.u32 %v2947, 4294901760
        %3532 = vmatpush1.msra.mxu0 %v3531
        %3533 = vmatprep.subr.mxu0 0.0
        %v3534 = vand.u32 %v2948, 4294901760
        %3535 = vmatpush1.msra.mxu0 %v3534
        %3536 = vmatprep.subr.mxu0 0.0
        %v3537 = vand.u32 %v2949, 4294901760
        %3538 = vmatpush1.msra.mxu0 %v3537
        %3539 = vmatprep.subr.mxu0 0.0
        %v3540 = vand.u32 %v2950, 4294901760
        %3541 = vmatpush1.msra.mxu0 %v3540
        %3542 = vmatprep.subr.mxu0 0.0
        %v3543 = vand.u32 %v2951, 4294901760
        %3544 = vmatpush1.msra.mxu0 %v3543
        %3545 = vmatprep.subr.mxu0 0.0
        %v3546 = vand.u32 %v2952, 4294901760
        %3547 = vmatpush1.msra.mxu0 %v3546
        %3548 = vmatprep.subr.mxu0 0.0
        %v3549 = vand.u32 %v2953, 4294901760
        %3550 = vmatpush1.msra.mxu0 %v3549
        %3551 = vmatprep.subr.mxu0 0.0
        %v3552 = vand.u32 %v2954, 4294901760
        %3553 = vmatpush1.msra.mxu0 %v3552
        %3554 = vmatprep.subr.mxu0 0.0
        %v3555 = vand.u32 %v2955, 4294901760
        %3556 = vmatpush1.msra.mxu0 %v3555
        %3557 = vmatprep.subr.mxu0 0.0
        %v3558 = vand.u32 %v2956, 4294901760
        %3559 = vmatpush1.msra.mxu0 %v3558
        %3560 = vmatprep.subr.mxu0 0.0
        %v3561 = vand.u32 %v2957, 4294901760
        %3562 = vmatpush1.msra.mxu0 %v3561
        %3563 = vmatprep.subr.mxu0 0.0
        %3564 = vmatpush1.msra.mxu0 0.0
        %3565 = vmatprep.subr.mxu0 0.0
        %3566 = vmatpush1.msra.mxu0 0.0
        %3567 = vmatprep.subr.mxu0 0.0
        %3568 = vmatpush1.msra.mxu0 0.0
        %3569 = vmatprep.subr.mxu0 0.0
        %3570 = vmatpush1.msra.mxu0 0.0
        %3571 = vmatprep.subr.mxu0 0.0
        %3572 = vmatpush1.msra.mxu0 0.0
        %3573 = vmatprep.subr.mxu0 0.0
        %3574 = vmatpush1.msra.mxu0 0.0
        %3575 = vmatprep.subr.mxu0 0.0
        %3576 = vmatpush1.msra.mxu0 0.0
        %3577 = vmatprep.subr.mxu0 0.0
        %3578 = vmatpush1.msra.mxu0 0.0
        %3579 = vmatprep.subr.mxu0 0.0
        %3580 = vmatpush1.msra.mxu0 0.0
        %3581 = vmatprep.subr.mxu0 0.0
        %3582 = vmatpush1.msra.mxu0 0.0
        %3583 = vmatprep.subr.mxu0 0.0
        %3584 = vmatpush1.msra.mxu0 0.0
        %3585 = vmatprep.subr.mxu0 0.0
        %3586 = vmatpush1.msra.mxu0 0.0
        %3587 = vmatprep.subr.mxu0 0.0
        %3588 = vmatpush1.msra.mxu0 0.0
        %3589 = vmatprep.subr.mxu0 0.0
        %3590 = vmatpush1.msra.mxu0 0.0
        %3591 = vmatprep.subr.mxu0 0.0
        %3592 = vmatpush1.msra.mxu0 0.0
        %3593 = vmatprep.subr.mxu0 0.0
        %3594 = vmatpush1.msra.mxu0 0.0
        %3595 = vmatprep.mubr.f32.mxu0 0.0
        %v3596 = vand.u32 %v2958, 4294901760
        %3597 = vmatmul.mubr.f32.gmra.mrb[0].mxu0 %v3596
        %v3598 = vpop.f32.mrb[0].mxu0
        %v3599 = vadd.f32 %v3512, %v3598
        %v3600 = vpop.f32.mrb[0].mxu0
        %3601 = vdwg.mxu0
        %3602 = vst [vmem:[%s270] sm:$0xff] %v3599
        %s3603 = sand.u32 %s182, 1
        %s3604 = scalar_lea.sflag [#allocation4], %s3603
        %s3605 = sand.u32 %s182, 1
        %s3606 = smul.addr %s3605, 8
        %s3607 = scalar_lea.vmem [#allocation3], %s3606
        // Predicated region
        $region49: #{tpu_custom_call.1} parent=47 // pred_check
          %p3608 = pneg %p192
        $region50: #{tpu_custom_call.1} parent=47 // pred_check_branch
          %3610 = sbr.rel (%p3608) target = $region52
        $region51: #{tpu_custom_call.1} parent=47 // pred_region
          %s3612 = ssub.s32 128, 128
          %3613 = vsyncadd %s3604, %s3612
          %s3614 = smul.addr %s22, 128
          %s3615 = scalar_lea.hbm %s7, %s3614
          %s3617 = sshll.u32 %s3607, 4
          %s3618 = int_to_ptr.vmem [resolvable:$true] %s3617
          %3620 = dma.vmem_to_hbm [thread:$0]  %s3618, 128, %s3615, %s3604
        $region52: #{tpu_custom_call.1} parent=47 // pred_fallthru
          _
      $region48: #{tpu_custom_call.1} parent=5 // pred_fallthru
        _
      %p3621 = scmp.le.s32.totalorder 2, %s17
      // Predicated region
      $region53: #{tpu_custom_call.1} parent=5 // pred_check
        %p3622 = pneg %p3621
      $region54: #{tpu_custom_call.1} parent=5 // pred_check_branch
        %3624 = sbr.rel (%p3622) target = $region56
      $region55: #{tpu_custom_call.1} parent=5 // pred_region
        %s3625 = ssub.s32 %s17, 2
        // Predicated region
        $region57: #{tpu_custom_call.1} parent=55 // pred_check
          %p3626 = pneg %p198
        $region58: #{tpu_custom_call.1} parent=55 // pred_check_branch
          %3628 = sbr.rel (%p3626) target = $region60
        $region59: #{tpu_custom_call.1} parent=55 // pred_region
          %s3629 = sand.u32 %s183, 1
          %s3630 = scalar_lea.sflag [#allocation4], %s3629
          %s3631 = sand.u32 %s183, 1
          %s3632 = smul.addr %s3631, 8
          %s3633 = scalar_lea.vmem [#allocation3], %s3632
          %3634 = dma.done %s3630, 128
        $region60: #{tpu_custom_call.1} parent=55 // pred_fallthru
          _
      $region56: #{tpu_custom_call.1} parent=5 // pred_fallthru
        _
    $region6: #{tpu_custom_call.1} parent=1 // loop_footer
      %s21 = sadd.s32 1, %s17
    $region7: #{tpu_custom_call.1} parent=1 // loop_footer_branch
      %16 = sbr.rel target = $region3
    $region8: #{tpu_custom_call.1} parent=1 // loop_exit
      _
    %3635 = vsyncpa [#allocation4], 1
    %s3636 = scalar_lea.sflag [#allocation4], 1
    %3637 = vsyncpa %s3636, 1

</llo_original>
